<compile_context>
chip_gen: v5e
topology: v5e:2x2
jax: 0.10.0
libtpu: 0.0.40
codegen_flags: <defaults>
</compile_context>

<pallas_src>
import functools

import jax
import jax.numpy as jnp
from jax import lax
from jax.experimental import pallas as pl
from jax.experimental.pallas import tpu as pltpu

_TN_MM = 1024         # pixel (lane) tile for the MXU conv matmuls
_TN_EW = 2048         # pixel (lane) tile for elementwise / upsample kernels


@functools.lru_cache(maxsize=None)
def _vmem_limit_bytes():
    # Generation aware: ~96 MiB on 128-MiB parts (v5e/v6e), ~48 MiB on v7x
    # (64 MiB per TensorCore).  Falls back to a value that is safe everywhere.
    try:
        cap = int(pltpu.get_tpu_info().vmem_capacity_bytes)
        return int(min(cap * 3 // 4, 96 * 1024 * 1024))
    except Exception:
        return 48 * 1024 * 1024


def _pick_tile(n, max_tile):
    # Full extent (always a legal block) when small, else a 128-multiple tile;
    # the ragged last tile is masked by Pallas (no pad/slice HBM round trips).
    return n if n <= max_tile else max_tile


# ----------------------------- Pallas kernels -----------------------------

def _conv_stats_kernel(w_ref, cols_ref, o_ref, s1_ref, s2_ref, *, tn, npix):
    """bf16 MXU matmul (f32 accumulate), bf16 store + per-tile BN statistics."""
    y = jnp.dot(w_ref[...], cols_ref[...], preferred_element_type=jnp.float32)
    o_ref[...] = y.astype(o_ref.dtype)
    if npix % tn:  # mask the garbage lanes of the ragged last tile out of stats
        col = lax.broadcasted_iota(jnp.int32, y.shape, 1) + pl.program_id(0) * tn
        y = jnp.where(col < npix, y, 0.0)
    s1_ref[...] = jnp.sum(y, axis=1, keepdims=True)
    s2_ref[...] = jnp.sum(y * y, axis=1, keepdims=True)


def _offset_conv_kernel(w_ref, b_ref, x_ref, o_ref, *, wq, hwq):
    """Offset/mask 3x3 conv for one image, im2col done in-kernel.

    x_ref: (C, (H+4)*(W+2)) flattened padded image (2 pad rows top/bottom,
    1 pad col left/right).  Each of the 9 taps is a static lane-slice of the
    flat image, so no 9x cols tensor ever touches HBM.  Sigmoid is fused on
    the mask rows (>=18) in the epilogue (EUP slot).
    """
    y = jnp.zeros(o_ref.shape, jnp.float32)
    for t in range(9):
        ki, kj = divmod(t, 3)
        start = (ki + 1) * wq + (kj - 1)          # flat shift of tap (ki, kj)
        y = y + jnp.dot(w_ref[t], x_ref[:, start:start + hwq],
                        preferred_element_type=jnp.float32)
    y = y + b_ref[...]
    row = lax.broadcasted_iota(jnp.int32, y.shape, 0)
    o_ref[...] = jnp.where(row >= 18, jax.nn.sigmoid(y), y)


def _scale_shift_relu_kernel(x_ref, s_ref, b_ref, o_ref):
    """relu(x * scale + shift): bf16 in, f32 compute/out, lane-dense."""
    x = x_ref[...].astype(jnp.float32)
    o_ref[...] = jnp.maximum(x * s_ref[...] + b_ref[...], 0.0)


def _upsample_kernel(x_ref, k_ref, o_ref):
    """Bilinear x2 upsample as one lane-dense matmul: X_flat @ kron(Wh,Ww)^T."""
    o_ref[...] = jnp.dot(x_ref[...], k_ref[...], preferred_element_type=jnp.float32)


# ----------------------------- kernel wrappers -----------------------------

def conv_matmul_stats(w2d, cols):
    """(c_out, K) @ (K, M) -> bf16 (c_out, M) plus per-channel sum / sum-of-squares."""
    c_out, k = w2d.shape
    _, m = cols.shape
    tn = _pick_tile(m, _TN_MM)
    grid = pl.cdiv(m, tn)
    out, s1, s2 = pl.pallas_call(
        functools.partial(_conv_stats_kernel, tn=tn, npix=m),
        out_shape=(jax.ShapeDtypeStruct((c_out, m), jnp.bfloat16),
                   jax.ShapeDtypeStruct((grid, c_out, 1), jnp.float32),
                   jax.ShapeDtypeStruct((grid, c_out, 1), jnp.float32)),
        grid_spec=pltpu.PrefetchScalarGridSpec(
            num_scalar_prefetch=0,
            grid=(grid,),
            in_specs=[
                pl.BlockSpec((c_out, k), lambda i: (0, 0)),     # weights: resident
                pl.BlockSpec((k, tn), lambda i: (0, i)),
            ],
            out_specs=(
                pl.BlockSpec((c_out, tn), lambda i: (0, i)),
                # per-tile stat partials keep the pixel axis "parallel"
                # (v7x 2-TC split); the XLA sum below is over a tiny array.
                pl.BlockSpec((None, c_out, 1), lambda i: (i, 0, 0)),
                pl.BlockSpec((None, c_out, 1), lambda i: (i, 0, 0)),
            ),
        ),
        compiler_params=pltpu.CompilerParams(
            dimension_semantics=("parallel",), vmem_limit_bytes=_vmem_limit_bytes()),
        cost_estimate=pl.CostEstimate(
            flops=2 * c_out * k * m, transcendentals=0,
            bytes_accessed=2 * c_out * k + 2 * k * m + 2 * c_out * m + 8 * grid * c_out),
    )(w2d.astype(jnp.bfloat16), cols)
    return out, jnp.sum(s1, axis=0)[:, 0], jnp.sum(s2, axis=0)[:, 0]


def pallas_offset_conv(x_nchw, w_off, b_off):
    """conv_offset branch (27 ch, k=3, p=1) with in-kernel im2col; mask rows sigmoided."""
    n, c, h, w = x_nchw.shape
    wq, he = w + 2, h + 4
    le = he * wq
    hwq = h * wq
    # pad(2 rows, 1 col) + flatten + bf16 cast: one fused XLA pass, ~1.3x activation
    x_ext = jnp.pad(x_nchw, ((0, 0), (0, 0), (2, 2), (1, 1))
                    ).reshape(n, c, le).astype(jnp.bfloat16)
    w_taps = w_off.transpose(2, 3, 0, 1).reshape(9, 27, c).astype(jnp.bfloat16)
    bias = b_off.astype(jnp.float32).reshape(27, 1)
    out = pl.pallas_call(
        functools.partial(_offset_conv_kernel, wq=wq, hwq=hwq),
        out_shape=jax.ShapeDtypeStruct((n, 27, hwq), jnp.float32),
        grid_spec=pltpu.PrefetchScalarGridSpec(
            num_scalar_prefetch=0,
            grid=(n,),
            in_specs=[
                pl.BlockSpec((9, 27, c), lambda i: (0, 0, 0)),   # tap weights: resident
                pl.BlockSpec((27, 1), lambda i: (0, 0)),
                pl.BlockSpec((None, c, le), lambda i: (i, 0, 0)),
            ],
            out_specs=pl.BlockSpec((None, 27, hwq), lambda i: (i, 0, 0)),
        ),
        compiler_params=pltpu.CompilerParams(
            dimension_semantics=("parallel",), vmem_limit_bytes=_vmem_limit_bytes()),
        cost_estimate=pl.CostEstimate(
            flops=2 * 27 * 9 * c * n * hwq,
            transcendentals=9 * n * hwq,
            bytes_accessed=2 * 9 * 27 * c + 2 * n * c * le + 4 * n * 27 * hwq + 4 * 27),
    )(w_taps, bias, x_ext)
    # (N, 27, H, W+2): columns 1..W are the real pixels, 0 / W+1 are discarded
    return out.reshape(n, 27, h, wq)


def pallas_scale_shift_relu(x, scale, shift):
    """relu(x * scale + shift), x: bf16 (C, M), per-channel scale/shift (fused BN+ReLU)."""
    c, m = x.shape
    tn = _pick_tile(m, _TN_EW)
    grid = pl.cdiv(m, tn)
    return pl.pallas_call(
        _scale_shift_relu_kernel,
        out_shape=jax.ShapeDtypeStruct((c, m), jnp.float32),
        grid_spec=pltpu.PrefetchScalarGridSpec(
            num_scalar_prefetch=0,
            grid=(grid,),
            in_specs=[
                pl.BlockSpec((c, tn), lambda i: (0, i)),
                pl.BlockSpec((c, 1), lambda i: (0, 0)),
                pl.BlockSpec((c, 1), lambda i: (0, 0)),
            ],
            out_specs=pl.BlockSpec((c, tn), lambda i: (0, i)),
        ),
        compiler_params=pltpu.CompilerParams(
            dimension_semantics=("parallel",), vmem_limit_bytes=_vmem_limit_bytes()),
        cost_estimate=pl.CostEstimate(
            flops=2 * c * m, transcendentals=0,
            bytes_accessed=2 * c * m + 4 * c * m + 8 * c),
    )(x, scale.astype(jnp.float32).reshape(c, 1),
      shift.astype(jnp.float32).reshape(c, 1))


def _interp_matrix(n_out, n_in):
    """Bilinear interpolation matrix, align_corners=True."""
    src = jnp.arange(n_out, dtype=jnp.float32) * (n_in - 1) / max(n_out - 1, 1)
    j0 = jnp.clip(jnp.floor(src).astype(jnp.int32), 0, max(n_in - 2, 0))
    frac = src - j0.astype(jnp.float32)
    rows = jnp.arange(n_out)
    mat = jnp.zeros((n_out, n_in), jnp.float32)
    mat = mat.at[rows, j0].add(1.0 - frac)
    mat = mat.at[rows, jnp.clip(j0 + 1, 0, n_in - 1)].add(frac)
    return mat


def bilinear_upsample_x2(x):
    """nn.Upsample(scale_factor=2, mode='bilinear', align_corners=True) on NCHW.

    Both separable passes are folded into one lane-dense matmul against
    kron(Wh, Ww): no per-image grid, no 16-lane masked stores, no transposes.
    # TODO(synk): the kron matrix is O((H*W)^2); fine for mask-head feature
    # maps, switch to a separable two-pass kernel for large spatial sizes.
    """
    n, c, h, w = x.shape
    kmat = jnp.kron(_interp_matrix(2 * h, h), _interp_matrix(2 * w, w))  # (4hw, hw)
    xf = x.astype(jnp.float32).reshape(n * c, h * w)
    m_out = 4 * h * w
    tn = _pick_tile(m_out, _TN_EW)
    grid = pl.cdiv(m_out, tn)
    out = pl.pallas_call(
        _upsample_kernel,
        out_shape=jax.ShapeDtypeStruct((n * c, m_out), jnp.float32),
        grid_spec=pltpu.PrefetchScalarGridSpec(
            num_scalar_prefetch=0,
            grid=(grid,),
            in_specs=[
                pl.BlockSpec((n * c, h * w), lambda i: (0, 0)),
                pl.BlockSpec((h * w, tn), lambda i: (0, i)),
            ],
            out_specs=pl.BlockSpec((n * c, tn), lambda i: (0, i)),
        ),
        compiler_params=pltpu.CompilerParams(
            dimension_semantics=("parallel",), vmem_limit_bytes=_vmem_limit_bytes()),
        cost_estimate=pl.CostEstimate(
            flops=2 * n * c * h * w * m_out, transcendentals=0,
            bytes_accessed=4 * n * c * h * w + 4 * h * w * m_out + 4 * n * c * m_out),
    )(xf, kmat.T)
    return out.reshape(n, c, 2 * h, 2 * w)


# ------------------------------ JAX glue ops -------------------------------

def _deform_sample_cols(x_nchw, dy, dx, mask):
    """Modulated deformable im2col (bilinear sampling, zero outside).

    Emits cols directly in (9*C, N*H*W) row order and in bf16 (no transpose or
    cast pass over the 9x tensor); the modulation mask is fused into the
    per-corner bilinear weights.
    # TODO(synk): the data-dependent 4-tap bilinear gather itself has no clean
    # Pallas-TPU equivalent at this granularity; it stays in XLA and only
    # feeds the Pallas matmul hot path.
    """
    n, c, h, w = x_nchw.shape
    k = jnp.arange(9)
    ki = (k // 3).astype(jnp.float32)[:, None, None, None]
    kj = (k % 3).astype(jnp.float32)[:, None, None, None]
    hg = jnp.arange(h, dtype=jnp.float32)[None, None, :, None]
    wg = jnp.arange(w, dtype=jnp.float32)[None, None, None, :]
    py = hg + ki - 1.0 + dy                      # (9, N, H, W)
    px = wg + kj - 1.0 + dx
    y0 = jnp.floor(py)
    x0 = jnp.floor(px)
    fy = py - y0
    fx = px - x0
    y0i = y0.astype(jnp.int32)
    x0i = x0.astype(jnp.int32)
    x_flat = x_nchw.reshape(n, c, h * w)
    b_idx = jnp.arange(n)[None, None, :, None, None]
    c_idx = jnp.arange(c)[None, :, None, None, None]
    acc = jnp.zeros((9, c, n, h, w), jnp.float32)
    for yy, xx, wy, wx in ((y0i, x0i, 1.0 - fy, 1.0 - fx),
                           (y0i, x0i + 1, 1.0 - fy, fx),
                           (y0i + 1, x0i, fy, 1.0 - fx),
                           (y0i + 1, x0i + 1, fy, fx)):
        valid = ((yy >= 0) & (yy < h) & (xx >= 0) & (xx < w)).astype(jnp.float32)
        lin = jnp.clip(yy, 0, h - 1) * w + jnp.clip(xx, 0, w - 1)     # (9, N, H, W)
        g = x_flat[b_idx, c_idx, lin[:, None]]                        # (9, C, N, H, W)
        acc = acc + g * (valid * wy * wx * mask)[:, None]             # mask fused
    return acc.astype(jnp.bfloat16).reshape(9 * c, n * h * w)


def modulated_deform_conv(x_nchw, p):
    """ModulatedDeformConv2dPack(k=3, s=1, p=1, groups=1, deform_groups=1, bias=False)."""
    n, c, h, w = x_nchw.shape
    c_out = p["weight"].shape[0]
    # offset/mask branch: in-kernel im2col, sigmoid already applied to mask rows
    off = pallas_offset_conv(x_nchw, p["offset_weight"], p["offset_bias"])  # (N,27,H,W+2)
    dy = off[:, 0:18:2, :, 1:w + 1].transpose(1, 0, 2, 3)   # (9, N, H, W) interleaved dy
    dx = off[:, 1:18:2, :, 1:w + 1].transpose(1, 0, 2, 3)   # (9, N, H, W) interleaved dx
    mk = off[:, 18:, :, 1:w + 1].transpose(1, 0, 2, 3)      # (9, N, H, W) sigmoid mask
    cols = _deform_sample_cols(x_nchw.astype(jnp.float32), dy, dx, mk)   # bf16 (9C, NHW)
    w2d = p["weight"].transpose(0, 2, 3, 1).reshape(c_out, 9 * c)        # k-major, c-fast
    y, s1, s2 = conv_matmul_stats(w2d, cols)
    return y, s1, s2, c_out


def bn_relu_from_stats(y, s1, s2, gamma, beta, npix, eps=1e-5):
    # BatchNorm2d forward in default training mode: batch statistics, biased variance,
    # computed from the in-kernel accumulated (f32) sum / sum-of-squares.
    mean = s1 / npix
    var = jnp.maximum(s2 / npix - mean * mean, 0.0)
    scale = gamma * lax.rsqrt(var + eps)
    shift = beta - mean * scale
    return pallas_scale_shift_relu(y, scale, shift)


def double_conv(x_nchw, p):
    n, _, h, w = x_nchw.shape
    y, s1, s2, c1 = modulated_deform_conv(x_nchw, p["dcn1"])
    y = bn_relu_from_stats(y, s1, s2, p["bn1_gamma"], p["bn1_beta"], n * h * w)  # (c1, NHW)
    # the only layout pass between stages (tiny, 1x activation); the samplers
    # consume NCHW directly, no re-transpose on the other side.
    x1 = y.reshape(c1, n, h, w).transpose(1, 0, 2, 3)
    y, s1, s2, c2 = modulated_deform_conv(x1, p["dcn2"])
    y = bn_relu_from_stats(y, s1, s2, p["bn2_gamma"], p["bn2_beta"], n * h * w)
    return y.reshape(c2, n, h, w).transpose(1, 0, 2, 3)


def up_forward(params, x1, x2):
    """Up.forward(x1, x2): upsample x1, pad to x2's spatial size, concat, DoubleConv."""
    x1 = bilinear_upsample_x2(x1.astype(jnp.float32))
    diff_y = x2.shape[2] - x1.shape[2]
    diff_x = x2.shape[3] - x1.shape[3]
    x1 = jnp.pad(x1, ((0, 0), (0, 0),
                      (diff_y // 2, diff_y - diff_y // 2),
                      (diff_x // 2, diff_x - diff_x // 2)))
    x = jnp.concatenate([x2.astype(jnp.float32), x1], axis=1)
    return double_conv(x, params["conv"])


# ----------------------------- parameter init ------------------------------

def make_dcn_params(key, c_in, c_out):
    k1, k2, k3 = jax.random.split(key, 3)
    fan = float(c_in * 9)
    return {
        "weight": jax.random.normal(k1, (c_out, c_in, 3, 3), jnp.float32) / jnp.sqrt(fan),
        # mmcv zero-inits conv_offset; small random values are used instead so the
        # deformable-sampling path is actually exercised (still deterministic).
        "offset_weight": 0.01 * jax.random.normal(k2, (27, c_in, 3, 3), jnp.float32),
        "offset_bias": 0.01 * jax.random.normal(k3, (27,), jnp.float32),
    }


def make_up_params(key, in_channels, out_channels):
    mid = in_channels // 2
    k1, k2 = jax.random.split(key)
    return {"conv": {
        "dcn1": make_dcn_params(k1, in_channels, mid),
        "bn1_gamma": jnp.ones((mid,), jnp.float32),
        "bn1_beta": jnp.zeros((mid,), jnp.float32),
        "dcn2": make_dcn_params(k2, mid, out_channels),
        "bn2_gamma": jnp.ones((out_channels,), jnp.float32),
        "bn2_beta": jnp.zeros((out_channels,), jnp.float32),
    }}


if __name__ == "__main__":
    key = jax.random.PRNGKey(0)
    kp, kx1, kx2 = jax.random.split(key, 3)
    in_channels, out_channels = 8, 8
    # x1: low-res feature (4 ch), x2: skip connection (4 ch); 4 + 4 == in_channels
    x1 = jax.random.normal(kx1, (2, 4, 8, 8), jnp.float32)
    x2 = jax.random.normal(kx2, (2, 4, 16, 16), jnp.float32)
    params = make_up_params(kp, in_channels, out_channels)

    out = jax.jit(up_forward)(params, x1, x2)
    out = jax.block_until_ready(out)
    assert out.shape == (2, out_channels, 16, 16), out.shape
    assert bool(jnp.all(jnp.isfinite(out)))
    print("KERNEL_OK")
</pallas_src>

<mosaic_0001>
module attributes {stable_mosaic.version = 11 : i64} {
  func.func @_upsample_kernel(%arg0: i32, %arg1: memref<8x64xf32, #tpu.memory_space<vmem>>, %arg2: memref<64x256xf32, #tpu.memory_space<vmem>>, %arg3: memref<8x256xf32, #tpu.memory_space<vmem>>) attributes {dimension_semantics = [#tpu.dimension_semantics<parallel>], iteration_bounds = array<i64: 1>, scalar_prefetch = 0 : i64, scratch_operands = 0 : i64, tpu.core_type = #tpu.core_type<tc>, window_params = [{pipeline_mode = #tpu.pipeline_mode<synchronous>, transform_indices = @transform_0, window_bounds = array<i64: 8, 64>}, {transform_indices = @transform_1, window_bounds = array<i64: 64, 256>}, {transform_indices = @transform_2, window_bounds = array<i64: 8, 256>}]} {
    %c0 = arith.constant 0 : index
    %c0_0 = arith.constant 0 : index
    %0 = vector.load %arg1[%c0, %c0_0] : memref<8x64xf32, #tpu.memory_space<vmem>>, vector<8x64xf32>
    %c0_1 = arith.constant 0 : index
    %c0_2 = arith.constant 0 : index
    %1 = vector.load %arg2[%c0_1, %c0_2] : memref<64x256xf32, #tpu.memory_space<vmem>>, vector<64x256xf32>
    %cst = arith.constant dense<0.000000e+00> : vector<8x256xf32>
    %2 = tpu.matmul %0, %1, %cst {dimension_numbers = #tpu.dot_dimension_numbers<[1], [0], [0], [1], [0, 0, 1, 1], [], []>} : vector<8x64xf32>, vector<64x256xf32>, vector<8x256xf32> -> vector<8x256xf32>
    %c0_3 = arith.constant 0 : index
    %c0_4 = arith.constant 0 : index
    %3 = vector.load %arg3[%c0_3, %c0_4] : memref<8x256xf32, #tpu.memory_space<vmem>>, vector<8x256xf32>
    tpu.vector_store %arg3[%c0_3, %c0_4], %2 {strides = array<i32>} : memref<8x256xf32, #tpu.memory_space<vmem>>, vector<8x256xf32>,
    return
  }
  func.func @transform_0(%arg0: i32) -> (i32, i32) {
    %c0_i32 = arith.constant 0 : i32
    %c0_i32_0 = arith.constant 0 : i32
    %c0_i32_1 = arith.constant 0 : i32
    return %c0_i32, %c0_i32_0 : i32, i32
  }
  func.func @transform_1(%arg0: i32) -> (i32, i32) {
    %c0_i32 = arith.constant 0 : i32
    %c0_i32_0 = arith.constant 0 : i32
    return %c0_i32, %arg0 : i32, i32
  }
  func.func @transform_2(%arg0: i32) -> (i32, i32) {
    %c0_i32 = arith.constant 0 : i32
    %c0_i32_0 = arith.constant 0 : i32
    return %c0_i32, %arg0 : i32, i32
  }
}

module attributes {stable_mosaic.version = 11 : i64} {
  func.func @_offset_conv_kernel(%arg0: i32, %arg1: memref<9x27x8xbf16, #tpu.memory_space<vmem>>, %arg2: memref<27x1xf32, #tpu.memory_space<vmem>>, %arg3: memref<1x8x360xbf16, #tpu.memory_space<vmem>>, %arg4: memref<1x27x288xf32, #tpu.memory_space<vmem>>) attributes {dimension_semantics = [#tpu.dimension_semantics<parallel>], iteration_bounds = array<i64: 2>, scalar_prefetch = 0 : i64, scratch_operands = 0 : i64, tpu.core_type = #tpu.core_type<tc>, window_params = [{pipeline_mode = #tpu.pipeline_mode<synchronous>, transform_indices = @transform_0, window_bounds = array<i64: 9, 27, 8>}, {pipeline_mode = #tpu.pipeline_mode<synchronous>, transform_indices = @transform_1, window_bounds = array<i64: 27, 1>}, {transform_indices = @transform_2, window_bounds = array<i64: 1, 8, 360>}, {transform_indices = @transform_3, window_bounds = array<i64: 1, 27, 288>}]} {
    %cst = arith.constant 0.000000e+00 : f32
    %0 = vector.broadcast %cst : f32 to vector<27x288xf32>
    %c0 = arith.constant 0 : index
    %c0_0 = arith.constant 0 : index
    %c0_1 = arith.constant 0 : index
    %1 = vector.load %arg1[%c0, %c0_0, %c0_1] : memref<9x27x8xbf16, #tpu.memory_space<vmem>>, vector<1x27x8xbf16>
    %2 = vector.shape_cast %1 : vector<1x27x8xbf16> to vector<27x8xbf16>
    %c0_2 = arith.constant 0 : index
    %c0_3 = arith.constant 0 : index
    %c17 = arith.constant 17 : index
    %3 = vector.load %arg3[%c0_2, %c0_3, %c17] : memref<1x8x360xbf16, #tpu.memory_space<vmem>>, vector<1x8x288xbf16>
    %4 = vector.shape_cast %3 : vector<1x8x288xbf16> to vector<8x288xbf16>
    %cst_4 = arith.constant dense<0.000000e+00> : vector<27x288xf32>
    %5 = tpu.matmul %2, %4, %cst_4 {dimension_numbers = #tpu.dot_dimension_numbers<[1], [0], [0], [1], [0, 0, 1, 1], [], []>} : vector<27x8xbf16>, vector<8x288xbf16>, vector<27x288xf32> -> vector<27x288xf32>
    %6 = arith.addf %0, %5 : vector<27x288xf32>
    %c1 = arith.constant 1 : index
    %c0_5 = arith.constant 0 : index
    %c0_6 = arith.constant 0 : index
    %7 = vector.load %arg1[%c1, %c0_5, %c0_6] : memref<9x27x8xbf16, #tpu.memory_space<vmem>>, vector<1x27x8xbf16>
    %8 = vector.shape_cast %7 : vector<1x27x8xbf16> to vector<27x8xbf16>
    %c0_7 = arith.constant 0 : index
    %c0_8 = arith.constant 0 : index
    %c18 = arith.constant 18 : index
    %9 = vector.load %arg3[%c0_7, %c0_8, %c18] : memref<1x8x360xbf16, #tpu.memory_space<vmem>>, vector<1x8x288xbf16>
    %10 = vector.shape_cast %9 : vector<1x8x288xbf16> to vector<8x288xbf16>
    %cst_9 = arith.constant dense<0.000000e+00> : vector<27x288xf32>
    %11 = tpu.matmul %8, %10, %cst_9 {dimension_numbers = #tpu.dot_dimension_numbers<[1], [0], [0], [1], [0, 0, 1, 1], [], []>} : vector<27x8xbf16>, vector<8x288xbf16>, vector<27x288xf32> -> vector<27x288xf32>
    %12 = arith.addf %6, %11 : vector<27x288xf32>
    %c2 = arith.constant 2 : index
    %c0_10 = arith.constant 0 : index
    %c0_11 = arith.constant 0 : index
    %13 = vector.load %arg1[%c2, %c0_10, %c0_11] : memref<9x27x8xbf16, #tpu.memory_space<vmem>>, vector<1x27x8xbf16>
    %14 = vector.shape_cast %13 : vector<1x27x8xbf16> to vector<27x8xbf16>
    %c0_12 = arith.constant 0 : index
    %c0_13 = arith.constant 0 : index
    %c19 = arith.constant 19 : index
    %15 = vector.load %arg3[%c0_12, %c0_13, %c19] : memref<1x8x360xbf16, #tpu.memory_space<vmem>>, vector<1x8x288xbf16>
    %16 = vector.shape_cast %15 : vector<1x8x288xbf16> to vector<8x288xbf16>
    %cst_14 = arith.constant dense<0.000000e+00> : vector<27x288xf32>
    %17 = tpu.matmul %14, %16, %cst_14 {dimension_numbers = #tpu.dot_dimension_numbers<[1], [0], [0], [1], [0, 0, 1, 1], [], []>} : vector<27x8xbf16>, vector<8x288xbf16>, vector<27x288xf32> -> vector<27x288xf32>
    %18 = arith.addf %12, %17 : vector<27x288xf32>
    %c3 = arith.constant 3 : index
    %c0_15 = arith.constant 0 : index
    %c0_16 = arith.constant 0 : index
    %19 = vector.load %arg1[%c3, %c0_15, %c0_16] : memref<9x27x8xbf16, #tpu.memory_space<vmem>>, vector<1x27x8xbf16>
    %20 = vector.shape_cast %19 : vector<1x27x8xbf16> to vector<27x8xbf16>
    %c0_17 = arith.constant 0 : index
    %c0_18 = arith.constant 0 : index
    %c35 = arith.constant 35 : index
    %21 = vector.load %arg3[%c0_17, %c0_18, %c35] : memref<1x8x360xbf16, #tpu.memory_space<vmem>>, vector<1x8x288xbf16>
    %22 = vector.shape_cast %21 : vector<1x8x288xbf16> to vector<8x288xbf16>
    %cst_19 = arith.constant dense<0.000000e+00> : vector<27x288xf32>
    %23 = tpu.matmul %20, %22, %cst_19 {dimension_numbers = #tpu.dot_dimension_numbers<[1], [0], [0], [1], [0, 0, 1, 1], [], []>} : vector<27x8xbf16>, vector<8x288xbf16>, vector<27x288xf32> -> vector<27x288xf32>
    %24 = arith.addf %18, %23 : vector<27x288xf32>
    %c4 = arith.constant 4 : index
    %c0_20 = arith.constant 0 : index
    %c0_21 = arith.constant 0 : index
    %25 = vector.load %arg1[%c4, %c0_20, %c0_21] : memref<9x27x8xbf16, #tpu.memory_space<vmem>>, vector<1x27x8xbf16>
    %26 = vector.shape_cast %25 : vector<1x27x8xbf16> to vector<27x8xbf16>
    %c0_22 = arith.constant 0 : index
    %c0_23 = arith.constant 0 : index
    %c36 = arith.constant 36 : index
    %27 = vector.load %arg3[%c0_22, %c0_23, %c36] : memref<1x8x360xbf16, #tpu.memory_space<vmem>>, vector<1x8x288xbf16>
    %28 = vector.shape_cast %27 : vector<1x8x288xbf16> to vector<8x288xbf16>
    %cst_24 = arith.constant dense<0.000000e+00> : vector<27x288xf32>
    %29 = tpu.matmul %26, %28, %cst_24 {dimension_numbers = #tpu.dot_dimension_numbers<[1], [0], [0], [1], [0, 0, 1, 1], [], []>} : vector<27x8xbf16>, vector<8x288xbf16>, vector<27x288xf32> -> vector<27x288xf32>
    %30 = arith.addf %24, %29 : vector<27x288xf32>
    %c5 = arith.constant 5 : index
    %c0_25 = arith.constant 0 : index
    %c0_26 = arith.constant 0 : index
    %31 = vector.load %arg1[%c5, %c0_25, %c0_26] : memref<9x27x8xbf16, #tpu.memory_space<vmem>>, vector<1x27x8xbf16>
    %32 = vector.shape_cast %31 : vector<1x27x8xbf16> to vector<27x8xbf16>
    %c0_27 = arith.constant 0 : index
    %c0_28 = arith.constant 0 : index
    %c37 = arith.constant 37 : index
    %33 = vector.load %arg3[%c0_27, %c0_28, %c37] : memref<1x8x360xbf16, #tpu.memory_space<vmem>>, vector<1x8x288xbf16>
    %34 = vector.shape_cast %33 : vector<1x8x288xbf16> to vector<8x288xbf16>
    %cst_29 = arith.constant dense<0.000000e+00> : vector<27x288xf32>
    %35 = tpu.matmul %32, %34, %cst_29 {dimension_numbers = #tpu.dot_dimension_numbers<[1], [0], [0], [1], [0, 0, 1, 1], [], []>} : vector<27x8xbf16>, vector<8x288xbf16>, vector<27x288xf32> -> vector<27x288xf32>
    %36 = arith.addf %30, %35 : vector<27x288xf32>
    %c6 = arith.constant 6 : index
    %c0_30 = arith.constant 0 : index
    %c0_31 = arith.constant 0 : index
    %37 = vector.load %arg1[%c6, %c0_30, %c0_31] : memref<9x27x8xbf16, #tpu.memory_space<vmem>>, vector<1x27x8xbf16>
    %38 = vector.shape_cast %37 : vector<1x27x8xbf16> to vector<27x8xbf16>
    %c0_32 = arith.constant 0 : index
    %c0_33 = arith.constant 0 : index
    %c53 = arith.constant 53 : index
    %39 = vector.load %arg3[%c0_32, %c0_33, %c53] : memref<1x8x360xbf16, #tpu.memory_space<vmem>>, vector<1x8x288xbf16>
    %40 = vector.shape_cast %39 : vector<1x8x288xbf16> to vector<8x288xbf16>
    %cst_34 = arith.constant dense<0.000000e+00> : vector<27x288xf32>
    %41 = tpu.matmul %38, %40, %cst_34 {dimension_numbers = #tpu.dot_dimension_numbers<[1], [0], [0], [1], [0, 0, 1, 1], [], []>} : vector<27x8xbf16>, vector<8x288xbf16>, vector<27x288xf32> -> vector<27x288xf32>
    %42 = arith.addf %36, %41 : vector<27x288xf32>
    %c7 = arith.constant 7 : index
    %c0_35 = arith.constant 0 : index
    %c0_36 = arith.constant 0 : index
    %43 = vector.load %arg1[%c7, %c0_35, %c0_36] : memref<9x27x8xbf16, #tpu.memory_space<vmem>>, vector<1x27x8xbf16>
    %44 = vector.shape_cast %43 : vector<1x27x8xbf16> to vector<27x8xbf16>
    %c0_37 = arith.constant 0 : index
    %c0_38 = arith.constant 0 : index
    %c54 = arith.constant 54 : index
    %45 = vector.load %arg3[%c0_37, %c0_38, %c54] : memref<1x8x360xbf16, #tpu.memory_space<vmem>>, vector<1x8x288xbf16>
    %46 = vector.shape_cast %45 : vector<1x8x288xbf16> to vector<8x288xbf16>
    %cst_39 = arith.constant dense<0.000000e+00> : vector<27x288xf32>
    %47 = tpu.matmul %44, %46, %cst_39 {dimension_numbers = #tpu.dot_dimension_numbers<[1], [0], [0], [1], [0, 0, 1, 1], [], []>} : vector<27x8xbf16>, vector<8x288xbf16>, vector<27x288xf32> -> vector<27x288xf32>
    %48 = arith.addf %42, %47 : vector<27x288xf32>
    %c8 = arith.constant 8 : index
    %c0_40 = arith.constant 0 : index
    %c0_41 = arith.constant 0 : index
    %49 = vector.load %arg1[%c8, %c0_40, %c0_41] : memref<9x27x8xbf16, #tpu.memory_space<vmem>>, vector<1x27x8xbf16>
    %50 = vector.shape_cast %49 : vector<1x27x8xbf16> to vector<27x8xbf16>
    %c0_42 = arith.constant 0 : index
    %c0_43 = arith.constant 0 : index
    %c55 = arith.constant 55 : index
    %51 = vector.load %arg3[%c0_42, %c0_43, %c55] : memref<1x8x360xbf16, #tpu.memory_space<vmem>>, vector<1x8x288xbf16>
    %52 = vector.shape_cast %51 : vector<1x8x288xbf16> to vector<8x288xbf16>
    %cst_44 = arith.constant dense<0.000000e+00> : vector<27x288xf32>
    %53 = tpu.matmul %50, %52, %cst_44 {dimension_numbers = #tpu.dot_dimension_numbers<[1], [0], [0], [1], [0, 0, 1, 1], [], []>} : vector<27x8xbf16>, vector<8x288xbf16>, vector<27x288xf32> -> vector<27x288xf32>
    %54 = arith.addf %48, %53 : vector<27x288xf32>
    %c0_45 = arith.constant 0 : index
    %c0_46 = arith.constant 0 : index
    %55 = vector.load %arg2[%c0_45, %c0_46] : memref<27x1xf32, #tpu.memory_space<vmem>>, vector<27x1xf32>
    %56 = vector.broadcast %55 : vector<27x1xf32> to vector<27x288xf32>
    %57 = arith.addf %54, %56 : vector<27x288xf32>
    %58 = tpu.iota {dimensions = array<i32: 0>} : vector<27x288xi32>
    %c18_i32 = arith.constant 18 : i32
    %59 = vector.broadcast %c18_i32 : i32 to vector<27x288xi32>
    %60 = arith.cmpi sge, %58, %59 : vector<27x288xi32>
    %61 = arith.negf %57 : vector<27x288xf32>
    %62 = math.exp %61 : vector<27x288xf32>
    %cst_47 = arith.constant 1.000000e+00 : f32
    %63 = vector.broadcast %cst_47 : f32 to vector<27x288xf32>
    %64 = arith.addf %63, %62 : vector<27x288xf32>
    %65 = arith.divf %63, %64 : vector<27x288xf32>
    %66 = arith.select %60, %65, %57 : vector<27x288xi1>, vector<27x288xf32>
    %c0_48 = arith.constant 0 : index
    %c0_49 = arith.constant 0 : index
    %c0_50 = arith.constant 0 : index
    %67 = vector.load %arg4[%c0_48, %c0_49, %c0_50] : memref<1x27x288xf32, #tpu.memory_space<vmem>>, vector<1x27x288xf32>
    %68 = vector.shape_cast %67 : vector<1x27x288xf32> to vector<27x288xf32>
    %69 = vector.shape_cast %66 : vector<27x288xf32> to vector<1x27x288xf32>
    tpu.vector_store %arg4[%c0_48, %c0_49, %c0_50], %69 {strides = array<i32>} : memref<1x27x288xf32, #tpu.memory_space<vmem>>, vector<1x27x288xf32>,
    return
  }
  func.func @transform_0(%arg0: i32) -> (i32, i32, i32) {
    %c0_i32 = arith.constant 0 : i32
    %c0_i32_0 = arith.constant 0 : i32
    %c0_i32_1 = arith.constant 0 : i32
    %c0_i32_2 = arith.constant 0 : i32
    return %c0_i32, %c0_i32_0, %c0_i32_1 : i32, i32, i32
  }
  func.func @transform_1(%arg0: i32) -> (i32, i32) {
    %c0_i32 = arith.constant 0 : i32
    %c0_i32_0 = arith.constant 0 : i32
    %c0_i32_1 = arith.constant 0 : i32
    return %c0_i32, %c0_i32_0 : i32, i32
  }
  func.func @transform_2(%arg0: i32) -> (i32, i32, i32) {
    %c0_i32 = arith.constant 0 : i32
    %c0_i32_0 = arith.constant 0 : i32
    %c0_i32_1 = arith.constant 0 : i32
    return %arg0, %c0_i32, %c0_i32_0 : i32, i32, i32
  }
  func.func @transform_3(%arg0: i32) -> (i32, i32, i32) {
    %c0_i32 = arith.constant 0 : i32
    %c0_i32_0 = arith.constant 0 : i32
    %c0_i32_1 = arith.constant 0 : i32
    return %arg0, %c0_i32, %c0_i32_0 : i32, i32, i32
  }
}

module attributes {stable_mosaic.version = 11 : i64} {
  func.func @_conv_stats_kernel(%arg0: i32, %arg1: memref<4x72xbf16, #tpu.memory_space<vmem>>, %arg2: memref<72x512xbf16, #tpu.memory_space<vmem>>, %arg3: memref<4x512xbf16, #tpu.memory_space<vmem>>, %arg4: memref<1x4x1xf32, #tpu.memory_space<vmem>>, %arg5: memref<1x4x1xf32, #tpu.memory_space<vmem>>) attributes {dimension_semantics = [#tpu.dimension_semantics<parallel>], iteration_bounds = array<i64: 1>, scalar_prefetch = 0 : i64, scratch_operands = 0 : i64, tpu.core_type = #tpu.core_type<tc>, window_params = [{pipeline_mode = #tpu.pipeline_mode<synchronous>, transform_indices = @transform_0, window_bounds = array<i64: 4, 72>}, {transform_indices = @transform_1, window_bounds = array<i64: 72, 512>}, {transform_indices = @transform_2, window_bounds = array<i64: 4, 512>}, {transform_indices = @transform_3, window_bounds = array<i64: 1, 4, 1>}, {transform_indices = @transform_4, window_bounds = array<i64: 1, 4, 1>}]} {
    %c0 = arith.constant 0 : index
    %c0_0 = arith.constant 0 : index
    %0 = vector.load %arg1[%c0, %c0_0] : memref<4x72xbf16, #tpu.memory_space<vmem>>, vector<4x72xbf16>
    %c0_1 = arith.constant 0 : index
    %c0_2 = arith.constant 0 : index
    %1 = vector.load %arg2[%c0_1, %c0_2] : memref<72x512xbf16, #tpu.memory_space<vmem>>, vector<72x512xbf16>
    %cst = arith.constant dense<0.000000e+00> : vector<4x512xf32>
    %2 = tpu.matmul %0, %1, %cst {dimension_numbers = #tpu.dot_dimension_numbers<[1], [0], [0], [1], [0, 0, 1, 1], [], []>} : vector<4x72xbf16>, vector<72x512xbf16>, vector<4x512xf32> -> vector<4x512xf32>
    %3 = arith.truncf %2 : vector<4x512xf32> to vector<4x512xbf16>
    %c0_3 = arith.constant 0 : index
    %c0_4 = arith.constant 0 : index
    %4 = vector.load %arg3[%c0_3, %c0_4] : memref<4x512xbf16, #tpu.memory_space<vmem>>, vector<4x512xbf16>
    tpu.vector_store %arg3[%c0_3, %c0_4], %3 {strides = array<i32>} : memref<4x512xbf16, #tpu.memory_space<vmem>>, vector<4x512xbf16>,
    %cst_5 = arith.constant dense<0.000000e+00> : vector<4xf32>
    %5 = vector.multi_reduction <add>, %2, %cst_5 [1] : vector<4x512xf32> to vector<4xf32>
    %6 = vector.shape_cast %5 : vector<4xf32> to vector<4x1xf32>
    %c0_6 = arith.constant 0 : index
    %c0_7 = arith.constant 0 : index
    %c0_8 = arith.constant 0 : index
    %7 = vector.load %arg4[%c0_6, %c0_7, %c0_8] : memref<1x4x1xf32, #tpu.memory_space<vmem>>, vector<1x4x1xf32>
    %8 = vector.shape_cast %7 : vector<1x4x1xf32> to vector<4x1xf32>
    %9 = vector.shape_cast %6 : vector<4x1xf32> to vector<1x4x1xf32>
    tpu.vector_store %arg4[%c0_6, %c0_7, %c0_8], %9 {strides = array<i32>} : memref<1x4x1xf32, #tpu.memory_space<vmem>>, vector<1x4x1xf32>,
    %10 = arith.mulf %2, %2 : vector<4x512xf32>
    %cst_9 = arith.constant dense<0.000000e+00> : vector<4xf32>
    %11 = vector.multi_reduction <add>, %10, %cst_9 [1] : vector<4x512xf32> to vector<4xf32>
    %12 = vector.shape_cast %11 : vector<4xf32> to vector<4x1xf32>
    %c0_10 = arith.constant 0 : index
    %c0_11 = arith.constant 0 : index
    %c0_12 = arith.constant 0 : index
    %13 = vector.load %arg5[%c0_10, %c0_11, %c0_12] : memref<1x4x1xf32, #tpu.memory_space<vmem>>, vector<1x4x1xf32>
    %14 = vector.shape_cast %13 : vector<1x4x1xf32> to vector<4x1xf32>
    %15 = vector.shape_cast %12 : vector<4x1xf32> to vector<1x4x1xf32>
    tpu.vector_store %arg5[%c0_10, %c0_11, %c0_12], %15 {strides = array<i32>} : memref<1x4x1xf32, #tpu.memory_space<vmem>>, vector<1x4x1xf32>,
    return
  }
  func.func @transform_0(%arg0: i32) -> (i32, i32) {
    %c0_i32 = arith.constant 0 : i32
    %c0_i32_0 = arith.constant 0 : i32
    %c0_i32_1 = arith.constant 0 : i32
    return %c0_i32, %c0_i32_0 : i32, i32
  }
  func.func @transform_1(%arg0: i32) -> (i32, i32) {
    %c0_i32 = arith.constant 0 : i32
    %c0_i32_0 = arith.constant 0 : i32
    return %c0_i32, %arg0 : i32, i32
  }
  func.func @transform_2(%arg0: i32) -> (i32, i32) {
    %c0_i32 = arith.constant 0 : i32
    %c0_i32_0 = arith.constant 0 : i32
    return %c0_i32, %arg0 : i32, i32
  }
  func.func @transform_3(%arg0: i32) -> (i32, i32, i32) {
    %c0_i32 = arith.constant 0 : i32
    %c0_i32_0 = arith.constant 0 : i32
    %c0_i32_1 = arith.constant 0 : i32
    return %arg0, %c0_i32, %c0_i32_0 : i32, i32, i32
  }
  func.func @transform_4(%arg0: i32) -> (i32, i32, i32) {
    %c0_i32 = arith.constant 0 : i32
    %c0_i32_0 = arith.constant 0 : i32
    %c0_i32_1 = arith.constant 0 : i32
    return %arg0, %c0_i32, %c0_i32_0 : i32, i32, i32
  }
}

module attributes {stable_mosaic.version = 11 : i64} {
  func.func @_scale_shift_relu_kernel(%arg0: i32, %arg1: memref<4x512xbf16, #tpu.memory_space<vmem>>, %arg2: memref<4x1xf32, #tpu.memory_space<vmem>>, %arg3: memref<4x1xf32, #tpu.memory_space<vmem>>, %arg4: memref<4x512xf32, #tpu.memory_space<vmem>>) attributes {dimension_semantics = [#tpu.dimension_semantics<parallel>], iteration_bounds = array<i64: 1>, scalar_prefetch = 0 : i64, scratch_operands = 0 : i64, tpu.core_type = #tpu.core_type<tc>, window_params = [{transform_indices = @transform_0, window_bounds = array<i64: 4, 512>}, {pipeline_mode = #tpu.pipeline_mode<synchronous>, transform_indices = @transform_1, window_bounds = array<i64: 4, 1>}, {pipeline_mode = #tpu.pipeline_mode<synchronous>, transform_indices = @transform_2, window_bounds = array<i64: 4, 1>}, {transform_indices = @transform_3, window_bounds = array<i64: 4, 512>}]} {
    %c0 = arith.constant 0 : index
    %c0_0 = arith.constant 0 : index
    %0 = vector.load %arg1[%c0, %c0_0] : memref<4x512xbf16, #tpu.memory_space<vmem>>, vector<4x512xbf16>
    %1 = arith.extf %0 : vector<4x512xbf16> to vector<4x512xf32>
    %c0_1 = arith.constant 0 : index
    %c0_2 = arith.constant 0 : index
    %2 = vector.load %arg2[%c0_1, %c0_2] : memref<4x1xf32, #tpu.memory_space<vmem>>, vector<4x1xf32>
    %3 = vector.broadcast %2 : vector<4x1xf32> to vector<4x512xf32>
    %4 = arith.mulf %1, %3 : vector<4x512xf32>
    %c0_3 = arith.constant 0 : index
    %c0_4 = arith.constant 0 : index
    %5 = vector.load %arg3[%c0_3, %c0_4] : memref<4x1xf32, #tpu.memory_space<vmem>>, vector<4x1xf32>
    %6 = vector.broadcast %5 : vector<4x1xf32> to vector<4x512xf32>
    %7 = arith.addf %4, %6 : vector<4x512xf32>
    %cst = arith.constant 0.000000e+00 : f32
    %8 = vector.broadcast %cst : f32 to vector<4x512xf32>
    %9 = arith.maximumf %7, %8 : vector<4x512xf32>
    %c0_5 = arith.constant 0 : index
    %c0_6 = arith.constant 0 : index
    %10 = vector.load %arg4[%c0_5, %c0_6] : memref<4x512xf32, #tpu.memory_space<vmem>>, vector<4x512xf32>
    tpu.vector_store %arg4[%c0_5, %c0_6], %9 {strides = array<i32>} : memref<4x512xf32, #tpu.memory_space<vmem>>, vector<4x512xf32>,
    return
  }
  func.func @transform_0(%arg0: i32) -> (i32, i32) {
    %c0_i32 = arith.constant 0 : i32
    %c0_i32_0 = arith.constant 0 : i32
    return %c0_i32, %arg0 : i32, i32
  }
  func.func @transform_1(%arg0: i32) -> (i32, i32) {
    %c0_i32 = arith.constant 0 : i32
    %c0_i32_0 = arith.constant 0 : i32
    %c0_i32_1 = arith.constant 0 : i32
    return %c0_i32, %c0_i32_0 : i32, i32
  }
  func.func @transform_2(%arg0: i32) -> (i32, i32) {
    %c0_i32 = arith.constant 0 : i32
    %c0_i32_0 = arith.constant 0 : i32
    %c0_i32_1 = arith.constant 0 : i32
    return %c0_i32, %c0_i32_0 : i32, i32
  }
  func.func @transform_3(%arg0: i32) -> (i32, i32) {
    %c0_i32 = arith.constant 0 : i32
    %c0_i32_0 = arith.constant 0 : i32
    return %c0_i32, %arg0 : i32, i32
  }
}

module attributes {stable_mosaic.version = 11 : i64} {
  func.func @_offset_conv_kernel(%arg0: i32, %arg1: memref<9x27x4xbf16, #tpu.memory_space<vmem>>, %arg2: memref<27x1xf32, #tpu.memory_space<vmem>>, %arg3: memref<1x4x360xbf16, #tpu.memory_space<vmem>>, %arg4: memref<1x27x288xf32, #tpu.memory_space<vmem>>) attributes {dimension_semantics = [#tpu.dimension_semantics<parallel>], iteration_bounds = array<i64: 2>, scalar_prefetch = 0 : i64, scratch_operands = 0 : i64, tpu.core_type = #tpu.core_type<tc>, window_params = [{pipeline_mode = #tpu.pipeline_mode<synchronous>, transform_indices = @transform_0, window_bounds = array<i64: 9, 27, 4>}, {pipeline_mode = #tpu.pipeline_mode<synchronous>, transform_indices = @transform_1, window_bounds = array<i64: 27, 1>}, {transform_indices = @transform_2, window_bounds = array<i64: 1, 4, 360>}, {transform_indices = @transform_3, window_bounds = array<i64: 1, 27, 288>}]} {
    %cst = arith.constant 0.000000e+00 : f32
    %0 = vector.broadcast %cst : f32 to vector<27x288xf32>
    %c0 = arith.constant 0 : index
    %c0_0 = arith.constant 0 : index
    %c0_1 = arith.constant 0 : index
    %1 = vector.load %arg1[%c0, %c0_0, %c0_1] : memref<9x27x4xbf16, #tpu.memory_space<vmem>>, vector<1x27x4xbf16>
    %2 = vector.shape_cast %1 : vector<1x27x4xbf16> to vector<27x4xbf16>
    %c0_2 = arith.constant 0 : index
    %c0_3 = arith.constant 0 : index
    %c17 = arith.constant 17 : index
    %3 = vector.load %arg3[%c0_2, %c0_3, %c17] : memref<1x4x360xbf16, #tpu.memory_space<vmem>>, vector<1x4x288xbf16>
    %4 = vector.shape_cast %3 : vector<1x4x288xbf16> to vector<4x288xbf16>
    %cst_4 = arith.constant dense<0.000000e+00> : vector<27x288xf32>
    %5 = tpu.matmul %2, %4, %cst_4 {dimension_numbers = #tpu.dot_dimension_numbers<[1], [0], [0], [1], [0, 0, 1, 1], [], []>} : vector<27x4xbf16>, vector<4x288xbf16>, vector<27x288xf32> -> vector<27x288xf32>
    %6 = arith.addf %0, %5 : vector<27x288xf32>
    %c1 = arith.constant 1 : index
    %c0_5 = arith.constant 0 : index
    %c0_6 = arith.constant 0 : index
    %7 = vector.load %arg1[%c1, %c0_5, %c0_6] : memref<9x27x4xbf16, #tpu.memory_space<vmem>>, vector<1x27x4xbf16>
    %8 = vector.shape_cast %7 : vector<1x27x4xbf16> to vector<27x4xbf16>
    %c0_7 = arith.constant 0 : index
    %c0_8 = arith.constant 0 : index
    %c18 = arith.constant 18 : index
    %9 = vector.load %arg3[%c0_7, %c0_8, %c18] : memref<1x4x360xbf16, #tpu.memory_space<vmem>>, vector<1x4x288xbf16>
    %10 = vector.shape_cast %9 : vector<1x4x288xbf16> to vector<4x288xbf16>
    %cst_9 = arith.constant dense<0.000000e+00> : vector<27x288xf32>
    %11 = tpu.matmul %8, %10, %cst_9 {dimension_numbers = #tpu.dot_dimension_numbers<[1], [0], [0], [1], [0, 0, 1, 1], [], []>} : vector<27x4xbf16>, vector<4x288xbf16>, vector<27x288xf32> -> vector<27x288xf32>
    %12 = arith.addf %6, %11 : vector<27x288xf32>
    %c2 = arith.constant 2 : index
    %c0_10 = arith.constant 0 : index
    %c0_11 = arith.constant 0 : index
    %13 = vector.load %arg1[%c2, %c0_10, %c0_11] : memref<9x27x4xbf16, #tpu.memory_space<vmem>>, vector<1x27x4xbf16>
    %14 = vector.shape_cast %13 : vector<1x27x4xbf16> to vector<27x4xbf16>
    %c0_12 = arith.constant 0 : index
    %c0_13 = arith.constant 0 : index
    %c19 = arith.constant 19 : index
    %15 = vector.load %arg3[%c0_12, %c0_13, %c19] : memref<1x4x360xbf16, #tpu.memory_space<vmem>>, vector<1x4x288xbf16>
    %16 = vector.shape_cast %15 : vector<1x4x288xbf16> to vector<4x288xbf16>
    %cst_14 = arith.constant dense<0.000000e+00> : vector<27x288xf32>
    %17 = tpu.matmul %14, %16, %cst_14 {dimension_numbers = #tpu.dot_dimension_numbers<[1], [0], [0], [1], [0, 0, 1, 1], [], []>} : vector<27x4xbf16>, vector<4x288xbf16>, vector<27x288xf32> -> vector<27x288xf32>
    %18 = arith.addf %12, %17 : vector<27x288xf32>
    %c3 = arith.constant 3 : index
    %c0_15 = arith.constant 0 : index
    %c0_16 = arith.constant 0 : index
    %19 = vector.load %arg1[%c3, %c0_15, %c0_16] : memref<9x27x4xbf16, #tpu.memory_space<vmem>>, vector<1x27x4xbf16>
    %20 = vector.shape_cast %19 : vector<1x27x4xbf16> to vector<27x4xbf16>
    %c0_17 = arith.constant 0 : index
    %c0_18 = arith.constant 0 : index
    %c35 = arith.constant 35 : index
    %21 = vector.load %arg3[%c0_17, %c0_18, %c35] : memref<1x4x360xbf16, #tpu.memory_space<vmem>>, vector<1x4x288xbf16>
    %22 = vector.shape_cast %21 : vector<1x4x288xbf16> to vector<4x288xbf16>
    %cst_19 = arith.constant dense<0.000000e+00> : vector<27x288xf32>
    %23 = tpu.matmul %20, %22, %cst_19 {dimension_numbers = #tpu.dot_dimension_numbers<[1], [0], [0], [1], [0, 0, 1, 1], [], []>} : vector<27x4xbf16>, vector<4x288xbf16>, vector<27x288xf32> -> vector<27x288xf32>
    %24 = arith.addf %18, %23 : vector<27x288xf32>
    %c4 = arith.constant 4 : index
    %c0_20 = arith.constant 0 : index
    %c0_21 = arith.constant 0 : index
    %25 = vector.load %arg1[%c4, %c0_20, %c0_21] : memref<9x27x4xbf16, #tpu.memory_space<vmem>>, vector<1x27x4xbf16>
    %26 = vector.shape_cast %25 : vector<1x27x4xbf16> to vector<27x4xbf16>
    %c0_22 = arith.constant 0 : index
    %c0_23 = arith.constant 0 : index
    %c36 = arith.constant 36 : index
    %27 = vector.load %arg3[%c0_22, %c0_23, %c36] : memref<1x4x360xbf16, #tpu.memory_space<vmem>>, vector<1x4x288xbf16>
    %28 = vector.shape_cast %27 : vector<1x4x288xbf16> to vector<4x288xbf16>
    %cst_24 = arith.constant dense<0.000000e+00> : vector<27x288xf32>
    %29 = tpu.matmul %26, %28, %cst_24 {dimension_numbers = #tpu.dot_dimension_numbers<[1], [0], [0], [1], [0, 0, 1, 1], [], []>} : vector<27x4xbf16>, vector<4x288xbf16>, vector<27x288xf32> -> vector<27x288xf32>
    %30 = arith.addf %24, %29 : vector<27x288xf32>
    %c5 = arith.constant 5 : index
    %c0_25 = arith.constant 0 : index
    %c0_26 = arith.constant 0 : index
    %31 = vector.load %arg1[%c5, %c0_25, %c0_26] : memref<9x27x4xbf16, #tpu.memory_space<vmem>>, vector<1x27x4xbf16>
    %32 = vector.shape_cast %31 : vector<1x27x4xbf16> to vector<27x4xbf16>
    %c0_27 = arith.constant 0 : index
    %c0_28 = arith.constant 0 : index
    %c37 = arith.constant 37 : index
    %33 = vector.load %arg3[%c0_27, %c0_28, %c37] : memref<1x4x360xbf16, #tpu.memory_space<vmem>>, vector<1x4x288xbf16>
    %34 = vector.shape_cast %33 : vector<1x4x288xbf16> to vector<4x288xbf16>
    %cst_29 = arith.constant dense<0.000000e+00> : vector<27x288xf32>
    %35 = tpu.matmul %32, %34, %cst_29 {dimension_numbers = #tpu.dot_dimension_numbers<[1], [0], [0], [1], [0, 0, 1, 1], [], []>} : vector<27x4xbf16>, vector<4x288xbf16>, vector<27x288xf32> -> vector<27x288xf32>
    %36 = arith.addf %30, %35 : vector<27x288xf32>
    %c6 = arith.constant 6 : index
    %c0_30 = arith.constant 0 : index
    %c0_31 = arith.constant 0 : index
    %37 = vector.load %arg1[%c6, %c0_30, %c0_31] : memref<9x27x4xbf16, #tpu.memory_space<vmem>>, vector<1x27x4xbf16>
    %38 = vector.shape_cast %37 : vector<1x27x4xbf16> to vector<27x4xbf16>
    %c0_32 = arith.constant 0 : index
    %c0_33 = arith.constant 0 : index
    %c53 = arith.constant 53 : index
    %39 = vector.load %arg3[%c0_32, %c0_33, %c53] : memref<1x4x360xbf16, #tpu.memory_space<vmem>>, vector<1x4x288xbf16>
    %40 = vector.shape_cast %39 : vector<1x4x288xbf16> to vector<4x288xbf16>
    %cst_34 = arith.constant dense<0.000000e+00> : vector<27x288xf32>
    %41 = tpu.matmul %38, %40, %cst_34 {dimension_numbers = #tpu.dot_dimension_numbers<[1], [0], [0], [1], [0, 0, 1, 1], [], []>} : vector<27x4xbf16>, vector<4x288xbf16>, vector<27x288xf32> -> vector<27x288xf32>
    %42 = arith.addf %36, %41 : vector<27x288xf32>
    %c7 = arith.constant 7 : index
    %c0_35 = arith.constant 0 : index
    %c0_36 = arith.constant 0 : index
    %43 = vector.load %arg1[%c7, %c0_35, %c0_36] : memref<9x27x4xbf16, #tpu.memory_space<vmem>>, vector<1x27x4xbf16>
    %44 = vector.shape_cast %43 : vector<1x27x4xbf16> to vector<27x4xbf16>
    %c0_37 = arith.constant 0 : index
    %c0_38 = arith.constant 0 : index
    %c54 = arith.constant 54 : index
    %45 = vector.load %arg3[%c0_37, %c0_38, %c54] : memref<1x4x360xbf16, #tpu.memory_space<vmem>>, vector<1x4x288xbf16>
    %46 = vector.shape_cast %45 : vector<1x4x288xbf16> to vector<4x288xbf16>
    %cst_39 = arith.constant dense<0.000000e+00> : vector<27x288xf32>
    %47 = tpu.matmul %44, %46, %cst_39 {dimension_numbers = #tpu.dot_dimension_numbers<[1], [0], [0], [1], [0, 0, 1, 1], [], []>} : vector<27x4xbf16>, vector<4x288xbf16>, vector<27x288xf32> -> vector<27x288xf32>
    %48 = arith.addf %42, %47 : vector<27x288xf32>
    %c8 = arith.constant 8 : index
    %c0_40 = arith.constant 0 : index
    %c0_41 = arith.constant 0 : index
    %49 = vector.load %arg1[%c8, %c0_40, %c0_41] : memref<9x27x4xbf16, #tpu.memory_space<vmem>>, vector<1x27x4xbf16>
    %50 = vector.shape_cast %49 : vector<1x27x4xbf16> to vector<27x4xbf16>
    %c0_42 = arith.constant 0 : index
    %c0_43 = arith.constant 0 : index
    %c55 = arith.constant 55 : index
    %51 = vector.load %arg3[%c0_42, %c0_43, %c55] : memref<1x4x360xbf16, #tpu.memory_space<vmem>>, vector<1x4x288xbf16>
    %52 = vector.shape_cast %51 : vector<1x4x288xbf16> to vector<4x288xbf16>
    %cst_44 = arith.constant dense<0.000000e+00> : vector<27x288xf32>
    %53 = tpu.matmul %50, %52, %cst_44 {dimension_numbers = #tpu.dot_dimension_numbers<[1], [0], [0], [1], [0, 0, 1, 1], [], []>} : vector<27x4xbf16>, vector<4x288xbf16>, vector<27x288xf32> -> vector<27x288xf32>
    %54 = arith.addf %48, %53 : vector<27x288xf32>
    %c0_45 = arith.constant 0 : index
    %c0_46 = arith.constant 0 : index
    %55 = vector.load %arg2[%c0_45, %c0_46] : memref<27x1xf32, #tpu.memory_space<vmem>>, vector<27x1xf32>
    %56 = vector.broadcast %55 : vector<27x1xf32> to vector<27x288xf32>
    %57 = arith.addf %54, %56 : vector<27x288xf32>
    %58 = tpu.iota {dimensions = array<i32: 0>} : vector<27x288xi32>
    %c18_i32 = arith.constant 18 : i32
    %59 = vector.broadcast %c18_i32 : i32 to vector<27x288xi32>
    %60 = arith.cmpi sge, %58, %59 : vector<27x288xi32>
    %61 = arith.negf %57 : vector<27x288xf32>
    %62 = math.exp %61 : vector<27x288xf32>
    %cst_47 = arith.constant 1.000000e+00 : f32
    %63 = vector.broadcast %cst_47 : f32 to vector<27x288xf32>
    %64 = arith.addf %63, %62 : vector<27x288xf32>
    %65 = arith.divf %63, %64 : vector<27x288xf32>
    %66 = arith.select %60, %65, %57 : vector<27x288xi1>, vector<27x288xf32>
    %c0_48 = arith.constant 0 : index
    %c0_49 = arith.constant 0 : index
    %c0_50 = arith.constant 0 : index
    %67 = vector.load %arg4[%c0_48, %c0_49, %c0_50] : memref<1x27x288xf32, #tpu.memory_space<vmem>>, vector<1x27x288xf32>
    %68 = vector.shape_cast %67 : vector<1x27x288xf32> to vector<27x288xf32>
    %69 = vector.shape_cast %66 : vector<27x288xf32> to vector<1x27x288xf32>
    tpu.vector_store %arg4[%c0_48, %c0_49, %c0_50], %69 {strides = array<i32>} : memref<1x27x288xf32, #tpu.memory_space<vmem>>, vector<1x27x288xf32>,
    return
  }
  func.func @transform_0(%arg0: i32) -> (i32, i32, i32) {
    %c0_i32 = arith.constant 0 : i32
    %c0_i32_0 = arith.constant 0 : i32
    %c0_i32_1 = arith.constant 0 : i32
    %c0_i32_2 = arith.constant 0 : i32
    return %c0_i32, %c0_i32_0, %c0_i32_1 : i32, i32, i32
  }
  func.func @transform_1(%arg0: i32) -> (i32, i32) {
    %c0_i32 = arith.constant 0 : i32
    %c0_i32_0 = arith.constant 0 : i32
    %c0_i32_1 = arith.constant 0 : i32
    return %c0_i32, %c0_i32_0 : i32, i32
  }
  func.func @transform_2(%arg0: i32) -> (i32, i32, i32) {
    %c0_i32 = arith.constant 0 : i32
    %c0_i32_0 = arith.constant 0 : i32
    %c0_i32_1 = arith.constant 0 : i32
    return %arg0, %c0_i32, %c0_i32_0 : i32, i32, i32
  }
  func.func @transform_3(%arg0: i32) -> (i32, i32, i32) {
    %c0_i32 = arith.constant 0 : i32
    %c0_i32_0 = arith.constant 0 : i32
    %c0_i32_1 = arith.constant 0 : i32
    return %arg0, %c0_i32, %c0_i32_0 : i32, i32, i32
  }
}

module attributes {stable_mosaic.version = 11 : i64} {
  func.func @_conv_stats_kernel(%arg0: i32, %arg1: memref<8x36xbf16, #tpu.memory_space<vmem>>, %arg2: memref<36x512xbf16, #tpu.memory_space<vmem>>, %arg3: memref<8x512xbf16, #tpu.memory_space<vmem>>, %arg4: memref<1x8x1xf32, #tpu.memory_space<vmem>>, %arg5: memref<1x8x1xf32, #tpu.memory_space<vmem>>) attributes {dimension_semantics = [#tpu.dimension_semantics<parallel>], iteration_bounds = array<i64: 1>, scalar_prefetch = 0 : i64, scratch_operands = 0 : i64, tpu.core_type = #tpu.core_type<tc>, window_params = [{pipeline_mode = #tpu.pipeline_mode<synchronous>, transform_indices = @transform_0, window_bounds = array<i64: 8, 36>}, {transform_indices = @transform_1, window_bounds = array<i64: 36, 512>}, {transform_indices = @transform_2, window_bounds = array<i64: 8, 512>}, {transform_indices = @transform_3, window_bounds = array<i64: 1, 8, 1>}, {transform_indices = @transform_4, window_bounds = array<i64: 1, 8, 1>}]} {
    %c0 = arith.constant 0 : index
    %c0_0 = arith.constant 0 : index
    %0 = vector.load %arg1[%c0, %c0_0] : memref<8x36xbf16, #tpu.memory_space<vmem>>, vector<8x36xbf16>
    %c0_1 = arith.constant 0 : index
    %c0_2 = arith.constant 0 : index
    %1 = vector.load %arg2[%c0_1, %c0_2] : memref<36x512xbf16, #tpu.memory_space<vmem>>, vector<36x512xbf16>
    %cst = arith.constant dense<0.000000e+00> : vector<8x512xf32>
    %2 = tpu.matmul %0, %1, %cst {dimension_numbers = #tpu.dot_dimension_numbers<[1], [0], [0], [1], [0, 0, 1, 1], [], []>} : vector<8x36xbf16>, vector<36x512xbf16>, vector<8x512xf32> -> vector<8x512xf32>
    %3 = arith.truncf %2 : vector<8x512xf32> to vector<8x512xbf16>
    %c0_3 = arith.constant 0 : index
    %c0_4 = arith.constant 0 : index
    %4 = vector.load %arg3[%c0_3, %c0_4] : memref<8x512xbf16, #tpu.memory_space<vmem>>, vector<8x512xbf16>
    tpu.vector_store %arg3[%c0_3, %c0_4], %3 {strides = array<i32>} : memref<8x512xbf16, #tpu.memory_space<vmem>>, vector<8x512xbf16>,
    %cst_5 = arith.constant dense<0.000000e+00> : vector<8xf32>
    %5 = vector.multi_reduction <add>, %2, %cst_5 [1] : vector<8x512xf32> to vector<8xf32>
    %6 = vector.shape_cast %5 : vector<8xf32> to vector<8x1xf32>
    %c0_6 = arith.constant 0 : index
    %c0_7 = arith.constant 0 : index
    %c0_8 = arith.constant 0 : index
    %7 = vector.load %arg4[%c0_6, %c0_7, %c0_8] : memref<1x8x1xf32, #tpu.memory_space<vmem>>, vector<1x8x1xf32>
    %8 = vector.shape_cast %7 : vector<1x8x1xf32> to vector<8x1xf32>
    %9 = vector.shape_cast %6 : vector<8x1xf32> to vector<1x8x1xf32>
    tpu.vector_store %arg4[%c0_6, %c0_7, %c0_8], %9 {strides = array<i32>} : memref<1x8x1xf32, #tpu.memory_space<vmem>>, vector<1x8x1xf32>,
    %10 = arith.mulf %2, %2 : vector<8x512xf32>
    %cst_9 = arith.constant dense<0.000000e+00> : vector<8xf32>
    %11 = vector.multi_reduction <add>, %10, %cst_9 [1] : vector<8x512xf32> to vector<8xf32>
    %12 = vector.shape_cast %11 : vector<8xf32> to vector<8x1xf32>
    %c0_10 = arith.constant 0 : index
    %c0_11 = arith.constant 0 : index
    %c0_12 = arith.constant 0 : index
    %13 = vector.load %arg5[%c0_10, %c0_11, %c0_12] : memref<1x8x1xf32, #tpu.memory_space<vmem>>, vector<1x8x1xf32>
    %14 = vector.shape_cast %13 : vector<1x8x1xf32> to vector<8x1xf32>
    %15 = vector.shape_cast %12 : vector<8x1xf32> to vector<1x8x1xf32>
    tpu.vector_store %arg5[%c0_10, %c0_11, %c0_12], %15 {strides = array<i32>} : memref<1x8x1xf32, #tpu.memory_space<vmem>>, vector<1x8x1xf32>,
    return
  }
  func.func @transform_0(%arg0: i32) -> (i32, i32) {
    %c0_i32 = arith.constant 0 : i32
    %c0_i32_0 = arith.constant 0 : i32
    %c0_i32_1 = arith.constant 0 : i32
    return %c0_i32, %c0_i32_0 : i32, i32
  }
  func.func @transform_1(%arg0: i32) -> (i32, i32) {
    %c0_i32 = arith.constant 0 : i32
    %c0_i32_0 = arith.constant 0 : i32
    return %c0_i32, %arg0 : i32, i32
  }
  func.func @transform_2(%arg0: i32) -> (i32, i32) {
    %c0_i32 = arith.constant 0 : i32
    %c0_i32_0 = arith.constant 0 : i32
    return %c0_i32, %arg0 : i32, i32
  }
  func.func @transform_3(%arg0: i32) -> (i32, i32, i32) {
    %c0_i32 = arith.constant 0 : i32
    %c0_i32_0 = arith.constant 0 : i32
    %c0_i32_1 = arith.constant 0 : i32
    return %arg0, %c0_i32, %c0_i32_0 : i32, i32, i32
  }
  func.func @transform_4(%arg0: i32) -> (i32, i32, i32) {
    %c0_i32 = arith.constant 0 : i32
    %c0_i32_0 = arith.constant 0 : i32
    %c0_i32_1 = arith.constant 0 : i32
    return %arg0, %c0_i32, %c0_i32_0 : i32, i32, i32
  }
}

module attributes {stable_mosaic.version = 11 : i64} {
  func.func @_scale_shift_relu_kernel(%arg0: i32, %arg1: memref<8x512xbf16, #tpu.memory_space<vmem>>, %arg2: memref<8x1xf32, #tpu.memory_space<vmem>>, %arg3: memref<8x1xf32, #tpu.memory_space<vmem>>, %arg4: memref<8x512xf32, #tpu.memory_space<vmem>>) attributes {dimension_semantics = [#tpu.dimension_semantics<parallel>], iteration_bounds = array<i64: 1>, scalar_prefetch = 0 : i64, scratch_operands = 0 : i64, tpu.core_type = #tpu.core_type<tc>, window_params = [{transform_indices = @transform_0, window_bounds = array<i64: 8, 512>}, {pipeline_mode = #tpu.pipeline_mode<synchronous>, transform_indices = @transform_1, window_bounds = array<i64: 8, 1>}, {pipeline_mode = #tpu.pipeline_mode<synchronous>, transform_indices = @transform_2, window_bounds = array<i64: 8, 1>}, {transform_indices = @transform_3, window_bounds = array<i64: 8, 512>}]} {
    %c0 = arith.constant 0 : index
    %c0_0 = arith.constant 0 : index
    %0 = vector.load %arg1[%c0, %c0_0] : memref<8x512xbf16, #tpu.memory_space<vmem>>, vector<8x512xbf16>
    %1 = arith.extf %0 : vector<8x512xbf16> to vector<8x512xf32>
    %c0_1 = arith.constant 0 : index
    %c0_2 = arith.constant 0 : index
    %2 = vector.load %arg2[%c0_1, %c0_2] : memref<8x1xf32, #tpu.memory_space<vmem>>, vector<8x1xf32>
    %3 = vector.broadcast %2 : vector<8x1xf32> to vector<8x512xf32>
    %4 = arith.mulf %1, %3 : vector<8x512xf32>
    %c0_3 = arith.constant 0 : index
    %c0_4 = arith.constant 0 : index
    %5 = vector.load %arg3[%c0_3, %c0_4] : memref<8x1xf32, #tpu.memory_space<vmem>>, vector<8x1xf32>
    %6 = vector.broadcast %5 : vector<8x1xf32> to vector<8x512xf32>
    %7 = arith.addf %4, %6 : vector<8x512xf32>
    %cst = arith.constant 0.000000e+00 : f32
    %8 = vector.broadcast %cst : f32 to vector<8x512xf32>
    %9 = arith.maximumf %7, %8 : vector<8x512xf32>
    %c0_5 = arith.constant 0 : index
    %c0_6 = arith.constant 0 : index
    %10 = vector.load %arg4[%c0_5, %c0_6] : memref<8x512xf32, #tpu.memory_space<vmem>>, vector<8x512xf32>
    tpu.vector_store %arg4[%c0_5, %c0_6], %9 {strides = array<i32>} : memref<8x512xf32, #tpu.memory_space<vmem>>, vector<8x512xf32>,
    return
  }
  func.func @transform_0(%arg0: i32) -> (i32, i32) {
    %c0_i32 = arith.constant 0 : i32
    %c0_i32_0 = arith.constant 0 : i32
    return %c0_i32, %arg0 : i32, i32
  }
  func.func @transform_1(%arg0: i32) -> (i32, i32) {
    %c0_i32 = arith.constant 0 : i32
    %c0_i32_0 = arith.constant 0 : i32
    %c0_i32_1 = arith.constant 0 : i32
    return %c0_i32, %c0_i32_0 : i32, i32
  }
  func.func @transform_2(%arg0: i32) -> (i32, i32) {
    %c0_i32 = arith.constant 0 : i32
    %c0_i32_0 = arith.constant 0 : i32
    %c0_i32_1 = arith.constant 0 : i32
    return %c0_i32, %c0_i32_0 : i32, i32
  }
  func.func @transform_3(%arg0: i32) -> (i32, i32) {
    %c0_i32 = arith.constant 0 : i32
    %c0_i32_0 = arith.constant 0 : i32
    return %c0_i32, %arg0 : i32, i32
  }
}

</mosaic_0001>

<llo_original>
// kernel: up_forward.7
$region0: #{up_forward.7}
  #allocation0 [shape = 'u32[]', space=smem, size = 0x4, offset = 0x4, fixed_abs, tag = 'smem constant byte address 0x4 - core index']
  #allocation1 [shape = 'u32[72,128]{1,0:T(1,128)}', space=vmem, size = 0x9000, scoped, tag = 'internal scratch']
  %s0 = inlined_call_operand.vmem [shape: f32[8,64], index: 0, kind: input, shape index: {}]
  %s1 = inlined_call_operand.vmem [shape: f32[64,256], index: 1, kind: input, shape index: {}]
  %s2 = inlined_call_operand.vmem [shape: f32[8,256], index: 2, kind: output, shape index: {}]
  %s3 = sld [smem:[#allocation0]]
  $region18: #{up_forward.7} parent=0
    _
  %s5 = ssub.s32 1, %s3
  %s6 = scalar_select 0, %s5, %s3
  // Predicated region
  $region2: #{up_forward.7} parent=0 // pred_check
    _
  $region3: #{up_forward.7} parent=0 // pred_check_branch
    %8 = sbr.rel (0) target = $region5
  $region4: #{up_forward.7} parent=0 // pred_region
    _
  $region5: #{up_forward.7} parent=0 // pred_fallthru
    _
  // Predicated region
  $region6: #{up_forward.7} parent=0 // pred_check
    _
  $region7: #{up_forward.7} parent=0 // pred_check_branch
    %10 = sbr.rel (0) target = $region9
  $region8: #{up_forward.7} parent=0 // pred_region
    _
  $region9: #{up_forward.7} parent=0 // pred_fallthru
    _
  %v11 = vld [vmem:[%s0] sm:$0xff]
  %v12 = vld [vmem:[%s1] sm:$0xff]
  %v13 = vld [vmem:[%s1 + $0x8] sm:$0xff]
  %v14 = vld [vmem:[%s1 + $0x10] sm:$0xff]
  %v15 = vld [vmem:[%s1 + $0x18] sm:$0xff]
  %v16 = vld [vmem:[%s1 + $0x20] sm:$0xff]
  %v17 = vld [vmem:[%s1 + $0x28] sm:$0xff]
  %v18 = vld [vmem:[%s1 + $0x30] sm:$0xff]
  %v19 = vld [vmem:[%s1 + $0x38] sm:$0xff]
  %v20 = vld [vmem:[%s1 + $0x40] sm:$0xff]
  %v21 = vld [vmem:[%s1 + $0x48] sm:$0xff]
  %v22 = vld [vmem:[%s1 + $0x50] sm:$0xff]
  %v23 = vld [vmem:[%s1 + $0x58] sm:$0xff]
  %v24 = vld [vmem:[%s1 + $0x60] sm:$0xff]
  %v25 = vld [vmem:[%s1 + $0x68] sm:$0xff]
  %v26 = vld [vmem:[%s1 + $0x70] sm:$0xff]
  %v27 = vld [vmem:[%s1 + $0x78] sm:$0xff]
  %vm28 = vcmask 523264
  %v30 = vsel %vm28, %v11, 0
  %32 = vmatpush.msra.mxu0 0.0
  %33 = vmatpush.msra.mxu0 0.0
  %34 = vmatpush.msra.mxu0 0.0
  %35 = vmatpush.msra.mxu0 0.0
  %36 = vmatpush.msra.mxu0 0.0
  %37 = vmatpush.msra.mxu0 0.0
  %38 = vmatpush.msra.mxu0 0.0
  %39 = vmatpush.msra.mxu0 0.0
  %40 = vmatpush.msra.mxu0 %v26
  %41 = vmatpush.msra.mxu0 %v24
  %42 = vmatpush.msra.mxu0 %v22
  %43 = vmatpush.msra.mxu0 %v20
  %44 = vmatpush.msra.mxu0 %v18
  %45 = vmatpush.msra.mxu0 %v16
  %46 = vmatpush.msra.mxu0 %v14
  %47 = vmatpush.msra.mxu0 %v12
  %48 = vmatmul.f32.gmra.mxu0 %v30
  %v49 = vpop.f32.mrf.mxu0
  %v50 = vadd.f32 0.0, %v49
  %51 = vdwg.mxu0
  %52 = vmatpush.msra.mxu0 0.0
  %53 = vmatpush.msra.mxu0 0.0
  %54 = vmatpush.msra.mxu0 0.0
  %55 = vmatpush.msra.mxu0 0.0
  %56 = vmatpush.msra.mxu0 0.0
  %57 = vmatpush.msra.mxu0 0.0
  %58 = vmatpush.msra.mxu0 0.0
  %59 = vmatpush.msra.mxu0 0.0
  %60 = vmatpush.msra.mxu0 %v27
  %61 = vmatpush.msra.mxu0 %v25
  %62 = vmatpush.msra.mxu0 %v23
  %63 = vmatpush.msra.mxu0 %v21
  %64 = vmatpush.msra.mxu0 %v19
  %65 = vmatpush.msra.mxu0 %v17
  %66 = vmatpush.msra.mxu0 %v15
  %67 = vmatpush.msra.mxu0 %v13
  %68 = vmatmul.f32.gmra.mxu0 %v30
  %v69 = vpop.f32.mrf.mxu0
  %v70 = vadd.f32 0.0, %v69
  %71 = vdwg.mxu0
  %72 = vst [vmem:[%s2] sm:$0xff] %v50
  %73 = vst [vmem:[%s2 + $0x8] sm:$0xff] %v70
  // Predicated region
  $region10: #{up_forward.7} parent=0 // pred_check
    _
  $region11: #{up_forward.7} parent=0 // pred_check_branch
    %75 = sbr.rel (0) target = $region13
  $region12: #{up_forward.7} parent=0 // pred_region
    _
  $region13: #{up_forward.7} parent=0 // pred_fallthru
    _
  // Predicated region
  $region14: #{up_forward.7} parent=0 // pred_check
    _
  $region15: #{up_forward.7} parent=0 // pred_check_branch
    %77 = sbr.rel (0) target = $region17
  $region16: #{up_forward.7} parent=0 // pred_region
    _
  $region17: #{up_forward.7} parent=0 // pred_fallthru
    _

// kernel: up_forward.8
$region0: #{up_forward.8}
  #allocation0 [shape = 'u32[]', space=smem, size = 0x4, offset = 0x4, fixed_abs, tag = 'smem constant byte address 0x4 - core index']
  #allocation1 [shape = 'u32[72,128]{1,0:T(1,128)}', space=vmem, size = 0x9000, scoped, tag = 'internal scratch']
  %s0 = inlined_call_operand.vmem [shape: bf16[9,27,8], index: 0, kind: input, shape index: {}]
  %s1 = inlined_call_operand.vmem [shape: f32[27,1], index: 1, kind: input, shape index: {}]
  %s2 = inlined_call_operand.vmem [shape: bf16[2,8,360], index: 2, kind: input, shape index: {}]
  %s3 = inlined_call_operand.vmem [shape: f32[2,27,288], index: 3, kind: output, shape index: {}]
  %s4 = sld [smem:[#allocation0]]
  $region45: #{up_forward.8} parent=0
    _
  %s6 = ssub.s32 1, %s4
  %s7 = scalar_select 0, %s6, %s4
  loop: start=0, step=1, limit=4
  $region2: #{up_forward.8} parent=0 // loop_pre_header
    _
  $region3: #{up_forward.8} parent=0 // loop_header
    %s9 = sphi 0, %s13
    %p10 = scmp.ge.s32.totalorder %s9, 4
    %s17 = sphi 0, %s17
    %s19 = sphi 0, %s17
    %s20 = sphi 0, %s19
    %s34 = sphi 0, %s20
    %s38 = sphi 0, %s38
    %s40 = sphi 0, %s38
    %s41 = sphi 0, %s40
    %s55 = sphi 0, %s41
    %s61 = sphi 0, %s63
    %s64 = sphi 0, %s61
    %s65 = sphi 0, %s64
    %s81 = sphi 0, %s65
    %s87 = sphi 0, %s89
    %s90 = sphi 0, %s87
    %s91 = sphi 0, %s90
    %s107 = sphi 0, %s91
  $region4: #{up_forward.8} parent=0 // loop_header_branch
    %12 = sbr.rel (%p10) target = $region8
  $region5: #{up_forward.8} parent=0 // loop_body
    %s14 = ssub.s32 %s9, 1
    %s15 = ssub.s32 %s9, 2
    %s16 = sadd.s32 %s9, 1
    %s18 = sadd.s32 %s17, 1
    %p21 = scmp.eq.s32.totalorder %s9, 1
    %p22 = scmp.ne.s32.totalorder %s17, %s19
    %p23 = scmp.eq.s32.totalorder %s9, 0
    %p24 = por %p22, %p23
    %p25 = scmp.ne.s32.totalorder %s17, %s19
    %p26 = scmp.eq.s32.totalorder %s14, 1
    %p27 = por %p25, %p26
    %p28 = scmp.ne.s32.totalorder %s19, %s20
    %p29 = scmp.eq.s32.totalorder %s14, 0
    %p30 = por %p28, %p29
    %p31 = scmp.ne.s32.totalorder %s19, %s20
    %p32 = scmp.eq.s32.totalorder %s15, 1
    %p33 = por %p31, %p32
    %p35 = scmp.ne.s32.totalorder %s20, %s34
    %p36 = scmp.eq.s32.totalorder %s15, 0
    %p37 = por %p35, %p36
    %s39 = sadd.s32 %s38, 1
    %p42 = scmp.eq.s32.totalorder %s9, 1
    %p43 = scmp.ne.s32.totalorder %s38, %s40
    %p44 = scmp.eq.s32.totalorder %s9, 0
    %p45 = por %p43, %p44
    %p46 = scmp.ne.s32.totalorder %s38, %s40
    %p47 = scmp.eq.s32.totalorder %s14, 1
    %p48 = por %p46, %p47
    %p49 = scmp.ne.s32.totalorder %s40, %s41
    %p50 = scmp.eq.s32.totalorder %s14, 0
    %p51 = por %p49, %p50
    %p52 = scmp.ne.s32.totalorder %s40, %s41
    %p53 = scmp.eq.s32.totalorder %s15, 1
    %p54 = por %p52, %p53
    %p56 = scmp.ne.s32.totalorder %s41, %s55
    %p57 = scmp.eq.s32.totalorder %s15, 0
    %p58 = por %p56, %p57
    %s59 = ssub.s32 %s9, %s16
    %p60 = scmp.eq.s32.totalorder %s59, 0
    %s62 = sadd.s32 %s61, 1
    %s63 = scalar_select %p60, %s61, %s62
    %p66 = pneg %p60
    %p67 = scmp.eq.s32.totalorder %s9, 1
    %p68 = por %p66, %p67
    %p69 = scmp.ne.s32.totalorder %s61, %s64
    %p70 = scmp.eq.s32.totalorder %s9, 0
    %p71 = por %p69, %p70
    %p72 = scmp.ne.s32.totalorder %s61, %s64
    %p73 = scmp.eq.s32.totalorder %s14, 1
    %p74 = por %p72, %p73
    %p75 = scmp.ne.s32.totalorder %s64, %s65
    %p76 = scmp.eq.s32.totalorder %s14, 0
    %p77 = por %p75, %p76
    %p78 = scmp.ne.s32.totalorder %s64, %s65
    %p79 = scmp.eq.s32.totalorder %s15, 1
    %p80 = por %p78, %p79
    %p82 = scmp.ne.s32.totalorder %s65, %s81
    %p83 = scmp.eq.s32.totalorder %s15, 0
    %p84 = por %p82, %p83
    %s85 = ssub.s32 %s9, %s16
    %p86 = scmp.eq.s32.totalorder %s85, 0
    %s88 = sadd.s32 %s87, 1
    %s89 = scalar_select %p86, %s87, %s88
    %p92 = pneg %p86
    %p93 = scmp.eq.s32.totalorder %s9, 1
    %p94 = por %p92, %p93
    %p95 = scmp.ne.s32.totalorder %s87, %s90
    %p96 = scmp.eq.s32.totalorder %s9, 0
    %p97 = por %p95, %p96
    %p98 = scmp.ne.s32.totalorder %s87, %s90
    %p99 = scmp.eq.s32.totalorder %s14, 1
    %p100 = por %p98, %p99
    %p101 = scmp.ne.s32.totalorder %s90, %s91
    %p102 = scmp.eq.s32.totalorder %s14, 0
    %p103 = por %p101, %p102
    %p104 = scmp.ne.s32.totalorder %s90, %s91
    %p105 = scmp.eq.s32.totalorder %s15, 1
    %p106 = por %p104, %p105
    %p108 = scmp.ne.s32.totalorder %s91, %s107
    %p109 = scmp.eq.s32.totalorder %s15, 0
    %p110 = por %p108, %p109
    %p111 = scmp.le.s32.totalorder 1, %s9
    %p112 = scmp.lt.s32.totalorder %s9, 3
    %p113 = pnand %p111, %p112
    %p114 = pneg %p113
    // Predicated region
    $region9: #{up_forward.8} parent=5 // pred_check
      _
    $region10: #{up_forward.8} parent=5 // pred_check_branch
      %116 = sbr.rel (%p113) target = $region12
    $region11: #{up_forward.8} parent=5 // pred_region
      %s117 = ssub.s32 %s9, 1
      // Predicated region
      $region13: #{up_forward.8} parent=11 // pred_check
        %p118 = pneg %p30
      $region14: #{up_forward.8} parent=11 // pred_check_branch
        %120 = sbr.rel (%p118) target = $region16
      $region15: #{up_forward.8} parent=11 // pred_region
        _
      $region16: #{up_forward.8} parent=11 // pred_fallthru
        _
      // Predicated region
      $region17: #{up_forward.8} parent=11 // pred_check
        %p121 = pneg %p51
      $region18: #{up_forward.8} parent=11 // pred_check_branch
        %123 = sbr.rel (%p121) target = $region20
      $region19: #{up_forward.8} parent=11 // pred_region
        _
      $region20: #{up_forward.8} parent=11 // pred_fallthru
        _
    $region12: #{up_forward.8} parent=5 // pred_fallthru
      _
    %p124 = scmp.lt.s32.totalorder %s9, 2
    // Predicated region
    $region21: #{up_forward.8} parent=5 // pred_check
      %p125 = pneg %p124
    $region22: #{up_forward.8} parent=5 // pred_check_branch
      %127 = sbr.rel (%p125) target = $region24
    $region23: #{up_forward.8} parent=5 // pred_region
      // Predicated region
      $region25: #{up_forward.8} parent=23 // pred_check
        %p128 = pneg %p71
      $region26: #{up_forward.8} parent=23 // pred_check_branch
        %130 = sbr.rel (%p128) target = $region28
      $region27: #{up_forward.8} parent=23 // pred_region
        %p131 = scmp.lt.s32.totalorder %s9, 1
        %s132 = scalar_select %p131, %s9, 1
        %s133 = smul.addr %s132, 3
        %s134 = smul.addr %s133, 4
        %s135 = scalar_lea.vmem %s2, %s134
      $region28: #{up_forward.8} parent=23 // pred_fallthru
        _
    $region24: #{up_forward.8} parent=5 // pred_fallthru
      _
    %p136 = scmp.le.s32.totalorder 1, %s9
    %p137 = scmp.lt.s32.totalorder %s9, 3
    %p138 = pnand %p136, %p137
    %p139 = pneg %p138
    // Predicated region
    $region29: #{up_forward.8} parent=5 // pred_check
      _
    $region30: #{up_forward.8} parent=5 // pred_check_branch
      %141 = sbr.rel (%p138) target = $region32
    $region31: #{up_forward.8} parent=5 // pred_region
      %s142 = ssub.s32 %s9, 1
      %p143 = pneg %p30
      %p144 = pneg %p27
      %p145 = pneg %p51
      %p146 = pneg %p48
      %p147 = scmp.lt.s32.totalorder %s14, 1
      %s148 = scalar_select %p147, %s14, 1
      %s149 = smul.addr %s148, 3
      %s150 = smul.addr %s149, 4
      %s151 = scalar_lea.vmem %s2, %s150
      %p152 = pneg %p77
      %p153 = pneg %p74
      %p154 = pneg %p103
      %p155 = pneg %p100
      %p156 = scmp.lt.s32.totalorder %s14, 1
      %s157 = scalar_select %p156, %s14, 1
      %s158 = smul.addr %s157, 12
      %s159 = smul.addr %s158, 8
      %s160 = scalar_lea.vmem %s3, %s159
      %p161 = scmp.lt.s32.totalorder %s14, 1
      %s162 = scalar_select %p161, %s14, 1
      %s163 = smul.addr %s162, 3
      %s164 = smul.addr %s163, 4
      %s165 = scalar_lea.vmem %s2, %s164
      %p166 = scmp.lt.s32.totalorder %s14, 1
      %s167 = scalar_select %p166, %s14, 1
      %s168 = smul.addr %s167, 12
      %s169 = smul.addr %s168, 8
      %s170 = scalar_lea.vmem %s3, %s169
      %v172 = vld [vmem:[%s0] sm:$0xf]
      %v173 = vld [vmem:[%s0 + $0x4] sm:$0xf]
      %v174 = vld [vmem:[%s0 + $0x8] sm:$0xf]
      %v175 = vld [vmem:[%s0 + $0xc] sm:$0x3]
      %v176 = vld [vmem:[%s165] sm:$0xff]
      %v177 = vld [vmem:[%s165 + $0x8] sm:$0xf]
      %s178 = scalar_lea.vmem %s0, 16
      %v179 = vld [vmem:[%s178] sm:$0xf]
      %v180 = vld [vmem:[%s178 + $0x4] sm:$0xf]
      %v181 = vld [vmem:[%s178 + $0x8] sm:$0xf]
      %v182 = vld [vmem:[%s178 + $0xc] sm:$0x3]
      %v187 = vunpack.c.l.b16 %v179
      %v188 = vunpack.c.l.b16 %v180
      %v189 = vunpack.c.l.b16 %v181
      %v190 = vunpack.c.l.b16 %v182
      %v191 = vpack.c.b16 %v188, %v187
      %v192 = vpack.c.b16 %v190, %v189
      %v195 = vunpack.c.l.b16 %v176
      %v196 = vunpack.c.h.b16 %v176
      %v197 = vunpack.c.l.b16 %v177
      %v198 = vpack.c.b16 %v195, %v195
      %v199 = vpack.c.b16 %v196, %v196
      %v200 = vpack.c.b16 %v197, %v197
      %201 = vrot.lane.b32.xlu0 %v198, 110
      %v202 = vpop.permute.xlu0 %201
      %203 = vrot.lane.b32.xlu0 %v199, 110
      %v204 = vpop.permute.xlu0 %203
      %205 = vrot.lane.b32.xlu0 %v200, 110
      %v206 = vpop.permute.xlu0 %205
      %vm207 = vcmask 900096
      %v208 = vsel %vm207, %v202, %v204
      %v209 = vsel %vm207, %v204, %v206
      %vm210 = vcmask 64512
      %v212 = vsel %vm210, %v191, 0
      %v215 = vsel %vm210, %v192, 0
      %vm217 = vcmask 1043456
      %v219 = vsel %vm217, %v208, 0
      %v222 = vsel %vm217, %v209, 0
      %v225 = vsel %vm217, %v206, 0
      %227 = vmatpush.bf16.msra.mxu0 0
      %228 = vmatpush.bf16.msra.mxu0 0
      %229 = vmatpush.bf16.msra.mxu0 0
      %230 = vmatpush.bf16.msra.mxu0 0
      %231 = vmatpush.bf16.msra.mxu0 0
      %232 = vmatpush.bf16.msra.mxu0 0
      %233 = vmatpush.bf16.msra.mxu0 0
      %234 = vmatpush.bf16.msra.mxu0 %v219
      %235 = vmatmul.bf16.gmra.mxu0 %v212
      %v236 = vpop.f32.mrf.mxu0
      %v237 = vadd.f32 0.0, %v236
      %v238 = vpop.f32.mrf.mxu0
      %v239 = vadd.f32 0.0, %v238
      %240 = vmatmul.bf16.gmra.mxu0 %v215
      %v241 = vpop.f32.mrf.mxu0
      %v242 = vadd.f32 0.0, %v241
      %v243 = vpop.f32.mrf.mxu0
      %v244 = vadd.f32 0.0, %v243
      %245 = vdwg.mxu0
      %246 = vmatpush.bf16.msra.mxu0 0
      %247 = vmatpush.bf16.msra.mxu0 0
      %248 = vmatpush.bf16.msra.mxu0 0
      %249 = vmatpush.bf16.msra.mxu0 0
      %250 = vmatpush.bf16.msra.mxu0 0
      %251 = vmatpush.bf16.msra.mxu0 0
      %252 = vmatpush.bf16.msra.mxu0 0
      %253 = vmatpush.bf16.msra.mxu0 %v222
      %254 = vmatmul.bf16.gmra.mxu0 %v212
      %v255 = vpop.f32.mrf.mxu0
      %v256 = vadd.f32 0.0, %v255
      %v257 = vpop.f32.mrf.mxu0
      %v258 = vadd.f32 0.0, %v257
      %259 = vmatmul.bf16.gmra.mxu0 %v215
      %v260 = vpop.f32.mrf.mxu0
      %v261 = vadd.f32 0.0, %v260
      %v262 = vpop.f32.mrf.mxu0
      %v263 = vadd.f32 0.0, %v262
      %264 = vdwg.mxu0
      %265 = vmatpush.bf16.msra.mxu0 0
      %266 = vmatpush.bf16.msra.mxu0 0
      %267 = vmatpush.bf16.msra.mxu0 0
      %268 = vmatpush.bf16.msra.mxu0 0
      %269 = vmatpush.bf16.msra.mxu0 0
      %270 = vmatpush.bf16.msra.mxu0 0
      %271 = vmatpush.bf16.msra.mxu0 0
      %272 = vmatpush.bf16.msra.mxu0 %v225
      %273 = vmatmul.bf16.gmra.mxu0 %v212
      %v274 = vpop.f32.mrf.mxu0
      %v275 = vadd.f32 0.0, %v274
      %v276 = vpop.f32.mrf.mxu0
      %v277 = vadd.f32 0.0, %v276
      %278 = vmatmul.bf16.gmra.mxu0 %v215
      %v279 = vpop.f32.mrf.mxu0
      %v280 = vadd.f32 0.0, %v279
      %v281 = vpop.f32.mrf.mxu0
      %v282 = vadd.f32 0.0, %v281
      %283 = vdwg.mxu0
      %v288 = vunpack.c.l.b16 %v172
      %v289 = vunpack.c.l.b16 %v173
      %v290 = vunpack.c.l.b16 %v174
      %v291 = vunpack.c.l.b16 %v175
      %v292 = vpack.c.b16 %v289, %v288
      %v293 = vpack.c.b16 %v291, %v290
      %294 = vrot.lane.b32.xlu0 %v198, 111
      %v295 = vpop.permute.xlu0 %294
      %296 = vrot.lane.b32.xlu0 %v199, 111
      %v297 = vpop.permute.xlu0 %296
      %298 = vrot.lane.b32.xlu0 %v200, 111
      %v299 = vpop.permute.xlu0 %298
      %vm300 = vcmask 908288
      %v301 = vsel %vm300, %v295, %v297
      %v302 = vsel %vm300, %v297, %v299
      %v304 = vsel %vm210, %v292, 0
      %v307 = vsel %vm210, %v293, 0
      %v310 = vsel %vm217, %v301, 0
      %v313 = vsel %vm217, %v302, 0
      %v316 = vsel %vm217, %v299, 0
      %318 = vmatpush.bf16.msra.mxu0 0
      %319 = vmatpush.bf16.msra.mxu0 0
      %320 = vmatpush.bf16.msra.mxu0 0
      %321 = vmatpush.bf16.msra.mxu0 0
      %322 = vmatpush.bf16.msra.mxu0 0
      %323 = vmatpush.bf16.msra.mxu0 0
      %324 = vmatpush.bf16.msra.mxu0 0
      %325 = vmatpush.bf16.msra.mxu0 %v310
      %326 = vmatmul.bf16.gmra.mxu0 %v304
      %v327 = vpop.f32.mrf.mxu0
      %v328 = vadd.f32 %v237, %v327
      %v329 = vpop.f32.mrf.mxu0
      %v330 = vadd.f32 %v239, %v329
      %331 = vmatmul.bf16.gmra.mxu0 %v307
      %v332 = vpop.f32.mrf.mxu0
      %v333 = vadd.f32 %v242, %v332
      %v334 = vpop.f32.mrf.mxu0
      %v335 = vadd.f32 %v244, %v334
      %336 = vdwg.mxu0
      %337 = vmatpush.bf16.msra.mxu0 0
      %338 = vmatpush.bf16.msra.mxu0 0
      %339 = vmatpush.bf16.msra.mxu0 0
      %340 = vmatpush.bf16.msra.mxu0 0
      %341 = vmatpush.bf16.msra.mxu0 0
      %342 = vmatpush.bf16.msra.mxu0 0
      %343 = vmatpush.bf16.msra.mxu0 0
      %344 = vmatpush.bf16.msra.mxu0 %v313
      %345 = vmatmul.bf16.gmra.mxu0 %v304
      %v346 = vpop.f32.mrf.mxu0
      %v347 = vadd.f32 %v256, %v346
      %v348 = vpop.f32.mrf.mxu0
      %v349 = vadd.f32 %v258, %v348
      %350 = vmatmul.bf16.gmra.mxu0 %v307
      %v351 = vpop.f32.mrf.mxu0
      %v352 = vadd.f32 %v261, %v351
      %v353 = vpop.f32.mrf.mxu0
      %v354 = vadd.f32 %v263, %v353
      %355 = vdwg.mxu0
      %356 = vmatpush.bf16.msra.mxu0 0
      %357 = vmatpush.bf16.msra.mxu0 0
      %358 = vmatpush.bf16.msra.mxu0 0
      %359 = vmatpush.bf16.msra.mxu0 0
      %360 = vmatpush.bf16.msra.mxu0 0
      %361 = vmatpush.bf16.msra.mxu0 0
      %362 = vmatpush.bf16.msra.mxu0 0
      %363 = vmatpush.bf16.msra.mxu0 %v316
      %364 = vmatmul.bf16.gmra.mxu0 %v304
      %v365 = vpop.f32.mrf.mxu0
      %v366 = vadd.f32 %v275, %v365
      %v367 = vpop.f32.mrf.mxu0
      %v368 = vadd.f32 %v277, %v367
      %369 = vmatmul.bf16.gmra.mxu0 %v307
      %v370 = vpop.f32.mrf.mxu0
      %v371 = vadd.f32 %v280, %v370
      %v372 = vpop.f32.mrf.mxu0
      %v373 = vadd.f32 %v282, %v372
      %374 = vdwg.mxu0
      %s375 = scalar_lea.vmem %s0, 32
      %v376 = vld [vmem:[%s375] sm:$0xf]
      %v377 = vld [vmem:[%s375 + $0x4] sm:$0xf]
      %v378 = vld [vmem:[%s375 + $0x8] sm:$0xf]
      %v379 = vld [vmem:[%s375 + $0xc] sm:$0x3]
      %v384 = vunpack.c.l.b16 %v376
      %v385 = vunpack.c.l.b16 %v377
      %v386 = vunpack.c.l.b16 %v378
      %v387 = vunpack.c.l.b16 %v379
      %v388 = vpack.c.b16 %v385, %v384
      %v389 = vpack.c.b16 %v387, %v386
      %390 = vrot.lane.b32.xlu0 %v198, 109
      %v391 = vpop.permute.xlu0 %390
      %392 = vrot.lane.b32.xlu0 %v199, 109
      %v393 = vpop.permute.xlu0 %392
      %394 = vrot.lane.b32.xlu0 %v200, 109
      %v395 = vpop.permute.xlu0 %394
      %vm396 = vcmask 891904
      %v397 = vsel %vm396, %v391, %v393
      %v398 = vsel %vm396, %v393, %v395
      %v400 = vsel %vm210, %v388, 0
      %v403 = vsel %vm210, %v389, 0
      %v406 = vsel %vm217, %v397, 0
      %v409 = vsel %vm217, %v398, 0
      %v412 = vsel %vm217, %v395, 0
      %414 = vmatpush.bf16.msra.mxu0 0
      %415 = vmatpush.bf16.msra.mxu0 0
      %416 = vmatpush.bf16.msra.mxu0 0
      %417 = vmatpush.bf16.msra.mxu0 0
      %418 = vmatpush.bf16.msra.mxu0 0
      %419 = vmatpush.bf16.msra.mxu0 0
      %420 = vmatpush.bf16.msra.mxu0 0
      %421 = vmatpush.bf16.msra.mxu0 %v406
      %422 = vmatmul.bf16.gmra.mxu0 %v400
      %v423 = vpop.f32.mrf.mxu0
      %v424 = vadd.f32 0.0, %v423
      %v425 = vpop.f32.mrf.mxu0
      %v426 = vadd.f32 0.0, %v425
      %427 = vmatmul.bf16.gmra.mxu0 %v403
      %v428 = vpop.f32.mrf.mxu0
      %v429 = vadd.f32 0.0, %v428
      %v430 = vpop.f32.mrf.mxu0
      %v431 = vadd.f32 0.0, %v430
      %432 = vdwg.mxu0
      %433 = vmatpush.bf16.msra.mxu0 0
      %434 = vmatpush.bf16.msra.mxu0 0
      %435 = vmatpush.bf16.msra.mxu0 0
      %436 = vmatpush.bf16.msra.mxu0 0
      %437 = vmatpush.bf16.msra.mxu0 0
      %438 = vmatpush.bf16.msra.mxu0 0
      %439 = vmatpush.bf16.msra.mxu0 0
      %440 = vmatpush.bf16.msra.mxu0 %v409
      %441 = vmatmul.bf16.gmra.mxu0 %v400
      %v442 = vpop.f32.mrf.mxu0
      %v443 = vadd.f32 0.0, %v442
      %v444 = vpop.f32.mrf.mxu0
      %v445 = vadd.f32 0.0, %v444
      %446 = vmatmul.bf16.gmra.mxu0 %v403
      %v447 = vpop.f32.mrf.mxu0
      %v448 = vadd.f32 0.0, %v447
      %v449 = vpop.f32.mrf.mxu0
      %v450 = vadd.f32 0.0, %v449
      %451 = vdwg.mxu0
      %452 = vmatpush.bf16.msra.mxu0 0
      %453 = vmatpush.bf16.msra.mxu0 0
      %454 = vmatpush.bf16.msra.mxu0 0
      %455 = vmatpush.bf16.msra.mxu0 0
      %456 = vmatpush.bf16.msra.mxu0 0
      %457 = vmatpush.bf16.msra.mxu0 0
      %458 = vmatpush.bf16.msra.mxu0 0
      %459 = vmatpush.bf16.msra.mxu0 %v412
      %460 = vmatmul.bf16.gmra.mxu0 %v400
      %v461 = vpop.f32.mrf.mxu0
      %v462 = vadd.f32 0.0, %v461
      %v463 = vpop.f32.mrf.mxu0
      %v464 = vadd.f32 0.0, %v463
      %465 = vmatmul.bf16.gmra.mxu0 %v403
      %v466 = vpop.f32.mrf.mxu0
      %v467 = vadd.f32 0.0, %v466
      %v468 = vpop.f32.mrf.mxu0
      %v469 = vadd.f32 0.0, %v468
      %470 = vdwg.mxu0
      %v471 = vadd.f32 %v328, %v424
      %v472 = vadd.f32 %v347, %v443
      %v473 = vadd.f32 %v366, %v462
      %v474 = vadd.f32 %v330, %v426
      %v475 = vadd.f32 %v349, %v445
      %v476 = vadd.f32 %v368, %v464
      %v477 = vadd.f32 %v333, %v429
      %v478 = vadd.f32 %v352, %v448
      %v479 = vadd.f32 %v371, %v467
      %v480 = vadd.f32 %v335, %v431
      %v481 = vadd.f32 %v354, %v450
      %v482 = vadd.f32 %v373, %v469
      %s483 = scalar_lea.vmem %s0, 48
      %v484 = vld [vmem:[%s483] sm:$0xf]
      %v485 = vld [vmem:[%s483 + $0x4] sm:$0xf]
      %v486 = vld [vmem:[%s483 + $0x8] sm:$0xf]
      %v487 = vld [vmem:[%s483 + $0xc] sm:$0x3]
      %v492 = vunpack.c.l.b16 %v484
      %v493 = vunpack.c.l.b16 %v485
      %v494 = vunpack.c.l.b16 %v486
      %v495 = vunpack.c.l.b16 %v487
      %v496 = vpack.c.b16 %v493, %v492
      %v497 = vpack.c.b16 %v495, %v494
      %498 = vrot.lane.b32.xlu0 %v198, 93
      %v499 = vpop.permute.xlu0 %498
      %500 = vrot.lane.b32.xlu0 %v199, 93
      %v501 = vpop.permute.xlu0 %500
      %502 = vrot.lane.b32.xlu0 %v200, 93
      %v503 = vpop.permute.xlu0 %502
      %vm504 = vcmask 760832
      %v505 = vsel %vm504, %v499, %v501
      %v506 = vsel %vm504, %v501, %v503
      %v508 = vsel %vm210, %v496, 0
      %v511 = vsel %vm210, %v497, 0
      %v514 = vsel %vm217, %v505, 0
      %v517 = vsel %vm217, %v506, 0
      %v520 = vsel %vm217, %v503, 0
      %522 = vmatpush.bf16.msra.mxu0 0
      %523 = vmatpush.bf16.msra.mxu0 0
      %524 = vmatpush.bf16.msra.mxu0 0
      %525 = vmatpush.bf16.msra.mxu0 0
      %526 = vmatpush.bf16.msra.mxu0 0
      %527 = vmatpush.bf16.msra.mxu0 0
      %528 = vmatpush.bf16.msra.mxu0 0
      %529 = vmatpush.bf16.msra.mxu0 %v514
      %530 = vmatmul.bf16.gmra.mxu0 %v508
      %v531 = vpop.f32.mrf.mxu0
      %v532 = vadd.f32 0.0, %v531
      %v533 = vpop.f32.mrf.mxu0
      %v534 = vadd.f32 0.0, %v533
      %535 = vmatmul.bf16.gmra.mxu0 %v511
      %v536 = vpop.f32.mrf.mxu0
      %v537 = vadd.f32 0.0, %v536
      %v538 = vpop.f32.mrf.mxu0
      %v539 = vadd.f32 0.0, %v538
      %540 = vdwg.mxu0
      %541 = vmatpush.bf16.msra.mxu0 0
      %542 = vmatpush.bf16.msra.mxu0 0
      %543 = vmatpush.bf16.msra.mxu0 0
      %544 = vmatpush.bf16.msra.mxu0 0
      %545 = vmatpush.bf16.msra.mxu0 0
      %546 = vmatpush.bf16.msra.mxu0 0
      %547 = vmatpush.bf16.msra.mxu0 0
      %548 = vmatpush.bf16.msra.mxu0 %v517
      %549 = vmatmul.bf16.gmra.mxu0 %v508
      %v550 = vpop.f32.mrf.mxu0
      %v551 = vadd.f32 0.0, %v550
      %v552 = vpop.f32.mrf.mxu0
      %v553 = vadd.f32 0.0, %v552
      %554 = vmatmul.bf16.gmra.mxu0 %v511
      %v555 = vpop.f32.mrf.mxu0
      %v556 = vadd.f32 0.0, %v555
      %v557 = vpop.f32.mrf.mxu0
      %v558 = vadd.f32 0.0, %v557
      %559 = vdwg.mxu0
      %560 = vmatpush.bf16.msra.mxu0 0
      %561 = vmatpush.bf16.msra.mxu0 0
      %562 = vmatpush.bf16.msra.mxu0 0
      %563 = vmatpush.bf16.msra.mxu0 0
      %564 = vmatpush.bf16.msra.mxu0 0
      %565 = vmatpush.bf16.msra.mxu0 0
      %566 = vmatpush.bf16.msra.mxu0 0
      %567 = vmatpush.bf16.msra.mxu0 %v520
      %568 = vmatmul.bf16.gmra.mxu0 %v508
      %v569 = vpop.f32.mrf.mxu0
      %v570 = vadd.f32 0.0, %v569
      %v571 = vpop.f32.mrf.mxu0
      %v572 = vadd.f32 0.0, %v571
      %573 = vmatmul.bf16.gmra.mxu0 %v511
      %v574 = vpop.f32.mrf.mxu0
      %v575 = vadd.f32 0.0, %v574
      %v576 = vpop.f32.mrf.mxu0
      %v577 = vadd.f32 0.0, %v576
      %578 = vdwg.mxu0
      %v579 = vadd.f32 %v471, %v532
      %v580 = vadd.f32 %v472, %v551
      %v581 = vadd.f32 %v473, %v570
      %v582 = vadd.f32 %v474, %v534
      %v583 = vadd.f32 %v475, %v553
      %v584 = vadd.f32 %v476, %v572
      %v585 = vadd.f32 %v477, %v537
      %v586 = vadd.f32 %v478, %v556
      %v587 = vadd.f32 %v479, %v575
      %v588 = vadd.f32 %v480, %v539
      %v589 = vadd.f32 %v481, %v558
      %v590 = vadd.f32 %v482, %v577
      %s591 = scalar_lea.vmem %s0, 64
      %v592 = vld [vmem:[%s591] sm:$0xf]
      %v593 = vld [vmem:[%s591 + $0x4] sm:$0xf]
      %v594 = vld [vmem:[%s591 + $0x8] sm:$0xf]
      %v595 = vld [vmem:[%s591 + $0xc] sm:$0x3]
      %v600 = vunpack.c.l.b16 %v592
      %v601 = vunpack.c.l.b16 %v593
      %v602 = vunpack.c.l.b16 %v594
      %v603 = vunpack.c.l.b16 %v595
      %v604 = vpack.c.b16 %v601, %v600
      %v605 = vpack.c.b16 %v603, %v602
      %606 = vrot.lane.b32.xlu0 %v198, 92
      %v607 = vpop.permute.xlu0 %606
      %608 = vrot.lane.b32.xlu0 %v199, 92
      %v609 = vpop.permute.xlu0 %608
      %610 = vrot.lane.b32.xlu0 %v200, 92
      %v611 = vpop.permute.xlu0 %610
      %vm612 = vcmask 752640
      %v613 = vsel %vm612, %v607, %v609
      %v614 = vsel %vm612, %v609, %v611
      %v616 = vsel %vm210, %v604, 0
      %v619 = vsel %vm210, %v605, 0
      %v622 = vsel %vm217, %v613, 0
      %v625 = vsel %vm217, %v614, 0
      %v628 = vsel %vm217, %v611, 0
      %630 = vmatpush.bf16.msra.mxu0 0
      %631 = vmatpush.bf16.msra.mxu0 0
      %632 = vmatpush.bf16.msra.mxu0 0
      %633 = vmatpush.bf16.msra.mxu0 0
      %634 = vmatpush.bf16.msra.mxu0 0
      %635 = vmatpush.bf16.msra.mxu0 0
      %636 = vmatpush.bf16.msra.mxu0 0
      %637 = vmatpush.bf16.msra.mxu0 %v622
      %638 = vmatmul.bf16.gmra.mxu0 %v616
      %v639 = vpop.f32.mrf.mxu0
      %v640 = vadd.f32 0.0, %v639
      %v641 = vpop.f32.mrf.mxu0
      %v642 = vadd.f32 0.0, %v641
      %643 = vmatmul.bf16.gmra.mxu0 %v619
      %v644 = vpop.f32.mrf.mxu0
      %v645 = vadd.f32 0.0, %v644
      %v646 = vpop.f32.mrf.mxu0
      %v647 = vadd.f32 0.0, %v646
      %648 = vdwg.mxu0
      %649 = vmatpush.bf16.msra.mxu0 0
      %650 = vmatpush.bf16.msra.mxu0 0
      %651 = vmatpush.bf16.msra.mxu0 0
      %652 = vmatpush.bf16.msra.mxu0 0
      %653 = vmatpush.bf16.msra.mxu0 0
      %654 = vmatpush.bf16.msra.mxu0 0
      %655 = vmatpush.bf16.msra.mxu0 0
      %656 = vmatpush.bf16.msra.mxu0 %v625
      %657 = vmatmul.bf16.gmra.mxu0 %v616
      %v658 = vpop.f32.mrf.mxu0
      %v659 = vadd.f32 0.0, %v658
      %v660 = vpop.f32.mrf.mxu0
      %v661 = vadd.f32 0.0, %v660
      %662 = vmatmul.bf16.gmra.mxu0 %v619
      %v663 = vpop.f32.mrf.mxu0
      %v664 = vadd.f32 0.0, %v663
      %v665 = vpop.f32.mrf.mxu0
      %v666 = vadd.f32 0.0, %v665
      %667 = vdwg.mxu0
      %668 = vmatpush.bf16.msra.mxu0 0
      %669 = vmatpush.bf16.msra.mxu0 0
      %670 = vmatpush.bf16.msra.mxu0 0
      %671 = vmatpush.bf16.msra.mxu0 0
      %672 = vmatpush.bf16.msra.mxu0 0
      %673 = vmatpush.bf16.msra.mxu0 0
      %674 = vmatpush.bf16.msra.mxu0 0
      %675 = vmatpush.bf16.msra.mxu0 %v628
      %676 = vmatmul.bf16.gmra.mxu0 %v616
      %v677 = vpop.f32.mrf.mxu0
      %v678 = vadd.f32 0.0, %v677
      %v679 = vpop.f32.mrf.mxu0
      %v680 = vadd.f32 0.0, %v679
      %681 = vmatmul.bf16.gmra.mxu0 %v619
      %v682 = vpop.f32.mrf.mxu0
      %v683 = vadd.f32 0.0, %v682
      %v684 = vpop.f32.mrf.mxu0
      %v685 = vadd.f32 0.0, %v684
      %686 = vdwg.mxu0
      %v687 = vadd.f32 %v579, %v640
      %v688 = vadd.f32 %v580, %v659
      %v689 = vadd.f32 %v581, %v678
      %v690 = vadd.f32 %v582, %v642
      %v691 = vadd.f32 %v583, %v661
      %v692 = vadd.f32 %v584, %v680
      %v693 = vadd.f32 %v585, %v645
      %v694 = vadd.f32 %v586, %v664
      %v695 = vadd.f32 %v587, %v683
      %v696 = vadd.f32 %v588, %v647
      %v697 = vadd.f32 %v589, %v666
      %v698 = vadd.f32 %v590, %v685
      %s699 = scalar_lea.vmem %s0, 80
      %v700 = vld [vmem:[%s699] sm:$0xf]
      %v701 = vld [vmem:[%s699 + $0x4] sm:$0xf]
      %v702 = vld [vmem:[%s699 + $0x8] sm:$0xf]
      %v703 = vld [vmem:[%s699 + $0xc] sm:$0x3]
      %v708 = vunpack.c.l.b16 %v700
      %v709 = vunpack.c.l.b16 %v701
      %v710 = vunpack.c.l.b16 %v702
      %v711 = vunpack.c.l.b16 %v703
      %v712 = vpack.c.b16 %v709, %v708
      %v713 = vpack.c.b16 %v711, %v710
      %714 = vrot.lane.b32.xlu0 %v198, 91
      %v715 = vpop.permute.xlu0 %714
      %716 = vrot.lane.b32.xlu0 %v199, 91
      %v717 = vpop.permute.xlu0 %716
      %718 = vrot.lane.b32.xlu0 %v200, 91
      %v719 = vpop.permute.xlu0 %718
      %vm720 = vcmask 744448
      %v721 = vsel %vm720, %v715, %v717
      %v722 = vsel %vm720, %v717, %v719
      %v724 = vsel %vm210, %v712, 0
      %v727 = vsel %vm210, %v713, 0
      %v730 = vsel %vm217, %v721, 0
      %v733 = vsel %vm217, %v722, 0
      %v736 = vsel %vm217, %v719, 0
      %738 = vmatpush.bf16.msra.mxu0 0
      %739 = vmatpush.bf16.msra.mxu0 0
      %740 = vmatpush.bf16.msra.mxu0 0
      %741 = vmatpush.bf16.msra.mxu0 0
      %742 = vmatpush.bf16.msra.mxu0 0
      %743 = vmatpush.bf16.msra.mxu0 0
      %744 = vmatpush.bf16.msra.mxu0 0
      %745 = vmatpush.bf16.msra.mxu0 %v730
      %746 = vmatmul.bf16.gmra.mxu0 %v724
      %v747 = vpop.f32.mrf.mxu0
      %v748 = vadd.f32 0.0, %v747
      %v749 = vpop.f32.mrf.mxu0
      %v750 = vadd.f32 0.0, %v749
      %751 = vmatmul.bf16.gmra.mxu0 %v727
      %v752 = vpop.f32.mrf.mxu0
      %v753 = vadd.f32 0.0, %v752
      %v754 = vpop.f32.mrf.mxu0
      %v755 = vadd.f32 0.0, %v754
      %756 = vdwg.mxu0
      %757 = vmatpush.bf16.msra.mxu0 0
      %758 = vmatpush.bf16.msra.mxu0 0
      %759 = vmatpush.bf16.msra.mxu0 0
      %760 = vmatpush.bf16.msra.mxu0 0
      %761 = vmatpush.bf16.msra.mxu0 0
      %762 = vmatpush.bf16.msra.mxu0 0
      %763 = vmatpush.bf16.msra.mxu0 0
      %764 = vmatpush.bf16.msra.mxu0 %v733
      %765 = vmatmul.bf16.gmra.mxu0 %v724
      %v766 = vpop.f32.mrf.mxu0
      %v767 = vadd.f32 0.0, %v766
      %v768 = vpop.f32.mrf.mxu0
      %v769 = vadd.f32 0.0, %v768
      %770 = vmatmul.bf16.gmra.mxu0 %v727
      %v771 = vpop.f32.mrf.mxu0
      %v772 = vadd.f32 0.0, %v771
      %v773 = vpop.f32.mrf.mxu0
      %v774 = vadd.f32 0.0, %v773
      %775 = vdwg.mxu0
      %776 = vmatpush.bf16.msra.mxu0 0
      %777 = vmatpush.bf16.msra.mxu0 0
      %778 = vmatpush.bf16.msra.mxu0 0
      %779 = vmatpush.bf16.msra.mxu0 0
      %780 = vmatpush.bf16.msra.mxu0 0
      %781 = vmatpush.bf16.msra.mxu0 0
      %782 = vmatpush.bf16.msra.mxu0 0
      %783 = vmatpush.bf16.msra.mxu0 %v736
      %784 = vmatmul.bf16.gmra.mxu0 %v724
      %v785 = vpop.f32.mrf.mxu0
      %v786 = vadd.f32 0.0, %v785
      %v787 = vpop.f32.mrf.mxu0
      %v788 = vadd.f32 0.0, %v787
      %789 = vmatmul.bf16.gmra.mxu0 %v727
      %v790 = vpop.f32.mrf.mxu0
      %v791 = vadd.f32 0.0, %v790
      %v792 = vpop.f32.mrf.mxu0
      %v793 = vadd.f32 0.0, %v792
      %794 = vdwg.mxu0
      %v795 = vadd.f32 %v687, %v748
      %v796 = vadd.f32 %v688, %v767
      %v797 = vadd.f32 %v689, %v786
      %v798 = vadd.f32 %v690, %v750
      %v799 = vadd.f32 %v691, %v769
      %v800 = vadd.f32 %v692, %v788
      %v801 = vadd.f32 %v693, %v753
      %v802 = vadd.f32 %v694, %v772
      %v803 = vadd.f32 %v695, %v791
      %v804 = vadd.f32 %v696, %v755
      %v805 = vadd.f32 %v697, %v774
      %v806 = vadd.f32 %v698, %v793
      %s807 = scalar_lea.vmem %s0, 96
      %v808 = vld [vmem:[%s807] sm:$0xf]
      %v809 = vld [vmem:[%s807 + $0x4] sm:$0xf]
      %v810 = vld [vmem:[%s807 + $0x8] sm:$0xf]
      %v811 = vld [vmem:[%s807 + $0xc] sm:$0x3]
      %v816 = vunpack.c.l.b16 %v808
      %v817 = vunpack.c.l.b16 %v809
      %v818 = vunpack.c.l.b16 %v810
      %v819 = vunpack.c.l.b16 %v811
      %v820 = vpack.c.b16 %v817, %v816
      %v821 = vpack.c.b16 %v819, %v818
      %822 = vrot.lane.b32.xlu0 %v198, 75
      %v823 = vpop.permute.xlu0 %822
      %824 = vrot.lane.b32.xlu0 %v199, 75
      %v825 = vpop.permute.xlu0 %824
      %826 = vrot.lane.b32.xlu0 %v200, 75
      %v827 = vpop.permute.xlu0 %826
      %vm828 = vcmask 613376
      %v829 = vsel %vm828, %v823, %v825
      %v830 = vsel %vm828, %v825, %v827
      %v832 = vsel %vm210, %v820, 0
      %v835 = vsel %vm210, %v821, 0
      %v838 = vsel %vm217, %v829, 0
      %v841 = vsel %vm217, %v830, 0
      %v844 = vsel %vm217, %v827, 0
      %846 = vmatpush.bf16.msra.mxu0 0
      %847 = vmatpush.bf16.msra.mxu0 0
      %848 = vmatpush.bf16.msra.mxu0 0
      %849 = vmatpush.bf16.msra.mxu0 0
      %850 = vmatpush.bf16.msra.mxu0 0
      %851 = vmatpush.bf16.msra.mxu0 0
      %852 = vmatpush.bf16.msra.mxu0 0
      %853 = vmatpush.bf16.msra.mxu0 %v838
      %854 = vmatmul.bf16.gmra.mxu0 %v832
      %v855 = vpop.f32.mrf.mxu0
      %v856 = vadd.f32 0.0, %v855
      %v857 = vpop.f32.mrf.mxu0
      %v858 = vadd.f32 0.0, %v857
      %859 = vmatmul.bf16.gmra.mxu0 %v835
      %v860 = vpop.f32.mrf.mxu0
      %v861 = vadd.f32 0.0, %v860
      %v862 = vpop.f32.mrf.mxu0
      %v863 = vadd.f32 0.0, %v862
      %864 = vdwg.mxu0
      %865 = vmatpush.bf16.msra.mxu0 0
      %866 = vmatpush.bf16.msra.mxu0 0
      %867 = vmatpush.bf16.msra.mxu0 0
      %868 = vmatpush.bf16.msra.mxu0 0
      %869 = vmatpush.bf16.msra.mxu0 0
      %870 = vmatpush.bf16.msra.mxu0 0
      %871 = vmatpush.bf16.msra.mxu0 0
      %872 = vmatpush.bf16.msra.mxu0 %v841
      %873 = vmatmul.bf16.gmra.mxu0 %v832
      %v874 = vpop.f32.mrf.mxu0
      %v875 = vadd.f32 0.0, %v874
      %v876 = vpop.f32.mrf.mxu0
      %v877 = vadd.f32 0.0, %v876
      %878 = vmatmul.bf16.gmra.mxu0 %v835
      %v879 = vpop.f32.mrf.mxu0
      %v880 = vadd.f32 0.0, %v879
      %v881 = vpop.f32.mrf.mxu0
      %v882 = vadd.f32 0.0, %v881
      %883 = vdwg.mxu0
      %884 = vmatpush.bf16.msra.mxu0 0
      %885 = vmatpush.bf16.msra.mxu0 0
      %886 = vmatpush.bf16.msra.mxu0 0
      %887 = vmatpush.bf16.msra.mxu0 0
      %888 = vmatpush.bf16.msra.mxu0 0
      %889 = vmatpush.bf16.msra.mxu0 0
      %890 = vmatpush.bf16.msra.mxu0 0
      %891 = vmatpush.bf16.msra.mxu0 %v844
      %892 = vmatmul.bf16.gmra.mxu0 %v832
      %v893 = vpop.f32.mrf.mxu0
      %v894 = vadd.f32 0.0, %v893
      %v895 = vpop.f32.mrf.mxu0
      %v896 = vadd.f32 0.0, %v895
      %897 = vmatmul.bf16.gmra.mxu0 %v835
      %v898 = vpop.f32.mrf.mxu0
      %v899 = vadd.f32 0.0, %v898
      %v900 = vpop.f32.mrf.mxu0
      %v901 = vadd.f32 0.0, %v900
      %902 = vdwg.mxu0
      %v903 = vadd.f32 %v795, %v856
      %v904 = vadd.f32 %v796, %v875
      %v905 = vadd.f32 %v797, %v894
      %v906 = vadd.f32 %v798, %v858
      %v907 = vadd.f32 %v799, %v877
      %v908 = vadd.f32 %v800, %v896
      %v909 = vadd.f32 %v801, %v861
      %v910 = vadd.f32 %v802, %v880
      %v911 = vadd.f32 %v803, %v899
      %v912 = vadd.f32 %v804, %v863
      %v913 = vadd.f32 %v805, %v882
      %v914 = vadd.f32 %v806, %v901
      %s915 = scalar_lea.vmem %s0, 112
      %v916 = vld [vmem:[%s915] sm:$0xf]
      %v917 = vld [vmem:[%s915 + $0x4] sm:$0xf]
      %v918 = vld [vmem:[%s915 + $0x8] sm:$0xf]
      %v919 = vld [vmem:[%s915 + $0xc] sm:$0x3]
      %v924 = vunpack.c.l.b16 %v916
      %v925 = vunpack.c.l.b16 %v917
      %v926 = vunpack.c.l.b16 %v918
      %v927 = vunpack.c.l.b16 %v919
      %v928 = vpack.c.b16 %v925, %v924
      %v929 = vpack.c.b16 %v927, %v926
      %930 = vrot.lane.b32.xlu0 %v198, 74
      %v931 = vpop.permute.xlu0 %930
      %932 = vrot.lane.b32.xlu0 %v199, 74
      %v933 = vpop.permute.xlu0 %932
      %934 = vrot.lane.b32.xlu0 %v200, 74
      %v935 = vpop.permute.xlu0 %934
      %vm936 = vcmask 605184
      %v937 = vsel %vm936, %v931, %v933
      %v938 = vsel %vm936, %v933, %v935
      %v940 = vsel %vm210, %v928, 0
      %v943 = vsel %vm210, %v929, 0
      %v946 = vsel %vm217, %v937, 0
      %v949 = vsel %vm217, %v938, 0
      %v952 = vsel %vm217, %v935, 0
      %954 = vmatpush.bf16.msra.mxu0 0
      %955 = vmatpush.bf16.msra.mxu0 0
      %956 = vmatpush.bf16.msra.mxu0 0
      %957 = vmatpush.bf16.msra.mxu0 0
      %958 = vmatpush.bf16.msra.mxu0 0
      %959 = vmatpush.bf16.msra.mxu0 0
      %960 = vmatpush.bf16.msra.mxu0 0
      %961 = vmatpush.bf16.msra.mxu0 %v946
      %962 = vmatmul.bf16.gmra.mxu0 %v940
      %v963 = vpop.f32.mrf.mxu0
      %v964 = vadd.f32 0.0, %v963
      %v965 = vpop.f32.mrf.mxu0
      %v966 = vadd.f32 0.0, %v965
      %967 = vmatmul.bf16.gmra.mxu0 %v943
      %v968 = vpop.f32.mrf.mxu0
      %v969 = vadd.f32 0.0, %v968
      %v970 = vpop.f32.mrf.mxu0
      %v971 = vadd.f32 0.0, %v970
      %972 = vdwg.mxu0
      %973 = vmatpush.bf16.msra.mxu0 0
      %974 = vmatpush.bf16.msra.mxu0 0
      %975 = vmatpush.bf16.msra.mxu0 0
      %976 = vmatpush.bf16.msra.mxu0 0
      %977 = vmatpush.bf16.msra.mxu0 0
      %978 = vmatpush.bf16.msra.mxu0 0
      %979 = vmatpush.bf16.msra.mxu0 0
      %980 = vmatpush.bf16.msra.mxu0 %v949
      %981 = vmatmul.bf16.gmra.mxu0 %v940
      %v982 = vpop.f32.mrf.mxu0
      %v983 = vadd.f32 0.0, %v982
      %v984 = vpop.f32.mrf.mxu0
      %v985 = vadd.f32 0.0, %v984
      %986 = vmatmul.bf16.gmra.mxu0 %v943
      %v987 = vpop.f32.mrf.mxu0
      %v988 = vadd.f32 0.0, %v987
      %v989 = vpop.f32.mrf.mxu0
      %v990 = vadd.f32 0.0, %v989
      %991 = vdwg.mxu0
      %992 = vmatpush.bf16.msra.mxu0 0
      %993 = vmatpush.bf16.msra.mxu0 0
      %994 = vmatpush.bf16.msra.mxu0 0
      %995 = vmatpush.bf16.msra.mxu0 0
      %996 = vmatpush.bf16.msra.mxu0 0
      %997 = vmatpush.bf16.msra.mxu0 0
      %998 = vmatpush.bf16.msra.mxu0 0
      %999 = vmatpush.bf16.msra.mxu0 %v952
      %1000 = vmatmul.bf16.gmra.mxu0 %v940
      %v1001 = vpop.f32.mrf.mxu0
      %v1002 = vadd.f32 0.0, %v1001
      %v1003 = vpop.f32.mrf.mxu0
      %v1004 = vadd.f32 0.0, %v1003
      %1005 = vmatmul.bf16.gmra.mxu0 %v943
      %v1006 = vpop.f32.mrf.mxu0
      %v1007 = vadd.f32 0.0, %v1006
      %v1008 = vpop.f32.mrf.mxu0
      %v1009 = vadd.f32 0.0, %v1008
      %1010 = vdwg.mxu0
      %v1011 = vadd.f32 %v903, %v964
      %v1012 = vadd.f32 %v904, %v983
      %v1013 = vadd.f32 %v905, %v1002
      %v1014 = vadd.f32 %v906, %v966
      %v1015 = vadd.f32 %v907, %v985
      %v1016 = vadd.f32 %v908, %v1004
      %v1017 = vadd.f32 %v909, %v969
      %v1018 = vadd.f32 %v910, %v988
      %v1019 = vadd.f32 %v911, %v1007
      %v1020 = vadd.f32 %v912, %v971
      %v1021 = vadd.f32 %v913, %v990
      %v1022 = vadd.f32 %v914, %v1009
      %s1023 = scalar_lea.vmem %s0, 128
      %v1024 = vld [vmem:[%s1023] sm:$0xf]
      %v1025 = vld [vmem:[%s1023 + $0x4] sm:$0xf]
      %v1026 = vld [vmem:[%s1023 + $0x8] sm:$0xf]
      %v1027 = vld [vmem:[%s1023 + $0xc] sm:$0x3]
      %v1032 = vunpack.c.l.b16 %v1024
      %v1033 = vunpack.c.l.b16 %v1025
      %v1034 = vunpack.c.l.b16 %v1026
      %v1035 = vunpack.c.l.b16 %v1027
      %v1036 = vpack.c.b16 %v1033, %v1032
      %v1037 = vpack.c.b16 %v1035, %v1034
      %1038 = vrot.lane.b32.xlu0 %v198, 73
      %v1039 = vpop.permute.xlu0 %1038
      %1040 = vrot.lane.b32.xlu0 %v199, 73
      %v1041 = vpop.permute.xlu0 %1040
      %1042 = vrot.lane.b32.xlu0 %v200, 73
      %v1043 = vpop.permute.xlu0 %1042
      %vm1044 = vcmask 596992
      %v1045 = vsel %vm1044, %v1039, %v1041
      %v1046 = vsel %vm1044, %v1041, %v1043
      %v1048 = vsel %vm210, %v1036, 0
      %v1051 = vsel %vm210, %v1037, 0
      %v1054 = vsel %vm217, %v1045, 0
      %v1057 = vsel %vm217, %v1046, 0
      %v1060 = vsel %vm217, %v1043, 0
      %1062 = vmatpush.bf16.msra.mxu0 0
      %1063 = vmatpush.bf16.msra.mxu0 0
      %1064 = vmatpush.bf16.msra.mxu0 0
      %1065 = vmatpush.bf16.msra.mxu0 0
      %1066 = vmatpush.bf16.msra.mxu0 0
      %1067 = vmatpush.bf16.msra.mxu0 0
      %1068 = vmatpush.bf16.msra.mxu0 0
      %1069 = vmatpush.bf16.msra.mxu0 %v1054
      %1070 = vmatmul.bf16.gmra.mxu0 %v1048
      %v1071 = vpop.f32.mrf.mxu0
      %v1072 = vadd.f32 0.0, %v1071
      %v1073 = vpop.f32.mrf.mxu0
      %v1074 = vadd.f32 0.0, %v1073
      %1075 = vmatmul.bf16.gmra.mxu0 %v1051
      %v1076 = vpop.f32.mrf.mxu0
      %v1077 = vadd.f32 0.0, %v1076
      %v1078 = vpop.f32.mrf.mxu0
      %v1079 = vadd.f32 0.0, %v1078
      %1080 = vdwg.mxu0
      %1081 = vmatpush.bf16.msra.mxu0 0
      %1082 = vmatpush.bf16.msra.mxu0 0
      %1083 = vmatpush.bf16.msra.mxu0 0
      %1084 = vmatpush.bf16.msra.mxu0 0
      %1085 = vmatpush.bf16.msra.mxu0 0
      %1086 = vmatpush.bf16.msra.mxu0 0
      %1087 = vmatpush.bf16.msra.mxu0 0
      %1088 = vmatpush.bf16.msra.mxu0 %v1057
      %1089 = vmatmul.bf16.gmra.mxu0 %v1048
      %v1090 = vpop.f32.mrf.mxu0
      %v1091 = vadd.f32 0.0, %v1090
      %v1092 = vpop.f32.mrf.mxu0
      %v1093 = vadd.f32 0.0, %v1092
      %1094 = vmatmul.bf16.gmra.mxu0 %v1051
      %v1095 = vpop.f32.mrf.mxu0
      %v1096 = vadd.f32 0.0, %v1095
      %v1097 = vpop.f32.mrf.mxu0
      %v1098 = vadd.f32 0.0, %v1097
      %1099 = vdwg.mxu0
      %1100 = vmatpush.bf16.msra.mxu0 0
      %1101 = vmatpush.bf16.msra.mxu0 0
      %1102 = vmatpush.bf16.msra.mxu0 0
      %1103 = vmatpush.bf16.msra.mxu0 0
      %1104 = vmatpush.bf16.msra.mxu0 0
      %1105 = vmatpush.bf16.msra.mxu0 0
      %1106 = vmatpush.bf16.msra.mxu0 0
      %1107 = vmatpush.bf16.msra.mxu0 %v1060
      %1108 = vmatmul.bf16.gmra.mxu0 %v1048
      %v1109 = vpop.f32.mrf.mxu0
      %v1110 = vadd.f32 0.0, %v1109
      %v1111 = vpop.f32.mrf.mxu0
      %v1112 = vadd.f32 0.0, %v1111
      %1113 = vmatmul.bf16.gmra.mxu0 %v1051
      %v1114 = vpop.f32.mrf.mxu0
      %v1115 = vadd.f32 0.0, %v1114
      %v1116 = vpop.f32.mrf.mxu0
      %v1117 = vadd.f32 0.0, %v1116
      %1118 = vdwg.mxu0
      %v1119 = vadd.f32 %v1011, %v1072
      %v1120 = vadd.f32 %v1012, %v1091
      %v1121 = vadd.f32 %v1013, %v1110
      %v1122 = vadd.f32 %v1014, %v1074
      %v1123 = vadd.f32 %v1015, %v1093
      %v1124 = vadd.f32 %v1016, %v1112
      %v1125 = vadd.f32 %v1017, %v1077
      %v1126 = vadd.f32 %v1018, %v1096
      %v1127 = vadd.f32 %v1019, %v1115
      %v1128 = vadd.f32 %v1020, %v1079
      %v1129 = vadd.f32 %v1021, %v1098
      %v1130 = vadd.f32 %v1022, %v1117
      %v1131 = vld [vmem:[%s1] sm:$0xff]
      %v1132 = vld [vmem:[%s1 + $0x8] sm:$0xff]
      %v1133 = vld [vmem:[%s1 + $0x10] sm:$0xff]
      %v1134 = vld [vmem:[%s1 + $0x18] sm:$0x7]
      %1136 = vset.pattern.permute.xlu0 0
      %1137 = vperm.xlu0 %1136, %v1131
      %v1138 = vpop.permute.xlu0 %1137
      %1141 = vset.pattern.permute.xlu0 0
      %1142 = vperm.xlu0 %1141, %v1132
      %v1143 = vpop.permute.xlu0 %1142
      %1146 = vset.pattern.permute.xlu0 0
      %1147 = vperm.xlu0 %1146, %v1133
      %v1148 = vpop.permute.xlu0 %1147
      %1151 = vset.pattern.permute.xlu0 0
      %1152 = vperm.xlu0 %1151, %v1134
      %v1153 = vpop.permute.xlu0 %1152
      %v1155 = vadd.f32 %v1119, %v1138
      %v1156 = vadd.f32 %v1120, %v1138
      %v1157 = vadd.f32 %v1121, %v1138
      %v1158 = vadd.f32 %v1122, %v1143
      %v1159 = vadd.f32 %v1123, %v1143
      %v1160 = vadd.f32 %v1124, %v1143
      %v1161 = vadd.f32 %v1125, %v1148
      %v1162 = vadd.f32 %v1126, %v1148
      %v1163 = vadd.f32 %v1127, %v1148
      %v1164 = vadd.f32 %v1128, %v1153
      %v1165 = vadd.f32 %v1129, %v1153
      %v1166 = vadd.f32 %v1130, %v1153
      %v1167 = vlaneseq
      %v1168 = vshrl.u32 %v1167, 7
      %v1169 = vadd.s32 %v1168, 8
      %v1170 = vadd.s32 %v1168, 16
      %v1171 = vadd.s32 %v1168, 24
      %vm1172 = vcmp.ge.s32.totalorder %v1168, 18
      %vm1173 = vcmp.ge.s32.totalorder %v1169, 18
      %vm1174 = vcmp.ge.s32.totalorder %v1170, 18
      %vm1175 = vcmp.ge.s32.totalorder %v1171, 18
      %v1176 = vxor.u32 %v1155, 2147483648
      %v1177 = vxor.u32 %v1156, 2147483648
      %v1178 = vxor.u32 %v1157, 2147483648
      %v1179 = vxor.u32 %v1158, 2147483648
      %v1180 = vxor.u32 %v1159, 2147483648
      %v1181 = vxor.u32 %v1160, 2147483648
      %v1182 = vxor.u32 %v1161, 2147483648
      %v1183 = vxor.u32 %v1162, 2147483648
      %v1184 = vxor.u32 %v1163, 2147483648
      %v1185 = vxor.u32 %v1164, 2147483648
      %v1186 = vxor.u32 %v1165, 2147483648
      %v1187 = vxor.u32 %v1166, 2147483648
      %v1188 = vmul.f32 %v1176, 1.442695
      %v1189 = vpow.pop %v1188
      %v1190 = vmul.f32 %v1177, 1.442695
      %v1191 = vpow.pop %v1190
      %v1192 = vmul.f32 %v1178, 1.442695
      %v1193 = vpow.pop %v1192
      %v1194 = vmul.f32 %v1179, 1.442695
      %v1195 = vpow.pop %v1194
      %v1196 = vmul.f32 %v1180, 1.442695
      %v1197 = vpow.pop %v1196
      %v1198 = vmul.f32 %v1181, 1.442695
      %v1199 = vpow.pop %v1198
      %v1200 = vmul.f32 %v1182, 1.442695
      %v1201 = vpow.pop %v1200
      %v1202 = vmul.f32 %v1183, 1.442695
      %v1203 = vpow.pop %v1202
      %v1204 = vmul.f32 %v1184, 1.442695
      %v1205 = vpow.pop %v1204
      %v1206 = vmul.f32 %v1185, 1.442695
      %v1207 = vpow.pop %v1206
      %v1208 = vmul.f32 %v1186, 1.442695
      %v1209 = vpow.pop %v1208
      %v1210 = vmul.f32 %v1187, 1.442695
      %v1211 = vpow.pop %v1210
      %v1212 = vadd.f32 %v1189, 1.0
      %v1213 = vadd.f32 %v1191, 1.0
      %v1214 = vadd.f32 %v1193, 1.0
      %v1215 = vadd.f32 %v1195, 1.0
      %v1216 = vadd.f32 %v1197, 1.0
      %v1217 = vadd.f32 %v1199, 1.0
      %v1218 = vadd.f32 %v1201, 1.0
      %v1219 = vadd.f32 %v1203, 1.0
      %v1220 = vadd.f32 %v1205, 1.0
      %v1221 = vadd.f32 %v1207, 1.0
      %v1222 = vadd.f32 %v1209, 1.0
      %v1223 = vadd.f32 %v1211, 1.0
      %v1224 = vrcp.pop %v1212
      %v1225 = vmul.f32 %v1212, %v1224
      %v1226 = vsub.f32 1.0, %v1225
      %v1227 = vmul.f32 %v1224, %v1226
      %v1228 = vadd.f32 %v1224, %v1227
      %vm1229 = vweird.f32 %v1212
      %vm1230 = vweird.f32 %v1224
      %vm1231 = vmor %vm1229, %vm1230
      %v1232 = vsel %vm1231, %v1224, %v1228
      %v1233 = vand.u32 2147483647, %v1212
      %vm1234 = vcmp.eq.f32.partialorder %v1233, 8.507059e+37
      %v1235 = vand.u32 %v1212, 2147483648
      %v1236 = vor.u32 1.1754944e-38, %v1235
      %v1237 = vsel %vm1234, %v1236, %v1232
      %v1238 = vmul.f32 1.0, %v1237
      %v1239 = vrcp.pop %v1213
      %v1240 = vmul.f32 %v1213, %v1239
      %v1241 = vsub.f32 1.0, %v1240
      %v1242 = vmul.f32 %v1239, %v1241
      %v1243 = vadd.f32 %v1239, %v1242
      %vm1244 = vweird.f32 %v1213
      %vm1245 = vweird.f32 %v1239
      %vm1246 = vmor %vm1244, %vm1245
      %v1247 = vsel %vm1246, %v1239, %v1243
      %v1248 = vand.u32 2147483647, %v1213
      %vm1249 = vcmp.eq.f32.partialorder %v1248, 8.507059e+37
      %v1250 = vand.u32 %v1213, 2147483648
      %v1251 = vor.u32 1.1754944e-38, %v1250
      %v1252 = vsel %vm1249, %v1251, %v1247
      %v1253 = vmul.f32 1.0, %v1252
      %v1254 = vrcp.pop %v1214
      %v1255 = vmul.f32 %v1214, %v1254
      %v1256 = vsub.f32 1.0, %v1255
      %v1257 = vmul.f32 %v1254, %v1256
      %v1258 = vadd.f32 %v1254, %v1257
      %vm1259 = vweird.f32 %v1214
      %vm1260 = vweird.f32 %v1254
      %vm1261 = vmor %vm1259, %vm1260
      %v1262 = vsel %vm1261, %v1254, %v1258
      %v1263 = vand.u32 2147483647, %v1214
      %vm1264 = vcmp.eq.f32.partialorder %v1263, 8.507059e+37
      %v1265 = vand.u32 %v1214, 2147483648
      %v1266 = vor.u32 1.1754944e-38, %v1265
      %v1267 = vsel %vm1264, %v1266, %v1262
      %v1268 = vmul.f32 1.0, %v1267
      %v1269 = vrcp.pop %v1215
      %v1270 = vmul.f32 %v1215, %v1269
      %v1271 = vsub.f32 1.0, %v1270
      %v1272 = vmul.f32 %v1269, %v1271
      %v1273 = vadd.f32 %v1269, %v1272
      %vm1274 = vweird.f32 %v1215
      %vm1275 = vweird.f32 %v1269
      %vm1276 = vmor %vm1274, %vm1275
      %v1277 = vsel %vm1276, %v1269, %v1273
      %v1278 = vand.u32 2147483647, %v1215
      %vm1279 = vcmp.eq.f32.partialorder %v1278, 8.507059e+37
      %v1280 = vand.u32 %v1215, 2147483648
      %v1281 = vor.u32 1.1754944e-38, %v1280
      %v1282 = vsel %vm1279, %v1281, %v1277
      %v1283 = vmul.f32 1.0, %v1282
      %v1284 = vrcp.pop %v1216
      %v1285 = vmul.f32 %v1216, %v1284
      %v1286 = vsub.f32 1.0, %v1285
      %v1287 = vmul.f32 %v1284, %v1286
      %v1288 = vadd.f32 %v1284, %v1287
      %vm1289 = vweird.f32 %v1216
      %vm1290 = vweird.f32 %v1284
      %vm1291 = vmor %vm1289, %vm1290
      %v1292 = vsel %vm1291, %v1284, %v1288
      %v1293 = vand.u32 2147483647, %v1216
      %vm1294 = vcmp.eq.f32.partialorder %v1293, 8.507059e+37
      %v1295 = vand.u32 %v1216, 2147483648
      %v1296 = vor.u32 1.1754944e-38, %v1295
      %v1297 = vsel %vm1294, %v1296, %v1292
      %v1298 = vmul.f32 1.0, %v1297
      %v1299 = vrcp.pop %v1217
      %v1300 = vmul.f32 %v1217, %v1299
      %v1301 = vsub.f32 1.0, %v1300
      %v1302 = vmul.f32 %v1299, %v1301
      %v1303 = vadd.f32 %v1299, %v1302
      %vm1304 = vweird.f32 %v1217
      %vm1305 = vweird.f32 %v1299
      %vm1306 = vmor %vm1304, %vm1305
      %v1307 = vsel %vm1306, %v1299, %v1303
      %v1308 = vand.u32 2147483647, %v1217
      %vm1309 = vcmp.eq.f32.partialorder %v1308, 8.507059e+37
      %v1310 = vand.u32 %v1217, 2147483648
      %v1311 = vor.u32 1.1754944e-38, %v1310
      %v1312 = vsel %vm1309, %v1311, %v1307
      %v1313 = vmul.f32 1.0, %v1312
      %v1314 = vrcp.pop %v1218
      %v1315 = vmul.f32 %v1218, %v1314
      %v1316 = vsub.f32 1.0, %v1315
      %v1317 = vmul.f32 %v1314, %v1316
      %v1318 = vadd.f32 %v1314, %v1317
      %vm1319 = vweird.f32 %v1218
      %vm1320 = vweird.f32 %v1314
      %vm1321 = vmor %vm1319, %vm1320
      %v1322 = vsel %vm1321, %v1314, %v1318
      %v1323 = vand.u32 2147483647, %v1218
      %vm1324 = vcmp.eq.f32.partialorder %v1323, 8.507059e+37
      %v1325 = vand.u32 %v1218, 2147483648
      %v1326 = vor.u32 1.1754944e-38, %v1325
      %v1327 = vsel %vm1324, %v1326, %v1322
      %v1328 = vmul.f32 1.0, %v1327
      %v1329 = vrcp.pop %v1219
      %v1330 = vmul.f32 %v1219, %v1329
      %v1331 = vsub.f32 1.0, %v1330
      %v1332 = vmul.f32 %v1329, %v1331
      %v1333 = vadd.f32 %v1329, %v1332
      %vm1334 = vweird.f32 %v1219
      %vm1335 = vweird.f32 %v1329
      %vm1336 = vmor %vm1334, %vm1335
      %v1337 = vsel %vm1336, %v1329, %v1333
      %v1338 = vand.u32 2147483647, %v1219
      %vm1339 = vcmp.eq.f32.partialorder %v1338, 8.507059e+37
      %v1340 = vand.u32 %v1219, 2147483648
      %v1341 = vor.u32 1.1754944e-38, %v1340
      %v1342 = vsel %vm1339, %v1341, %v1337
      %v1343 = vmul.f32 1.0, %v1342
      %v1344 = vrcp.pop %v1220
      %v1345 = vmul.f32 %v1220, %v1344
      %v1346 = vsub.f32 1.0, %v1345
      %v1347 = vmul.f32 %v1344, %v1346
      %v1348 = vadd.f32 %v1344, %v1347
      %vm1349 = vweird.f32 %v1220
      %vm1350 = vweird.f32 %v1344
      %vm1351 = vmor %vm1349, %vm1350
      %v1352 = vsel %vm1351, %v1344, %v1348
      %v1353 = vand.u32 2147483647, %v1220
      %vm1354 = vcmp.eq.f32.partialorder %v1353, 8.507059e+37
      %v1355 = vand.u32 %v1220, 2147483648
      %v1356 = vor.u32 1.1754944e-38, %v1355
      %v1357 = vsel %vm1354, %v1356, %v1352
      %v1358 = vmul.f32 1.0, %v1357
      %v1359 = vrcp.pop %v1221
      %v1360 = vmul.f32 %v1221, %v1359
      %v1361 = vsub.f32 1.0, %v1360
      %v1362 = vmul.f32 %v1359, %v1361
      %v1363 = vadd.f32 %v1359, %v1362
      %vm1364 = vweird.f32 %v1221
      %vm1365 = vweird.f32 %v1359
      %vm1366 = vmor %vm1364, %vm1365
      %v1367 = vsel %vm1366, %v1359, %v1363
      %v1368 = vand.u32 2147483647, %v1221
      %vm1369 = vcmp.eq.f32.partialorder %v1368, 8.507059e+37
      %v1370 = vand.u32 %v1221, 2147483648
      %v1371 = vor.u32 1.1754944e-38, %v1370
      %v1372 = vsel %vm1369, %v1371, %v1367
      %v1373 = vmul.f32 1.0, %v1372
      %v1374 = vrcp.pop %v1222
      %v1375 = vmul.f32 %v1222, %v1374
      %v1376 = vsub.f32 1.0, %v1375
      %v1377 = vmul.f32 %v1374, %v1376
      %v1378 = vadd.f32 %v1374, %v1377
      %vm1379 = vweird.f32 %v1222
      %vm1380 = vweird.f32 %v1374
      %vm1381 = vmor %vm1379, %vm1380
      %v1382 = vsel %vm1381, %v1374, %v1378
      %v1383 = vand.u32 2147483647, %v1222
      %vm1384 = vcmp.eq.f32.partialorder %v1383, 8.507059e+37
      %v1385 = vand.u32 %v1222, 2147483648
      %v1386 = vor.u32 1.1754944e-38, %v1385
      %v1387 = vsel %vm1384, %v1386, %v1382
      %v1388 = vmul.f32 1.0, %v1387
      %v1389 = vrcp.pop %v1223
      %v1390 = vmul.f32 %v1223, %v1389
      %v1391 = vsub.f32 1.0, %v1390
      %v1392 = vmul.f32 %v1389, %v1391
      %v1393 = vadd.f32 %v1389, %v1392
      %vm1394 = vweird.f32 %v1223
      %vm1395 = vweird.f32 %v1389
      %vm1396 = vmor %vm1394, %vm1395
      %v1397 = vsel %vm1396, %v1389, %v1393
      %v1398 = vand.u32 2147483647, %v1223
      %vm1399 = vcmp.eq.f32.partialorder %v1398, 8.507059e+37
      %v1400 = vand.u32 %v1223, 2147483648
      %v1401 = vor.u32 1.1754944e-38, %v1400
      %v1402 = vsel %vm1399, %v1401, %v1397
      %v1403 = vmul.f32 1.0, %v1402
      %v1404 = vsel %vm1172, %v1238, %v1155
      %v1405 = vsel %vm1172, %v1253, %v1156
      %v1406 = vsel %vm1172, %v1268, %v1157
      %v1407 = vsel %vm1173, %v1283, %v1158
      %v1408 = vsel %vm1173, %v1298, %v1159
      %v1409 = vsel %vm1173, %v1313, %v1160
      %v1410 = vsel %vm1174, %v1328, %v1161
      %v1411 = vsel %vm1174, %v1343, %v1162
      %v1412 = vsel %vm1174, %v1358, %v1163
      %v1413 = vsel %vm1175, %v1373, %v1164
      %v1414 = vsel %vm1175, %v1388, %v1165
      %v1415 = vsel %vm1175, %v1403, %v1166
      %1416 = vst [vmem:[%s170] sm:$0xff] %v1404
      %1417 = vst [vmem:[%s170 + $0x8] sm:$0xff] %v1405
      %vm1418 = vcmask 261120
      %1419 = vst.msk [vmem:[%s170 + $0x10] sm:$0xff] %vm1418, %v1406
      %1420 = vst [vmem:[%s170 + $0x18] sm:$0xff] %v1407
      %1421 = vst [vmem:[%s170 + $0x20] sm:$0xff] %v1408
      %1422 = vst.msk [vmem:[%s170 + $0x28] sm:$0xff] %vm1418, %v1409
      %1423 = vst [vmem:[%s170 + $0x30] sm:$0xff] %v1410
      %1424 = vst [vmem:[%s170 + $0x38] sm:$0xff] %v1411
      %1425 = vst.msk [vmem:[%s170 + $0x40] sm:$0xff] %vm1418, %v1412
      %1426 = vst [vmem:[%s170 + $0x48] sm:$0x7] %v1413
      %1427 = vst [vmem:[%s170 + $0x50] sm:$0x7] %v1414
      %vm1428 = vcmask 256000
      %1429 = vst.msk [vmem:[%s170 + $0x58] sm:$0x7] %vm1428, %v1415
      %p1430 = scmp.lt.s32.totalorder %s14, 1
      %s1431 = scalar_select %p1430, %s14, 1
      %s1432 = smul.addr %s1431, 12
      %s1433 = smul.addr %s1432, 8
      %s1434 = scalar_lea.vmem %s3, %s1433
      // Predicated region
      $region33: #{up_forward.8} parent=31 // pred_check
        %p1435 = pneg %p100
      $region34: #{up_forward.8} parent=31 // pred_check_branch
        %1437 = sbr.rel (%p1435) target = $region36
      $region35: #{up_forward.8} parent=31 // pred_region
        _
      $region36: #{up_forward.8} parent=31 // pred_fallthru
        _
    $region32: #{up_forward.8} parent=5 // pred_fallthru
      _
    %p1438 = scmp.le.s32.totalorder 2, %s9
    // Predicated region
    $region37: #{up_forward.8} parent=5 // pred_check
      %p1439 = pneg %p1438
    $region38: #{up_forward.8} parent=5 // pred_check_branch
      %1441 = sbr.rel (%p1439) target = $region40
    $region39: #{up_forward.8} parent=5 // pred_region
      %s1442 = ssub.s32 %s9, 2
      // Predicated region
      $region41: #{up_forward.8} parent=39 // pred_check
        %p1443 = pneg %p106
      $region42: #{up_forward.8} parent=39 // pred_check_branch
        %1445 = sbr.rel (%p1443) target = $region44
      $region43: #{up_forward.8} parent=39 // pred_region
        %p1446 = scmp.lt.s32.totalorder %s15, 1
        %s1447 = scalar_select %p1446, %s15, 1
        %s1448 = smul.addr %s1447, 12
        %s1449 = smul.addr %s1448, 8
        %s1450 = scalar_lea.vmem %s3, %s1449
      $region44: #{up_forward.8} parent=39 // pred_fallthru
        _
    $region40: #{up_forward.8} parent=5 // pred_fallthru
      _
  $region6: #{up_forward.8} parent=0 // loop_footer
    %s13 = sadd.s32 1, %s9
  $region7: #{up_forward.8} parent=0 // loop_footer_branch
    %8 = sbr.rel target = $region3
  $region8: #{up_forward.8} parent=0 // loop_exit
    _

// kernel: up_forward.9
$region0: #{up_forward.9}
  #allocation0 [shape = 'u32[]', space=smem, size = 0x4, offset = 0x4, fixed_abs, tag = 'smem constant byte address 0x4 - core index']
  #allocation1 [shape = 'u32[72,128]{1,0:T(1,128)}', space=vmem, size = 0x9000, scoped, tag = 'internal scratch']
  %s0 = inlined_call_operand.vmem [shape: bf16[4,72], index: 0, kind: input, shape index: {}]
  %s1 = inlined_call_operand.vmem [shape: bf16[72,512], index: 1, kind: input, shape index: {}]
  %s2 = inlined_call_operand.vmem [shape: bf16[4,512], index: 2, kind: output, shape index: {0}]
  %s3 = inlined_call_operand.vmem [shape: f32[1,4,1], index: 3, kind: output, shape index: {1}]
  %s4 = inlined_call_operand.vmem [shape: f32[1,4,1], index: 4, kind: output, shape index: {2}]
  %5 = xla_tuple %s2, %s3, %s4
  %s6 = sld [smem:[#allocation0]]
  $region34: #{up_forward.9} parent=0
    _
  %s8 = ssub.s32 1, %s6
  %s9 = scalar_select 0, %s8, %s6
  // Predicated region
  $region2: #{up_forward.9} parent=0 // pred_check
    _
  $region3: #{up_forward.9} parent=0 // pred_check_branch
    %11 = sbr.rel (0) target = $region5
  $region4: #{up_forward.9} parent=0 // pred_region
    _
  $region5: #{up_forward.9} parent=0 // pred_fallthru
    _
  // Predicated region
  $region6: #{up_forward.9} parent=0 // pred_check
    _
  $region7: #{up_forward.9} parent=0 // pred_check_branch
    %13 = sbr.rel (0) target = $region9
  $region8: #{up_forward.9} parent=0 // pred_region
    _
  $region9: #{up_forward.9} parent=0 // pred_fallthru
    _
  %v15 = vld [vmem:[%s0] sm:$0x3]
  %v16 = vld [vmem:[%s1] sm:$0xff]
  %v17 = vld [vmem:[%s1 + $0x8] sm:$0xff]
  %v18 = vld [vmem:[%s1 + $0x10] sm:$0xff]
  %v19 = vld [vmem:[%s1 + $0x18] sm:$0xff]
  %v20 = vld [vmem:[%s1 + $0x20] sm:$0xff]
  %v21 = vld [vmem:[%s1 + $0x28] sm:$0xff]
  %v22 = vld [vmem:[%s1 + $0x30] sm:$0xff]
  %v23 = vld [vmem:[%s1 + $0x38] sm:$0xff]
  %v24 = vld [vmem:[%s1 + $0x40] sm:$0xff]
  %v25 = vld [vmem:[%s1 + $0x48] sm:$0xff]
  %v26 = vld [vmem:[%s1 + $0x50] sm:$0xff]
  %v27 = vld [vmem:[%s1 + $0x58] sm:$0xff]
  %v28 = vld [vmem:[%s1 + $0x60] sm:$0xff]
  %v29 = vld [vmem:[%s1 + $0x68] sm:$0xff]
  %v30 = vld [vmem:[%s1 + $0x70] sm:$0xff]
  %v31 = vld [vmem:[%s1 + $0x78] sm:$0xff]
  %v32 = vld [vmem:[%s1 + $0x80] sm:$0xff]
  %v33 = vld [vmem:[%s1 + $0x88] sm:$0xff]
  %v52 = vunpack.c.l.b16 %v16
  %v53 = vunpack.c.h.b16 %v16
  %v54 = vunpack.c.l.b16 %v17
  %v55 = vunpack.c.h.b16 %v17
  %v56 = vunpack.c.l.b16 %v18
  %v57 = vunpack.c.h.b16 %v18
  %v58 = vunpack.c.l.b16 %v19
  %v59 = vunpack.c.h.b16 %v19
  %v60 = vunpack.c.l.b16 %v20
  %v61 = vunpack.c.h.b16 %v20
  %v62 = vunpack.c.l.b16 %v21
  %v63 = vunpack.c.h.b16 %v21
  %v64 = vunpack.c.l.b16 %v22
  %v65 = vunpack.c.h.b16 %v22
  %v66 = vunpack.c.l.b16 %v23
  %v67 = vunpack.c.h.b16 %v23
  %v68 = vunpack.c.l.b16 %v24
  %v69 = vunpack.c.h.b16 %v24
  %v70 = vunpack.c.l.b16 %v25
  %v71 = vunpack.c.h.b16 %v25
  %v72 = vunpack.c.l.b16 %v26
  %v73 = vunpack.c.h.b16 %v26
  %v74 = vunpack.c.l.b16 %v27
  %v75 = vunpack.c.h.b16 %v27
  %v76 = vunpack.c.l.b16 %v28
  %v77 = vunpack.c.h.b16 %v28
  %v78 = vunpack.c.l.b16 %v29
  %v79 = vunpack.c.h.b16 %v29
  %v80 = vunpack.c.l.b16 %v30
  %v81 = vunpack.c.h.b16 %v30
  %v82 = vunpack.c.l.b16 %v31
  %v83 = vunpack.c.h.b16 %v31
  %v84 = vunpack.c.l.b16 %v32
  %v85 = vunpack.c.h.b16 %v32
  %v86 = vunpack.c.l.b16 %v33
  %v87 = vunpack.c.h.b16 %v33
  %v88 = vpack.c.b16 %v56, %v52
  %v89 = vpack.c.b16 %v57, %v53
  %v90 = vpack.c.b16 %v58, %v54
  %v91 = vpack.c.b16 %v59, %v55
  %v92 = vpack.c.b16 %v64, %v60
  %v93 = vpack.c.b16 %v65, %v61
  %v94 = vpack.c.b16 %v66, %v62
  %v95 = vpack.c.b16 %v67, %v63
  %v96 = vpack.c.b16 %v72, %v68
  %v97 = vpack.c.b16 %v73, %v69
  %v98 = vpack.c.b16 %v74, %v70
  %v99 = vpack.c.b16 %v75, %v71
  %v100 = vpack.c.b16 %v80, %v76
  %v101 = vpack.c.b16 %v81, %v77
  %v102 = vpack.c.b16 %v82, %v78
  %v103 = vpack.c.b16 %v83, %v79
  %v104 = vpack.c.b16 %v84, %v84
  %v105 = vpack.c.b16 %v85, %v85
  %v106 = vpack.c.b16 %v86, %v86
  %v107 = vpack.c.b16 %v87, %v87
  %vm124 = vcmask 588800
  %v126 = vsel %vm124, %v15, 0
  %vm128 = vcmask 1043456
  %v130 = vsel %vm128, %v104, 0
  %v133 = vsel %vm128, %v105, 0
  %v136 = vsel %vm128, %v106, 0
  %v139 = vsel %vm128, %v107, 0
  %141 = vmatpush.bf16.msra.mxu0 0
  %142 = vmatpush.bf16.msra.mxu0 0
  %143 = vmatpush.bf16.msra.mxu0 0
  %144 = vmatpush.bf16.msra.mxu0 %v130
  %145 = vmatpush.bf16.msra.mxu0 %v100
  %146 = vmatpush.bf16.msra.mxu0 %v96
  %147 = vmatpush.bf16.msra.mxu0 %v92
  %148 = vmatpush.bf16.msra.mxu0 %v88
  %149 = vmatmul.bf16.gmra.mxu0 %v126
  %v150 = vpop.f32.mrf.mxu0
  %v151 = vadd.f32 0.0, %v150
  %v152 = vpop.f32.mrf.mxu0
  %153 = vdwg.mxu0
  %154 = vmatpush.bf16.msra.mxu0 0
  %155 = vmatpush.bf16.msra.mxu0 0
  %156 = vmatpush.bf16.msra.mxu0 0
  %157 = vmatpush.bf16.msra.mxu0 %v133
  %158 = vmatpush.bf16.msra.mxu0 %v101
  %159 = vmatpush.bf16.msra.mxu0 %v97
  %160 = vmatpush.bf16.msra.mxu0 %v93
  %161 = vmatpush.bf16.msra.mxu0 %v89
  %162 = vmatmul.bf16.gmra.mxu0 %v126
  %v163 = vpop.f32.mrf.mxu0
  %v164 = vadd.f32 0.0, %v163
  %v165 = vpop.f32.mrf.mxu0
  %166 = vdwg.mxu0
  %167 = vmatpush.bf16.msra.mxu0 0
  %168 = vmatpush.bf16.msra.mxu0 0
  %169 = vmatpush.bf16.msra.mxu0 0
  %170 = vmatpush.bf16.msra.mxu0 %v136
  %171 = vmatpush.bf16.msra.mxu0 %v102
  %172 = vmatpush.bf16.msra.mxu0 %v98
  %173 = vmatpush.bf16.msra.mxu0 %v94
  %174 = vmatpush.bf16.msra.mxu0 %v90
  %175 = vmatmul.bf16.gmra.mxu0 %v126
  %v176 = vpop.f32.mrf.mxu0
  %v177 = vadd.f32 0.0, %v176
  %v178 = vpop.f32.mrf.mxu0
  %179 = vdwg.mxu0
  %180 = vmatpush.bf16.msra.mxu0 0
  %181 = vmatpush.bf16.msra.mxu0 0
  %182 = vmatpush.bf16.msra.mxu0 0
  %183 = vmatpush.bf16.msra.mxu0 %v139
  %184 = vmatpush.bf16.msra.mxu0 %v103
  %185 = vmatpush.bf16.msra.mxu0 %v99
  %186 = vmatpush.bf16.msra.mxu0 %v95
  %187 = vmatpush.bf16.msra.mxu0 %v91
  %188 = vmatmul.bf16.gmra.mxu0 %v126
  %v189 = vpop.f32.mrf.mxu0
  %v190 = vadd.f32 0.0, %v189
  %v191 = vpop.f32.mrf.mxu0
  %192 = vdwg.mxu0
  %v193 = vpack.c.bf16 %v164, %v151
  %v194 = vpack.c.bf16 %v190, %v177
  %v197 = vrot.slane %v193, 2
  %v198 = vrot.slane %v194, 4
  %v199 = vrot.slane %v194, 6
  %vm200 = vcmask 1041408
  %v203 = vsel %vm200, %v193, %v197
  %vm204 = vcmask 1045508
  %v207 = vsel %vm204, %v198, %v199
  %v208 = vsel %vm128, %v203, %v207
  %210 = vst [vmem:[%s2] sm:$0xff] %v208
  %v211 = vsel %vm128, %v151, 0.0
  %v212 = vsel %vm128, %v164, 0.0
  %v213 = vadd.f32 %v211, %v212
  %v214 = vsel %vm128, %v177, 0.0
  %v215 = vadd.f32 %v213, %v214
  %v216 = vsel %vm128, %v190, 0.0
  %v217 = vadd.f32 %v215, %v216
  %218 = vadd.xlane.f32.xlu0 %v217
  %v219 = vpop.xlane.xlu0 %218
  %vm220 = vcmask 3072
  %221 = vst.msk [vmem:[%s3] sm:$0xf] %vm220, %v219
  %v222 = vmul.f32 %v151, %v151
  %v223 = vmul.f32 %v164, %v164
  %v224 = vmul.f32 %v177, %v177
  %v225 = vmul.f32 %v190, %v190
  %v226 = vsel %vm128, %v222, 0.0
  %v227 = vsel %vm128, %v223, 0.0
  %v228 = vadd.f32 %v226, %v227
  %v229 = vsel %vm128, %v224, 0.0
  %v230 = vadd.f32 %v228, %v229
  %v231 = vsel %vm128, %v225, 0.0
  %v232 = vadd.f32 %v230, %v231
  %233 = vadd.xlane.f32.xlu0 %v232
  %v234 = vpop.xlane.xlu0 %233
  %235 = vst.msk [vmem:[%s4] sm:$0xf] %vm220, %v234
  // Predicated region
  $region10: #{up_forward.9} parent=0 // pred_check
    _
  $region11: #{up_forward.9} parent=0 // pred_check_branch
    %237 = sbr.rel (0) target = $region13
  $region12: #{up_forward.9} parent=0 // pred_region
    _
  $region13: #{up_forward.9} parent=0 // pred_fallthru
    _
  // Predicated region
  $region14: #{up_forward.9} parent=0 // pred_check
    _
  $region15: #{up_forward.9} parent=0 // pred_check_branch
    %239 = sbr.rel (0) target = $region17
  $region16: #{up_forward.9} parent=0 // pred_region
    _
  $region17: #{up_forward.9} parent=0 // pred_fallthru
    _
  // Predicated region
  $region18: #{up_forward.9} parent=0 // pred_check
    _
  $region19: #{up_forward.9} parent=0 // pred_check_branch
    %241 = sbr.rel (0) target = $region21
  $region20: #{up_forward.9} parent=0 // pred_region
    _
  $region21: #{up_forward.9} parent=0 // pred_fallthru
    _
  // Predicated region
  $region22: #{up_forward.9} parent=0 // pred_check
    _
  $region23: #{up_forward.9} parent=0 // pred_check_branch
    %243 = sbr.rel (0) target = $region25
  $region24: #{up_forward.9} parent=0 // pred_region
    _
  $region25: #{up_forward.9} parent=0 // pred_fallthru
    _
  // Predicated region
  $region26: #{up_forward.9} parent=0 // pred_check
    _
  $region27: #{up_forward.9} parent=0 // pred_check_branch
    %245 = sbr.rel (0) target = $region29
  $region28: #{up_forward.9} parent=0 // pred_region
    _
  $region29: #{up_forward.9} parent=0 // pred_fallthru
    _
  // Predicated region
  $region30: #{up_forward.9} parent=0 // pred_check
    _
  $region31: #{up_forward.9} parent=0 // pred_check_branch
    %247 = sbr.rel (0) target = $region33
  $region32: #{up_forward.9} parent=0 // pred_region
    _
  $region33: #{up_forward.9} parent=0 // pred_fallthru
    _

// kernel: up_forward.10
$region0: #{up_forward.10}
  #allocation0 [shape = 'u32[]', space=smem, size = 0x4, offset = 0x4, fixed_abs, tag = 'smem constant byte address 0x4 - core index']
  #allocation1 [shape = 'u32[72,128]{1,0:T(1,128)}', space=vmem, size = 0x9000, scoped, tag = 'internal scratch']
  %s0 = inlined_call_operand.vmem [shape: bf16[4,512], index: 0, kind: input, shape index: {}]
  %s1 = inlined_call_operand.vmem [shape: f32[4,1], index: 1, kind: input, shape index: {}]
  %s2 = inlined_call_operand.vmem [shape: f32[4,1], index: 2, kind: input, shape index: {}]
  %s3 = inlined_call_operand.vmem [shape: f32[4,512], index: 3, kind: output, shape index: {}]
  %s4 = sld [smem:[#allocation0]]
  $region22: #{up_forward.10} parent=0
    _
  %s6 = ssub.s32 1, %s4
  %s7 = scalar_select 0, %s6, %s4
  // Predicated region
  $region2: #{up_forward.10} parent=0 // pred_check
    _
  $region3: #{up_forward.10} parent=0 // pred_check_branch
    %9 = sbr.rel (0) target = $region5
  $region4: #{up_forward.10} parent=0 // pred_region
    _
  $region5: #{up_forward.10} parent=0 // pred_fallthru
    _
  // Predicated region
  $region6: #{up_forward.10} parent=0 // pred_check
    _
  $region7: #{up_forward.10} parent=0 // pred_check_branch
    %11 = sbr.rel (0) target = $region9
  $region8: #{up_forward.10} parent=0 // pred_region
    _
  $region9: #{up_forward.10} parent=0 // pred_fallthru
    _
  // Predicated region
  $region10: #{up_forward.10} parent=0 // pred_check
    _
  $region11: #{up_forward.10} parent=0 // pred_check_branch
    %13 = sbr.rel (0) target = $region13
  $region12: #{up_forward.10} parent=0 // pred_region
    _
  $region13: #{up_forward.10} parent=0 // pred_fallthru
    _
  %v14 = vld [vmem:[%s0] sm:$0xff]
  %v15 = vunpack.c.l.bf16 %v14
  %v16 = vunpack.c.h.bf16 %v14
  %v17 = vld [vmem:[%s1] sm:$0xf]
  %19 = vset.pattern.permute.xlu0 0
  %20 = vperm.xlu0 %19, %v17
  %v21 = vpop.permute.xlu0 %20
  %v23 = vunpack.c.l.s4 839922192
  %v24 = vunpack.c.0.s8 %v23
  %v25 = vperm.slane %v21, %v24
  %v27 = vmul.f32 %v15, %v25
  %v28 = vmul.f32 %v16, %v25
  %v29 = vld [vmem:[%s2] sm:$0xf]
  %31 = vset.pattern.permute.xlu0 0
  %32 = vperm.xlu0 %31, %v29
  %v33 = vpop.permute.xlu0 %32
  %v35 = vunpack.c.l.s4 839922192
  %v36 = vunpack.c.0.s8 %v35
  %v37 = vperm.slane %v33, %v36
  %v39 = vadd.f32 %v27, %v37
  %v40 = vadd.f32 %v28, %v37
  %v41 = vmax.f32 %v39, 0.0
  %v42 = vmax.f32 %v40, 0.0
  %43 = vst [vmem:[%s3] sm:$0xff] %v41
  %44 = vst [vmem:[%s3 + $0x8] sm:$0xff] %v42
  // Predicated region
  $region14: #{up_forward.10} parent=0 // pred_check
    _
  $region15: #{up_forward.10} parent=0 // pred_check_branch
    %46 = sbr.rel (0) target = $region17
  $region16: #{up_forward.10} parent=0 // pred_region
    _
  $region17: #{up_forward.10} parent=0 // pred_fallthru
    _
  // Predicated region
  $region18: #{up_forward.10} parent=0 // pred_check
    _
  $region19: #{up_forward.10} parent=0 // pred_check_branch
    %48 = sbr.rel (0) target = $region21
  $region20: #{up_forward.10} parent=0 // pred_region
    _
  $region21: #{up_forward.10} parent=0 // pred_fallthru
    _

// kernel: up_forward.11
$region0: #{up_forward.11}
  #allocation0 [shape = 'u32[]', space=smem, size = 0x4, offset = 0x4, fixed_abs, tag = 'smem constant byte address 0x4 - core index']
  #allocation1 [shape = 'u32[72,128]{1,0:T(1,128)}', space=vmem, size = 0x9000, scoped, tag = 'internal scratch']
  %s0 = inlined_call_operand.vmem [shape: bf16[9,27,4], index: 0, kind: input, shape index: {}]
  %s1 = inlined_call_operand.vmem [shape: f32[27,1], index: 1, kind: input, shape index: {}]
  %s2 = inlined_call_operand.vmem [shape: bf16[2,4,360], index: 2, kind: input, shape index: {}]
  %s3 = inlined_call_operand.vmem [shape: f32[2,27,288], index: 3, kind: output, shape index: {}]
  %s4 = sld [smem:[#allocation0]]
  $region45: #{up_forward.11} parent=0
    _
  %s6 = ssub.s32 1, %s4
  %s7 = scalar_select 0, %s6, %s4
  loop: start=0, step=1, limit=4
  $region2: #{up_forward.11} parent=0 // loop_pre_header
    _
  $region3: #{up_forward.11} parent=0 // loop_header
    %s9 = sphi 0, %s13
    %p10 = scmp.ge.s32.totalorder %s9, 4
    %s17 = sphi 0, %s17
    %s19 = sphi 0, %s17
    %s20 = sphi 0, %s19
    %s34 = sphi 0, %s20
    %s38 = sphi 0, %s38
    %s40 = sphi 0, %s38
    %s41 = sphi 0, %s40
    %s55 = sphi 0, %s41
    %s61 = sphi 0, %s63
    %s64 = sphi 0, %s61
    %s65 = sphi 0, %s64
    %s81 = sphi 0, %s65
    %s87 = sphi 0, %s89
    %s90 = sphi 0, %s87
    %s91 = sphi 0, %s90
    %s107 = sphi 0, %s91
  $region4: #{up_forward.11} parent=0 // loop_header_branch
    %12 = sbr.rel (%p10) target = $region8
  $region5: #{up_forward.11} parent=0 // loop_body
    %s14 = ssub.s32 %s9, 1
    %s15 = ssub.s32 %s9, 2
    %s16 = sadd.s32 %s9, 1
    %s18 = sadd.s32 %s17, 1
    %p21 = scmp.eq.s32.totalorder %s9, 1
    %p22 = scmp.ne.s32.totalorder %s17, %s19
    %p23 = scmp.eq.s32.totalorder %s9, 0
    %p24 = por %p22, %p23
    %p25 = scmp.ne.s32.totalorder %s17, %s19
    %p26 = scmp.eq.s32.totalorder %s14, 1
    %p27 = por %p25, %p26
    %p28 = scmp.ne.s32.totalorder %s19, %s20
    %p29 = scmp.eq.s32.totalorder %s14, 0
    %p30 = por %p28, %p29
    %p31 = scmp.ne.s32.totalorder %s19, %s20
    %p32 = scmp.eq.s32.totalorder %s15, 1
    %p33 = por %p31, %p32
    %p35 = scmp.ne.s32.totalorder %s20, %s34
    %p36 = scmp.eq.s32.totalorder %s15, 0
    %p37 = por %p35, %p36
    %s39 = sadd.s32 %s38, 1
    %p42 = scmp.eq.s32.totalorder %s9, 1
    %p43 = scmp.ne.s32.totalorder %s38, %s40
    %p44 = scmp.eq.s32.totalorder %s9, 0
    %p45 = por %p43, %p44
    %p46 = scmp.ne.s32.totalorder %s38, %s40
    %p47 = scmp.eq.s32.totalorder %s14, 1
    %p48 = por %p46, %p47
    %p49 = scmp.ne.s32.totalorder %s40, %s41
    %p50 = scmp.eq.s32.totalorder %s14, 0
    %p51 = por %p49, %p50
    %p52 = scmp.ne.s32.totalorder %s40, %s41
    %p53 = scmp.eq.s32.totalorder %s15, 1
    %p54 = por %p52, %p53
    %p56 = scmp.ne.s32.totalorder %s41, %s55
    %p57 = scmp.eq.s32.totalorder %s15, 0
    %p58 = por %p56, %p57
    %s59 = ssub.s32 %s9, %s16
    %p60 = scmp.eq.s32.totalorder %s59, 0
    %s62 = sadd.s32 %s61, 1
    %s63 = scalar_select %p60, %s61, %s62
    %p66 = pneg %p60
    %p67 = scmp.eq.s32.totalorder %s9, 1
    %p68 = por %p66, %p67
    %p69 = scmp.ne.s32.totalorder %s61, %s64
    %p70 = scmp.eq.s32.totalorder %s9, 0
    %p71 = por %p69, %p70
    %p72 = scmp.ne.s32.totalorder %s61, %s64
    %p73 = scmp.eq.s32.totalorder %s14, 1
    %p74 = por %p72, %p73
    %p75 = scmp.ne.s32.totalorder %s64, %s65
    %p76 = scmp.eq.s32.totalorder %s14, 0
    %p77 = por %p75, %p76
    %p78 = scmp.ne.s32.totalorder %s64, %s65
    %p79 = scmp.eq.s32.totalorder %s15, 1
    %p80 = por %p78, %p79
    %p82 = scmp.ne.s32.totalorder %s65, %s81
    %p83 = scmp.eq.s32.totalorder %s15, 0
    %p84 = por %p82, %p83
    %s85 = ssub.s32 %s9, %s16
    %p86 = scmp.eq.s32.totalorder %s85, 0
    %s88 = sadd.s32 %s87, 1
    %s89 = scalar_select %p86, %s87, %s88
    %p92 = pneg %p86
    %p93 = scmp.eq.s32.totalorder %s9, 1
    %p94 = por %p92, %p93
    %p95 = scmp.ne.s32.totalorder %s87, %s90
    %p96 = scmp.eq.s32.totalorder %s9, 0
    %p97 = por %p95, %p96
    %p98 = scmp.ne.s32.totalorder %s87, %s90
    %p99 = scmp.eq.s32.totalorder %s14, 1
    %p100 = por %p98, %p99
    %p101 = scmp.ne.s32.totalorder %s90, %s91
    %p102 = scmp.eq.s32.totalorder %s14, 0
    %p103 = por %p101, %p102
    %p104 = scmp.ne.s32.totalorder %s90, %s91
    %p105 = scmp.eq.s32.totalorder %s15, 1
    %p106 = por %p104, %p105
    %p108 = scmp.ne.s32.totalorder %s91, %s107
    %p109 = scmp.eq.s32.totalorder %s15, 0
    %p110 = por %p108, %p109
    %p111 = scmp.le.s32.totalorder 1, %s9
    %p112 = scmp.lt.s32.totalorder %s9, 3
    %p113 = pnand %p111, %p112
    %p114 = pneg %p113
    // Predicated region
    $region9: #{up_forward.11} parent=5 // pred_check
      _
    $region10: #{up_forward.11} parent=5 // pred_check_branch
      %116 = sbr.rel (%p113) target = $region12
    $region11: #{up_forward.11} parent=5 // pred_region
      %s117 = ssub.s32 %s9, 1
      // Predicated region
      $region13: #{up_forward.11} parent=11 // pred_check
        %p118 = pneg %p30
      $region14: #{up_forward.11} parent=11 // pred_check_branch
        %120 = sbr.rel (%p118) target = $region16
      $region15: #{up_forward.11} parent=11 // pred_region
        _
      $region16: #{up_forward.11} parent=11 // pred_fallthru
        _
      // Predicated region
      $region17: #{up_forward.11} parent=11 // pred_check
        %p121 = pneg %p51
      $region18: #{up_forward.11} parent=11 // pred_check_branch
        %123 = sbr.rel (%p121) target = $region20
      $region19: #{up_forward.11} parent=11 // pred_region
        _
      $region20: #{up_forward.11} parent=11 // pred_fallthru
        _
    $region12: #{up_forward.11} parent=5 // pred_fallthru
      _
    %p124 = scmp.lt.s32.totalorder %s9, 2
    // Predicated region
    $region21: #{up_forward.11} parent=5 // pred_check
      %p125 = pneg %p124
    $region22: #{up_forward.11} parent=5 // pred_check_branch
      %127 = sbr.rel (%p125) target = $region24
    $region23: #{up_forward.11} parent=5 // pred_region
      // Predicated region
      $region25: #{up_forward.11} parent=23 // pred_check
        %p128 = pneg %p71
      $region26: #{up_forward.11} parent=23 // pred_check_branch
        %130 = sbr.rel (%p128) target = $region28
      $region27: #{up_forward.11} parent=23 // pred_region
        %p131 = scmp.lt.s32.totalorder %s9, 1
        %s132 = scalar_select %p131, %s9, 1
        %s133 = smul.addr %s132, 3
        %s134 = smul.addr %s133, 2
        %s135 = scalar_lea.vmem %s2, %s134
      $region28: #{up_forward.11} parent=23 // pred_fallthru
        _
    $region24: #{up_forward.11} parent=5 // pred_fallthru
      _
    %p136 = scmp.le.s32.totalorder 1, %s9
    %p137 = scmp.lt.s32.totalorder %s9, 3
    %p138 = pnand %p136, %p137
    %p139 = pneg %p138
    // Predicated region
    $region29: #{up_forward.11} parent=5 // pred_check
      _
    $region30: #{up_forward.11} parent=5 // pred_check_branch
      %141 = sbr.rel (%p138) target = $region32
    $region31: #{up_forward.11} parent=5 // pred_region
      %s142 = ssub.s32 %s9, 1
      %p143 = pneg %p30
      %p144 = pneg %p27
      %p145 = pneg %p51
      %p146 = pneg %p48
      %p147 = scmp.lt.s32.totalorder %s14, 1
      %s148 = scalar_select %p147, %s14, 1
      %s149 = smul.addr %s148, 3
      %s150 = smul.addr %s149, 2
      %s151 = scalar_lea.vmem %s2, %s150
      %p152 = pneg %p77
      %p153 = pneg %p74
      %p154 = pneg %p103
      %p155 = pneg %p100
      %p156 = scmp.lt.s32.totalorder %s14, 1
      %s157 = scalar_select %p156, %s14, 1
      %s158 = smul.addr %s157, 12
      %s159 = smul.addr %s158, 8
      %s160 = scalar_lea.vmem %s3, %s159
      %p161 = scmp.lt.s32.totalorder %s14, 1
      %s162 = scalar_select %p161, %s14, 1
      %s163 = smul.addr %s162, 3
      %s164 = smul.addr %s163, 2
      %s165 = scalar_lea.vmem %s2, %s164
      %p166 = scmp.lt.s32.totalorder %s14, 1
      %s167 = scalar_select %p166, %s14, 1
      %s168 = smul.addr %s167, 12
      %s169 = smul.addr %s168, 8
      %s170 = scalar_lea.vmem %s3, %s169
      %v172 = vld [vmem:[%s0] sm:$0xf]
      %v173 = vld [vmem:[%s0 + $0x4] sm:$0xf]
      %v174 = vld [vmem:[%s0 + $0x8] sm:$0xf]
      %v175 = vld [vmem:[%s0 + $0xc] sm:$0x3]
      %v176 = vld [vmem:[%s165] sm:$0x3f]
      %s177 = scalar_lea.vmem %s0, 16
      %v178 = vld [vmem:[%s177] sm:$0xf]
      %v179 = vld [vmem:[%s177 + $0x4] sm:$0xf]
      %v180 = vld [vmem:[%s177 + $0x8] sm:$0xf]
      %v181 = vld [vmem:[%s177 + $0xc] sm:$0x3]
      %v186 = vunpack.c.l.b16 %v178
      %v187 = vunpack.c.l.b16 %v179
      %v188 = vunpack.c.l.b16 %v180
      %v189 = vunpack.c.l.b16 %v181
      %v190 = vpack.c.b16 %v187, %v186
      %v191 = vpack.c.b16 %v189, %v188
      %193 = vst [vmem:[#allocation1] ss:$4 sm:$0xff] %v176
      %v194 = vld.sshfl [vmem:[#allocation1] sm:$0xff pattern:$0x73625140]
      %v196 = vld.sshfl [vmem:[#allocation1 + $0x8] sm:$0xff pattern:$0x73625140]
      %v198 = vld.sshfl [vmem:[#allocation1 + $0x10] sm:$0xff pattern:$0x73625140]
      %200 = vrot.lane.b32.xlu0 %v194, 110
      %v201 = vpop.permute.xlu0 %200
      %202 = vrot.lane.b32.xlu0 %v196, 110
      %v203 = vpop.permute.xlu0 %202
      %204 = vrot.lane.b32.xlu0 %v198, 110
      %v205 = vpop.permute.xlu0 %204
      %vm206 = vcmask 900096
      %v207 = vsel %vm206, %v201, %v203
      %v208 = vsel %vm206, %v203, %v205
      %vm209 = vcmask 31744
      %v211 = vsel %vm209, %v190, 0
      %v214 = vsel %vm209, %v191, 0
      %vm216 = vcmask 1041408
      %v218 = vsel %vm216, %v207, 0
      %v221 = vsel %vm216, %v208, 0
      %v224 = vsel %vm216, %v205, 0
      %226 = vmatpush.bf16.msra.mxu0 0
      %227 = vmatpush.bf16.msra.mxu0 0
      %228 = vmatpush.bf16.msra.mxu0 0
      %229 = vmatpush.bf16.msra.mxu0 0
      %230 = vmatpush.bf16.msra.mxu0 0
      %231 = vmatpush.bf16.msra.mxu0 0
      %232 = vmatpush.bf16.msra.mxu0 0
      %233 = vmatpush.bf16.msra.mxu0 %v218
      %234 = vmatmul.bf16.gmra.mxu0 %v211
      %v235 = vpop.f32.mrf.mxu0
      %v236 = vadd.f32 0.0, %v235
      %v237 = vpop.f32.mrf.mxu0
      %v238 = vadd.f32 0.0, %v237
      %239 = vmatmul.bf16.gmra.mxu0 %v214
      %v240 = vpop.f32.mrf.mxu0
      %v241 = vadd.f32 0.0, %v240
      %v242 = vpop.f32.mrf.mxu0
      %v243 = vadd.f32 0.0, %v242
      %244 = vdwg.mxu0
      %245 = vmatpush.bf16.msra.mxu0 0
      %246 = vmatpush.bf16.msra.mxu0 0
      %247 = vmatpush.bf16.msra.mxu0 0
      %248 = vmatpush.bf16.msra.mxu0 0
      %249 = vmatpush.bf16.msra.mxu0 0
      %250 = vmatpush.bf16.msra.mxu0 0
      %251 = vmatpush.bf16.msra.mxu0 0
      %252 = vmatpush.bf16.msra.mxu0 %v221
      %253 = vmatmul.bf16.gmra.mxu0 %v211
      %v254 = vpop.f32.mrf.mxu0
      %v255 = vadd.f32 0.0, %v254
      %v256 = vpop.f32.mrf.mxu0
      %v257 = vadd.f32 0.0, %v256
      %258 = vmatmul.bf16.gmra.mxu0 %v214
      %v259 = vpop.f32.mrf.mxu0
      %v260 = vadd.f32 0.0, %v259
      %v261 = vpop.f32.mrf.mxu0
      %v262 = vadd.f32 0.0, %v261
      %263 = vdwg.mxu0
      %264 = vmatpush.bf16.msra.mxu0 0
      %265 = vmatpush.bf16.msra.mxu0 0
      %266 = vmatpush.bf16.msra.mxu0 0
      %267 = vmatpush.bf16.msra.mxu0 0
      %268 = vmatpush.bf16.msra.mxu0 0
      %269 = vmatpush.bf16.msra.mxu0 0
      %270 = vmatpush.bf16.msra.mxu0 0
      %271 = vmatpush.bf16.msra.mxu0 %v224
      %272 = vmatmul.bf16.gmra.mxu0 %v211
      %v273 = vpop.f32.mrf.mxu0
      %v274 = vadd.f32 0.0, %v273
      %v275 = vpop.f32.mrf.mxu0
      %v276 = vadd.f32 0.0, %v275
      %277 = vmatmul.bf16.gmra.mxu0 %v214
      %v278 = vpop.f32.mrf.mxu0
      %v279 = vadd.f32 0.0, %v278
      %v280 = vpop.f32.mrf.mxu0
      %v281 = vadd.f32 0.0, %v280
      %282 = vdwg.mxu0
      %v287 = vunpack.c.l.b16 %v172
      %v288 = vunpack.c.l.b16 %v173
      %v289 = vunpack.c.l.b16 %v174
      %v290 = vunpack.c.l.b16 %v175
      %v291 = vpack.c.b16 %v288, %v287
      %v292 = vpack.c.b16 %v290, %v289
      %293 = vst [vmem:[#allocation1] ss:$4 sm:$0xff] %v176
      %v294 = vld.sshfl [vmem:[#allocation1] sm:$0xff pattern:$0x73625140]
      %v296 = vld.sshfl [vmem:[#allocation1 + $0x8] sm:$0xff pattern:$0x73625140]
      %v298 = vld.sshfl [vmem:[#allocation1 + $0x10] sm:$0xff pattern:$0x73625140]
      %300 = vrot.lane.b32.xlu0 %v294, 111
      %v301 = vpop.permute.xlu0 %300
      %302 = vrot.lane.b32.xlu0 %v296, 111
      %v303 = vpop.permute.xlu0 %302
      %304 = vrot.lane.b32.xlu0 %v298, 111
      %v305 = vpop.permute.xlu0 %304
      %vm306 = vcmask 908288
      %v307 = vsel %vm306, %v301, %v303
      %v308 = vsel %vm306, %v303, %v305
      %v310 = vsel %vm209, %v291, 0
      %v313 = vsel %vm209, %v292, 0
      %v316 = vsel %vm216, %v307, 0
      %v319 = vsel %vm216, %v308, 0
      %v322 = vsel %vm216, %v305, 0
      %324 = vmatpush.bf16.msra.mxu0 0
      %325 = vmatpush.bf16.msra.mxu0 0
      %326 = vmatpush.bf16.msra.mxu0 0
      %327 = vmatpush.bf16.msra.mxu0 0
      %328 = vmatpush.bf16.msra.mxu0 0
      %329 = vmatpush.bf16.msra.mxu0 0
      %330 = vmatpush.bf16.msra.mxu0 0
      %331 = vmatpush.bf16.msra.mxu0 %v316
      %332 = vmatmul.bf16.gmra.mxu0 %v310
      %v333 = vpop.f32.mrf.mxu0
      %v334 = vadd.f32 %v236, %v333
      %v335 = vpop.f32.mrf.mxu0
      %v336 = vadd.f32 %v238, %v335
      %337 = vmatmul.bf16.gmra.mxu0 %v313
      %v338 = vpop.f32.mrf.mxu0
      %v339 = vadd.f32 %v241, %v338
      %v340 = vpop.f32.mrf.mxu0
      %v341 = vadd.f32 %v243, %v340
      %342 = vdwg.mxu0
      %343 = vmatpush.bf16.msra.mxu0 0
      %344 = vmatpush.bf16.msra.mxu0 0
      %345 = vmatpush.bf16.msra.mxu0 0
      %346 = vmatpush.bf16.msra.mxu0 0
      %347 = vmatpush.bf16.msra.mxu0 0
      %348 = vmatpush.bf16.msra.mxu0 0
      %349 = vmatpush.bf16.msra.mxu0 0
      %350 = vmatpush.bf16.msra.mxu0 %v319
      %351 = vmatmul.bf16.gmra.mxu0 %v310
      %v352 = vpop.f32.mrf.mxu0
      %v353 = vadd.f32 %v255, %v352
      %v354 = vpop.f32.mrf.mxu0
      %v355 = vadd.f32 %v257, %v354
      %356 = vmatmul.bf16.gmra.mxu0 %v313
      %v357 = vpop.f32.mrf.mxu0
      %v358 = vadd.f32 %v260, %v357
      %v359 = vpop.f32.mrf.mxu0
      %v360 = vadd.f32 %v262, %v359
      %361 = vdwg.mxu0
      %362 = vmatpush.bf16.msra.mxu0 0
      %363 = vmatpush.bf16.msra.mxu0 0
      %364 = vmatpush.bf16.msra.mxu0 0
      %365 = vmatpush.bf16.msra.mxu0 0
      %366 = vmatpush.bf16.msra.mxu0 0
      %367 = vmatpush.bf16.msra.mxu0 0
      %368 = vmatpush.bf16.msra.mxu0 0
      %369 = vmatpush.bf16.msra.mxu0 %v322
      %370 = vmatmul.bf16.gmra.mxu0 %v310
      %v371 = vpop.f32.mrf.mxu0
      %v372 = vadd.f32 %v274, %v371
      %v373 = vpop.f32.mrf.mxu0
      %v374 = vadd.f32 %v276, %v373
      %375 = vmatmul.bf16.gmra.mxu0 %v313
      %v376 = vpop.f32.mrf.mxu0
      %v377 = vadd.f32 %v279, %v376
      %v378 = vpop.f32.mrf.mxu0
      %v379 = vadd.f32 %v281, %v378
      %380 = vdwg.mxu0
      %s381 = scalar_lea.vmem %s0, 32
      %v382 = vld [vmem:[%s381] sm:$0xf]
      %v383 = vld [vmem:[%s381 + $0x4] sm:$0xf]
      %v384 = vld [vmem:[%s381 + $0x8] sm:$0xf]
      %v385 = vld [vmem:[%s381 + $0xc] sm:$0x3]
      %v386 = vld [vmem:[%s165] sm:$0x3f]
      %v391 = vunpack.c.l.b16 %v382
      %v392 = vunpack.c.l.b16 %v383
      %v393 = vunpack.c.l.b16 %v384
      %v394 = vunpack.c.l.b16 %v385
      %v395 = vpack.c.b16 %v392, %v391
      %v396 = vpack.c.b16 %v394, %v393
      %398 = vst [vmem:[#allocation1] ss:$4 sm:$0xff] %v386
      %v399 = vld.sshfl [vmem:[#allocation1] sm:$0xff pattern:$0x73625140]
      %v401 = vld.sshfl [vmem:[#allocation1 + $0x8] sm:$0xff pattern:$0x73625140]
      %v403 = vld.sshfl [vmem:[#allocation1 + $0x10] sm:$0xff pattern:$0x73625140]
      %405 = vrot.lane.b32.xlu0 %v399, 109
      %v406 = vpop.permute.xlu0 %405
      %407 = vrot.lane.b32.xlu0 %v401, 109
      %v408 = vpop.permute.xlu0 %407
      %409 = vrot.lane.b32.xlu0 %v403, 109
      %v410 = vpop.permute.xlu0 %409
      %vm411 = vcmask 891904
      %v412 = vsel %vm411, %v406, %v408
      %v413 = vsel %vm411, %v408, %v410
      %v415 = vsel %vm209, %v395, 0
      %v418 = vsel %vm209, %v396, 0
      %v421 = vsel %vm216, %v412, 0
      %v424 = vsel %vm216, %v413, 0
      %v427 = vsel %vm216, %v410, 0
      %429 = vmatpush.bf16.msra.mxu0 0
      %430 = vmatpush.bf16.msra.mxu0 0
      %431 = vmatpush.bf16.msra.mxu0 0
      %432 = vmatpush.bf16.msra.mxu0 0
      %433 = vmatpush.bf16.msra.mxu0 0
      %434 = vmatpush.bf16.msra.mxu0 0
      %435 = vmatpush.bf16.msra.mxu0 0
      %436 = vmatpush.bf16.msra.mxu0 %v421
      %437 = vmatmul.bf16.gmra.mxu0 %v415
      %v438 = vpop.f32.mrf.mxu0
      %v439 = vadd.f32 0.0, %v438
      %v440 = vpop.f32.mrf.mxu0
      %v441 = vadd.f32 0.0, %v440
      %442 = vmatmul.bf16.gmra.mxu0 %v418
      %v443 = vpop.f32.mrf.mxu0
      %v444 = vadd.f32 0.0, %v443
      %v445 = vpop.f32.mrf.mxu0
      %v446 = vadd.f32 0.0, %v445
      %447 = vdwg.mxu0
      %448 = vmatpush.bf16.msra.mxu0 0
      %449 = vmatpush.bf16.msra.mxu0 0
      %450 = vmatpush.bf16.msra.mxu0 0
      %451 = vmatpush.bf16.msra.mxu0 0
      %452 = vmatpush.bf16.msra.mxu0 0
      %453 = vmatpush.bf16.msra.mxu0 0
      %454 = vmatpush.bf16.msra.mxu0 0
      %455 = vmatpush.bf16.msra.mxu0 %v424
      %456 = vmatmul.bf16.gmra.mxu0 %v415
      %v457 = vpop.f32.mrf.mxu0
      %v458 = vadd.f32 0.0, %v457
      %v459 = vpop.f32.mrf.mxu0
      %v460 = vadd.f32 0.0, %v459
      %461 = vmatmul.bf16.gmra.mxu0 %v418
      %v462 = vpop.f32.mrf.mxu0
      %v463 = vadd.f32 0.0, %v462
      %v464 = vpop.f32.mrf.mxu0
      %v465 = vadd.f32 0.0, %v464
      %466 = vdwg.mxu0
      %467 = vmatpush.bf16.msra.mxu0 0
      %468 = vmatpush.bf16.msra.mxu0 0
      %469 = vmatpush.bf16.msra.mxu0 0
      %470 = vmatpush.bf16.msra.mxu0 0
      %471 = vmatpush.bf16.msra.mxu0 0
      %472 = vmatpush.bf16.msra.mxu0 0
      %473 = vmatpush.bf16.msra.mxu0 0
      %474 = vmatpush.bf16.msra.mxu0 %v427
      %475 = vmatmul.bf16.gmra.mxu0 %v415
      %v476 = vpop.f32.mrf.mxu0
      %v477 = vadd.f32 0.0, %v476
      %v478 = vpop.f32.mrf.mxu0
      %v479 = vadd.f32 0.0, %v478
      %480 = vmatmul.bf16.gmra.mxu0 %v418
      %v481 = vpop.f32.mrf.mxu0
      %v482 = vadd.f32 0.0, %v481
      %v483 = vpop.f32.mrf.mxu0
      %v484 = vadd.f32 0.0, %v483
      %485 = vdwg.mxu0
      %v486 = vadd.f32 %v334, %v439
      %v487 = vadd.f32 %v353, %v458
      %v488 = vadd.f32 %v372, %v477
      %v489 = vadd.f32 %v336, %v441
      %v490 = vadd.f32 %v355, %v460
      %v491 = vadd.f32 %v374, %v479
      %v492 = vadd.f32 %v339, %v444
      %v493 = vadd.f32 %v358, %v463
      %v494 = vadd.f32 %v377, %v482
      %v495 = vadd.f32 %v341, %v446
      %v496 = vadd.f32 %v360, %v465
      %v497 = vadd.f32 %v379, %v484
      %s498 = scalar_lea.vmem %s0, 48
      %v499 = vld [vmem:[%s498] sm:$0xf]
      %v500 = vld [vmem:[%s498 + $0x4] sm:$0xf]
      %v501 = vld [vmem:[%s498 + $0x8] sm:$0xf]
      %v502 = vld [vmem:[%s498 + $0xc] sm:$0x3]
      %v503 = vld [vmem:[%s165] sm:$0x3f]
      %v508 = vunpack.c.l.b16 %v499
      %v509 = vunpack.c.l.b16 %v500
      %v510 = vunpack.c.l.b16 %v501
      %v511 = vunpack.c.l.b16 %v502
      %v512 = vpack.c.b16 %v509, %v508
      %v513 = vpack.c.b16 %v511, %v510
      %515 = vst [vmem:[#allocation1] ss:$4 sm:$0xff] %v503
      %v516 = vld.sshfl [vmem:[#allocation1] sm:$0xff pattern:$0x73625140]
      %v518 = vld.sshfl [vmem:[#allocation1 + $0x8] sm:$0xff pattern:$0x73625140]
      %v520 = vld.sshfl [vmem:[#allocation1 + $0x10] sm:$0xff pattern:$0x73625140]
      %522 = vrot.lane.b32.xlu0 %v516, 93
      %v523 = vpop.permute.xlu0 %522
      %524 = vrot.lane.b32.xlu0 %v518, 93
      %v525 = vpop.permute.xlu0 %524
      %526 = vrot.lane.b32.xlu0 %v520, 93
      %v527 = vpop.permute.xlu0 %526
      %vm528 = vcmask 760832
      %v529 = vsel %vm528, %v523, %v525
      %v530 = vsel %vm528, %v525, %v527
      %v532 = vsel %vm209, %v512, 0
      %v535 = vsel %vm209, %v513, 0
      %v538 = vsel %vm216, %v529, 0
      %v541 = vsel %vm216, %v530, 0
      %v544 = vsel %vm216, %v527, 0
      %546 = vmatpush.bf16.msra.mxu0 0
      %547 = vmatpush.bf16.msra.mxu0 0
      %548 = vmatpush.bf16.msra.mxu0 0
      %549 = vmatpush.bf16.msra.mxu0 0
      %550 = vmatpush.bf16.msra.mxu0 0
      %551 = vmatpush.bf16.msra.mxu0 0
      %552 = vmatpush.bf16.msra.mxu0 0
      %553 = vmatpush.bf16.msra.mxu0 %v538
      %554 = vmatmul.bf16.gmra.mxu0 %v532
      %v555 = vpop.f32.mrf.mxu0
      %v556 = vadd.f32 0.0, %v555
      %v557 = vpop.f32.mrf.mxu0
      %v558 = vadd.f32 0.0, %v557
      %559 = vmatmul.bf16.gmra.mxu0 %v535
      %v560 = vpop.f32.mrf.mxu0
      %v561 = vadd.f32 0.0, %v560
      %v562 = vpop.f32.mrf.mxu0
      %v563 = vadd.f32 0.0, %v562
      %564 = vdwg.mxu0
      %565 = vmatpush.bf16.msra.mxu0 0
      %566 = vmatpush.bf16.msra.mxu0 0
      %567 = vmatpush.bf16.msra.mxu0 0
      %568 = vmatpush.bf16.msra.mxu0 0
      %569 = vmatpush.bf16.msra.mxu0 0
      %570 = vmatpush.bf16.msra.mxu0 0
      %571 = vmatpush.bf16.msra.mxu0 0
      %572 = vmatpush.bf16.msra.mxu0 %v541
      %573 = vmatmul.bf16.gmra.mxu0 %v532
      %v574 = vpop.f32.mrf.mxu0
      %v575 = vadd.f32 0.0, %v574
      %v576 = vpop.f32.mrf.mxu0
      %v577 = vadd.f32 0.0, %v576
      %578 = vmatmul.bf16.gmra.mxu0 %v535
      %v579 = vpop.f32.mrf.mxu0
      %v580 = vadd.f32 0.0, %v579
      %v581 = vpop.f32.mrf.mxu0
      %v582 = vadd.f32 0.0, %v581
      %583 = vdwg.mxu0
      %584 = vmatpush.bf16.msra.mxu0 0
      %585 = vmatpush.bf16.msra.mxu0 0
      %586 = vmatpush.bf16.msra.mxu0 0
      %587 = vmatpush.bf16.msra.mxu0 0
      %588 = vmatpush.bf16.msra.mxu0 0
      %589 = vmatpush.bf16.msra.mxu0 0
      %590 = vmatpush.bf16.msra.mxu0 0
      %591 = vmatpush.bf16.msra.mxu0 %v544
      %592 = vmatmul.bf16.gmra.mxu0 %v532
      %v593 = vpop.f32.mrf.mxu0
      %v594 = vadd.f32 0.0, %v593
      %v595 = vpop.f32.mrf.mxu0
      %v596 = vadd.f32 0.0, %v595
      %597 = vmatmul.bf16.gmra.mxu0 %v535
      %v598 = vpop.f32.mrf.mxu0
      %v599 = vadd.f32 0.0, %v598
      %v600 = vpop.f32.mrf.mxu0
      %v601 = vadd.f32 0.0, %v600
      %602 = vdwg.mxu0
      %v603 = vadd.f32 %v486, %v556
      %v604 = vadd.f32 %v487, %v575
      %v605 = vadd.f32 %v488, %v594
      %v606 = vadd.f32 %v489, %v558
      %v607 = vadd.f32 %v490, %v577
      %v608 = vadd.f32 %v491, %v596
      %v609 = vadd.f32 %v492, %v561
      %v610 = vadd.f32 %v493, %v580
      %v611 = vadd.f32 %v494, %v599
      %v612 = vadd.f32 %v495, %v563
      %v613 = vadd.f32 %v496, %v582
      %v614 = vadd.f32 %v497, %v601
      %s615 = scalar_lea.vmem %s0, 64
      %v616 = vld [vmem:[%s615] sm:$0xf]
      %v617 = vld [vmem:[%s615 + $0x4] sm:$0xf]
      %v618 = vld [vmem:[%s615 + $0x8] sm:$0xf]
      %v619 = vld [vmem:[%s615 + $0xc] sm:$0x3]
      %v620 = vld [vmem:[%s165] sm:$0x3f]
      %v625 = vunpack.c.l.b16 %v616
      %v626 = vunpack.c.l.b16 %v617
      %v627 = vunpack.c.l.b16 %v618
      %v628 = vunpack.c.l.b16 %v619
      %v629 = vpack.c.b16 %v626, %v625
      %v630 = vpack.c.b16 %v628, %v627
      %632 = vst [vmem:[#allocation1] ss:$4 sm:$0xff] %v620
      %v633 = vld.sshfl [vmem:[#allocation1] sm:$0xff pattern:$0x73625140]
      %v635 = vld.sshfl [vmem:[#allocation1 + $0x8] sm:$0xff pattern:$0x73625140]
      %v637 = vld.sshfl [vmem:[#allocation1 + $0x10] sm:$0xff pattern:$0x73625140]
      %639 = vrot.lane.b32.xlu0 %v633, 92
      %v640 = vpop.permute.xlu0 %639
      %641 = vrot.lane.b32.xlu0 %v635, 92
      %v642 = vpop.permute.xlu0 %641
      %643 = vrot.lane.b32.xlu0 %v637, 92
      %v644 = vpop.permute.xlu0 %643
      %vm645 = vcmask 752640
      %v646 = vsel %vm645, %v640, %v642
      %v647 = vsel %vm645, %v642, %v644
      %v649 = vsel %vm209, %v629, 0
      %v652 = vsel %vm209, %v630, 0
      %v655 = vsel %vm216, %v646, 0
      %v658 = vsel %vm216, %v647, 0
      %v661 = vsel %vm216, %v644, 0
      %663 = vmatpush.bf16.msra.mxu0 0
      %664 = vmatpush.bf16.msra.mxu0 0
      %665 = vmatpush.bf16.msra.mxu0 0
      %666 = vmatpush.bf16.msra.mxu0 0
      %667 = vmatpush.bf16.msra.mxu0 0
      %668 = vmatpush.bf16.msra.mxu0 0
      %669 = vmatpush.bf16.msra.mxu0 0
      %670 = vmatpush.bf16.msra.mxu0 %v655
      %671 = vmatmul.bf16.gmra.mxu0 %v649
      %v672 = vpop.f32.mrf.mxu0
      %v673 = vadd.f32 0.0, %v672
      %v674 = vpop.f32.mrf.mxu0
      %v675 = vadd.f32 0.0, %v674
      %676 = vmatmul.bf16.gmra.mxu0 %v652
      %v677 = vpop.f32.mrf.mxu0
      %v678 = vadd.f32 0.0, %v677
      %v679 = vpop.f32.mrf.mxu0
      %v680 = vadd.f32 0.0, %v679
      %681 = vdwg.mxu0
      %682 = vmatpush.bf16.msra.mxu0 0
      %683 = vmatpush.bf16.msra.mxu0 0
      %684 = vmatpush.bf16.msra.mxu0 0
      %685 = vmatpush.bf16.msra.mxu0 0
      %686 = vmatpush.bf16.msra.mxu0 0
      %687 = vmatpush.bf16.msra.mxu0 0
      %688 = vmatpush.bf16.msra.mxu0 0
      %689 = vmatpush.bf16.msra.mxu0 %v658
      %690 = vmatmul.bf16.gmra.mxu0 %v649
      %v691 = vpop.f32.mrf.mxu0
      %v692 = vadd.f32 0.0, %v691
      %v693 = vpop.f32.mrf.mxu0
      %v694 = vadd.f32 0.0, %v693
      %695 = vmatmul.bf16.gmra.mxu0 %v652
      %v696 = vpop.f32.mrf.mxu0
      %v697 = vadd.f32 0.0, %v696
      %v698 = vpop.f32.mrf.mxu0
      %v699 = vadd.f32 0.0, %v698
      %700 = vdwg.mxu0
      %701 = vmatpush.bf16.msra.mxu0 0
      %702 = vmatpush.bf16.msra.mxu0 0
      %703 = vmatpush.bf16.msra.mxu0 0
      %704 = vmatpush.bf16.msra.mxu0 0
      %705 = vmatpush.bf16.msra.mxu0 0
      %706 = vmatpush.bf16.msra.mxu0 0
      %707 = vmatpush.bf16.msra.mxu0 0
      %708 = vmatpush.bf16.msra.mxu0 %v661
      %709 = vmatmul.bf16.gmra.mxu0 %v649
      %v710 = vpop.f32.mrf.mxu0
      %v711 = vadd.f32 0.0, %v710
      %v712 = vpop.f32.mrf.mxu0
      %v713 = vadd.f32 0.0, %v712
      %714 = vmatmul.bf16.gmra.mxu0 %v652
      %v715 = vpop.f32.mrf.mxu0
      %v716 = vadd.f32 0.0, %v715
      %v717 = vpop.f32.mrf.mxu0
      %v718 = vadd.f32 0.0, %v717
      %719 = vdwg.mxu0
      %v720 = vadd.f32 %v603, %v673
      %v721 = vadd.f32 %v604, %v692
      %v722 = vadd.f32 %v605, %v711
      %v723 = vadd.f32 %v606, %v675
      %v724 = vadd.f32 %v607, %v694
      %v725 = vadd.f32 %v608, %v713
      %v726 = vadd.f32 %v609, %v678
      %v727 = vadd.f32 %v610, %v697
      %v728 = vadd.f32 %v611, %v716
      %v729 = vadd.f32 %v612, %v680
      %v730 = vadd.f32 %v613, %v699
      %v731 = vadd.f32 %v614, %v718
      %s732 = scalar_lea.vmem %s0, 80
      %v733 = vld [vmem:[%s732] sm:$0xf]
      %v734 = vld [vmem:[%s732 + $0x4] sm:$0xf]
      %v735 = vld [vmem:[%s732 + $0x8] sm:$0xf]
      %v736 = vld [vmem:[%s732 + $0xc] sm:$0x3]
      %v737 = vld [vmem:[%s165] sm:$0x3f]
      %v742 = vunpack.c.l.b16 %v733
      %v743 = vunpack.c.l.b16 %v734
      %v744 = vunpack.c.l.b16 %v735
      %v745 = vunpack.c.l.b16 %v736
      %v746 = vpack.c.b16 %v743, %v742
      %v747 = vpack.c.b16 %v745, %v744
      %749 = vst [vmem:[#allocation1] ss:$4 sm:$0xff] %v737
      %v750 = vld.sshfl [vmem:[#allocation1] sm:$0xff pattern:$0x73625140]
      %v752 = vld.sshfl [vmem:[#allocation1 + $0x8] sm:$0xff pattern:$0x73625140]
      %v754 = vld.sshfl [vmem:[#allocation1 + $0x10] sm:$0xff pattern:$0x73625140]
      %756 = vrot.lane.b32.xlu0 %v750, 91
      %v757 = vpop.permute.xlu0 %756
      %758 = vrot.lane.b32.xlu0 %v752, 91
      %v759 = vpop.permute.xlu0 %758
      %760 = vrot.lane.b32.xlu0 %v754, 91
      %v761 = vpop.permute.xlu0 %760
      %vm762 = vcmask 744448
      %v763 = vsel %vm762, %v757, %v759
      %v764 = vsel %vm762, %v759, %v761
      %v766 = vsel %vm209, %v746, 0
      %v769 = vsel %vm209, %v747, 0
      %v772 = vsel %vm216, %v763, 0
      %v775 = vsel %vm216, %v764, 0
      %v778 = vsel %vm216, %v761, 0
      %780 = vmatpush.bf16.msra.mxu0 0
      %781 = vmatpush.bf16.msra.mxu0 0
      %782 = vmatpush.bf16.msra.mxu0 0
      %783 = vmatpush.bf16.msra.mxu0 0
      %784 = vmatpush.bf16.msra.mxu0 0
      %785 = vmatpush.bf16.msra.mxu0 0
      %786 = vmatpush.bf16.msra.mxu0 0
      %787 = vmatpush.bf16.msra.mxu0 %v772
      %788 = vmatmul.bf16.gmra.mxu0 %v766
      %v789 = vpop.f32.mrf.mxu0
      %v790 = vadd.f32 0.0, %v789
      %v791 = vpop.f32.mrf.mxu0
      %v792 = vadd.f32 0.0, %v791
      %793 = vmatmul.bf16.gmra.mxu0 %v769
      %v794 = vpop.f32.mrf.mxu0
      %v795 = vadd.f32 0.0, %v794
      %v796 = vpop.f32.mrf.mxu0
      %v797 = vadd.f32 0.0, %v796
      %798 = vdwg.mxu0
      %799 = vmatpush.bf16.msra.mxu0 0
      %800 = vmatpush.bf16.msra.mxu0 0
      %801 = vmatpush.bf16.msra.mxu0 0
      %802 = vmatpush.bf16.msra.mxu0 0
      %803 = vmatpush.bf16.msra.mxu0 0
      %804 = vmatpush.bf16.msra.mxu0 0
      %805 = vmatpush.bf16.msra.mxu0 0
      %806 = vmatpush.bf16.msra.mxu0 %v775
      %807 = vmatmul.bf16.gmra.mxu0 %v766
      %v808 = vpop.f32.mrf.mxu0
      %v809 = vadd.f32 0.0, %v808
      %v810 = vpop.f32.mrf.mxu0
      %v811 = vadd.f32 0.0, %v810
      %812 = vmatmul.bf16.gmra.mxu0 %v769
      %v813 = vpop.f32.mrf.mxu0
      %v814 = vadd.f32 0.0, %v813
      %v815 = vpop.f32.mrf.mxu0
      %v816 = vadd.f32 0.0, %v815
      %817 = vdwg.mxu0
      %818 = vmatpush.bf16.msra.mxu0 0
      %819 = vmatpush.bf16.msra.mxu0 0
      %820 = vmatpush.bf16.msra.mxu0 0
      %821 = vmatpush.bf16.msra.mxu0 0
      %822 = vmatpush.bf16.msra.mxu0 0
      %823 = vmatpush.bf16.msra.mxu0 0
      %824 = vmatpush.bf16.msra.mxu0 0
      %825 = vmatpush.bf16.msra.mxu0 %v778
      %826 = vmatmul.bf16.gmra.mxu0 %v766
      %v827 = vpop.f32.mrf.mxu0
      %v828 = vadd.f32 0.0, %v827
      %v829 = vpop.f32.mrf.mxu0
      %v830 = vadd.f32 0.0, %v829
      %831 = vmatmul.bf16.gmra.mxu0 %v769
      %v832 = vpop.f32.mrf.mxu0
      %v833 = vadd.f32 0.0, %v832
      %v834 = vpop.f32.mrf.mxu0
      %v835 = vadd.f32 0.0, %v834
      %836 = vdwg.mxu0
      %v837 = vadd.f32 %v720, %v790
      %v838 = vadd.f32 %v721, %v809
      %v839 = vadd.f32 %v722, %v828
      %v840 = vadd.f32 %v723, %v792
      %v841 = vadd.f32 %v724, %v811
      %v842 = vadd.f32 %v725, %v830
      %v843 = vadd.f32 %v726, %v795
      %v844 = vadd.f32 %v727, %v814
      %v845 = vadd.f32 %v728, %v833
      %v846 = vadd.f32 %v729, %v797
      %v847 = vadd.f32 %v730, %v816
      %v848 = vadd.f32 %v731, %v835
      %s849 = scalar_lea.vmem %s0, 96
      %v850 = vld [vmem:[%s849] sm:$0xf]
      %v851 = vld [vmem:[%s849 + $0x4] sm:$0xf]
      %v852 = vld [vmem:[%s849 + $0x8] sm:$0xf]
      %v853 = vld [vmem:[%s849 + $0xc] sm:$0x3]
      %v854 = vld [vmem:[%s165] sm:$0x3f]
      %v859 = vunpack.c.l.b16 %v850
      %v860 = vunpack.c.l.b16 %v851
      %v861 = vunpack.c.l.b16 %v852
      %v862 = vunpack.c.l.b16 %v853
      %v863 = vpack.c.b16 %v860, %v859
      %v864 = vpack.c.b16 %v862, %v861
      %866 = vst [vmem:[#allocation1] ss:$4 sm:$0xff] %v854
      %v867 = vld.sshfl [vmem:[#allocation1] sm:$0xff pattern:$0x73625140]
      %v869 = vld.sshfl [vmem:[#allocation1 + $0x8] sm:$0xff pattern:$0x73625140]
      %v871 = vld.sshfl [vmem:[#allocation1 + $0x10] sm:$0xff pattern:$0x73625140]
      %873 = vrot.lane.b32.xlu0 %v867, 75
      %v874 = vpop.permute.xlu0 %873
      %875 = vrot.lane.b32.xlu0 %v869, 75
      %v876 = vpop.permute.xlu0 %875
      %877 = vrot.lane.b32.xlu0 %v871, 75
      %v878 = vpop.permute.xlu0 %877
      %vm879 = vcmask 613376
      %v880 = vsel %vm879, %v874, %v876
      %v881 = vsel %vm879, %v876, %v878
      %v883 = vsel %vm209, %v863, 0
      %v886 = vsel %vm209, %v864, 0
      %v889 = vsel %vm216, %v880, 0
      %v892 = vsel %vm216, %v881, 0
      %v895 = vsel %vm216, %v878, 0
      %897 = vmatpush.bf16.msra.mxu0 0
      %898 = vmatpush.bf16.msra.mxu0 0
      %899 = vmatpush.bf16.msra.mxu0 0
      %900 = vmatpush.bf16.msra.mxu0 0
      %901 = vmatpush.bf16.msra.mxu0 0
      %902 = vmatpush.bf16.msra.mxu0 0
      %903 = vmatpush.bf16.msra.mxu0 0
      %904 = vmatpush.bf16.msra.mxu0 %v889
      %905 = vmatmul.bf16.gmra.mxu0 %v883
      %v906 = vpop.f32.mrf.mxu0
      %v907 = vadd.f32 0.0, %v906
      %v908 = vpop.f32.mrf.mxu0
      %v909 = vadd.f32 0.0, %v908
      %910 = vmatmul.bf16.gmra.mxu0 %v886
      %v911 = vpop.f32.mrf.mxu0
      %v912 = vadd.f32 0.0, %v911
      %v913 = vpop.f32.mrf.mxu0
      %v914 = vadd.f32 0.0, %v913
      %915 = vdwg.mxu0
      %916 = vmatpush.bf16.msra.mxu0 0
      %917 = vmatpush.bf16.msra.mxu0 0
      %918 = vmatpush.bf16.msra.mxu0 0
      %919 = vmatpush.bf16.msra.mxu0 0
      %920 = vmatpush.bf16.msra.mxu0 0
      %921 = vmatpush.bf16.msra.mxu0 0
      %922 = vmatpush.bf16.msra.mxu0 0
      %923 = vmatpush.bf16.msra.mxu0 %v892
      %924 = vmatmul.bf16.gmra.mxu0 %v883
      %v925 = vpop.f32.mrf.mxu0
      %v926 = vadd.f32 0.0, %v925
      %v927 = vpop.f32.mrf.mxu0
      %v928 = vadd.f32 0.0, %v927
      %929 = vmatmul.bf16.gmra.mxu0 %v886
      %v930 = vpop.f32.mrf.mxu0
      %v931 = vadd.f32 0.0, %v930
      %v932 = vpop.f32.mrf.mxu0
      %v933 = vadd.f32 0.0, %v932
      %934 = vdwg.mxu0
      %935 = vmatpush.bf16.msra.mxu0 0
      %936 = vmatpush.bf16.msra.mxu0 0
      %937 = vmatpush.bf16.msra.mxu0 0
      %938 = vmatpush.bf16.msra.mxu0 0
      %939 = vmatpush.bf16.msra.mxu0 0
      %940 = vmatpush.bf16.msra.mxu0 0
      %941 = vmatpush.bf16.msra.mxu0 0
      %942 = vmatpush.bf16.msra.mxu0 %v895
      %943 = vmatmul.bf16.gmra.mxu0 %v883
      %v944 = vpop.f32.mrf.mxu0
      %v945 = vadd.f32 0.0, %v944
      %v946 = vpop.f32.mrf.mxu0
      %v947 = vadd.f32 0.0, %v946
      %948 = vmatmul.bf16.gmra.mxu0 %v886
      %v949 = vpop.f32.mrf.mxu0
      %v950 = vadd.f32 0.0, %v949
      %v951 = vpop.f32.mrf.mxu0
      %v952 = vadd.f32 0.0, %v951
      %953 = vdwg.mxu0
      %v954 = vadd.f32 %v837, %v907
      %v955 = vadd.f32 %v838, %v926
      %v956 = vadd.f32 %v839, %v945
      %v957 = vadd.f32 %v840, %v909
      %v958 = vadd.f32 %v841, %v928
      %v959 = vadd.f32 %v842, %v947
      %v960 = vadd.f32 %v843, %v912
      %v961 = vadd.f32 %v844, %v931
      %v962 = vadd.f32 %v845, %v950
      %v963 = vadd.f32 %v846, %v914
      %v964 = vadd.f32 %v847, %v933
      %v965 = vadd.f32 %v848, %v952
      %s966 = scalar_lea.vmem %s0, 112
      %v967 = vld [vmem:[%s966] sm:$0xf]
      %v968 = vld [vmem:[%s966 + $0x4] sm:$0xf]
      %v969 = vld [vmem:[%s966 + $0x8] sm:$0xf]
      %v970 = vld [vmem:[%s966 + $0xc] sm:$0x3]
      %v971 = vld [vmem:[%s165] sm:$0x3f]
      %v976 = vunpack.c.l.b16 %v967
      %v977 = vunpack.c.l.b16 %v968
      %v978 = vunpack.c.l.b16 %v969
      %v979 = vunpack.c.l.b16 %v970
      %v980 = vpack.c.b16 %v977, %v976
      %v981 = vpack.c.b16 %v979, %v978
      %983 = vst [vmem:[#allocation1] ss:$4 sm:$0xff] %v971
      %v984 = vld.sshfl [vmem:[#allocation1] sm:$0xff pattern:$0x73625140]
      %v986 = vld.sshfl [vmem:[#allocation1 + $0x8] sm:$0xff pattern:$0x73625140]
      %v988 = vld.sshfl [vmem:[#allocation1 + $0x10] sm:$0xff pattern:$0x73625140]
      %990 = vrot.lane.b32.xlu0 %v984, 74
      %v991 = vpop.permute.xlu0 %990
      %992 = vrot.lane.b32.xlu0 %v986, 74
      %v993 = vpop.permute.xlu0 %992
      %994 = vrot.lane.b32.xlu0 %v988, 74
      %v995 = vpop.permute.xlu0 %994
      %vm996 = vcmask 605184
      %v997 = vsel %vm996, %v991, %v993
      %v998 = vsel %vm996, %v993, %v995
      %v1000 = vsel %vm209, %v980, 0
      %v1003 = vsel %vm209, %v981, 0
      %v1006 = vsel %vm216, %v997, 0
      %v1009 = vsel %vm216, %v998, 0
      %v1012 = vsel %vm216, %v995, 0
      %1014 = vmatpush.bf16.msra.mxu0 0
      %1015 = vmatpush.bf16.msra.mxu0 0
      %1016 = vmatpush.bf16.msra.mxu0 0
      %1017 = vmatpush.bf16.msra.mxu0 0
      %1018 = vmatpush.bf16.msra.mxu0 0
      %1019 = vmatpush.bf16.msra.mxu0 0
      %1020 = vmatpush.bf16.msra.mxu0 0
      %1021 = vmatpush.bf16.msra.mxu0 %v1006
      %1022 = vmatmul.bf16.gmra.mxu0 %v1000
      %v1023 = vpop.f32.mrf.mxu0
      %v1024 = vadd.f32 0.0, %v1023
      %v1025 = vpop.f32.mrf.mxu0
      %v1026 = vadd.f32 0.0, %v1025
      %1027 = vmatmul.bf16.gmra.mxu0 %v1003
      %v1028 = vpop.f32.mrf.mxu0
      %v1029 = vadd.f32 0.0, %v1028
      %v1030 = vpop.f32.mrf.mxu0
      %v1031 = vadd.f32 0.0, %v1030
      %1032 = vdwg.mxu0
      %1033 = vmatpush.bf16.msra.mxu0 0
      %1034 = vmatpush.bf16.msra.mxu0 0
      %1035 = vmatpush.bf16.msra.mxu0 0
      %1036 = vmatpush.bf16.msra.mxu0 0
      %1037 = vmatpush.bf16.msra.mxu0 0
      %1038 = vmatpush.bf16.msra.mxu0 0
      %1039 = vmatpush.bf16.msra.mxu0 0
      %1040 = vmatpush.bf16.msra.mxu0 %v1009
      %1041 = vmatmul.bf16.gmra.mxu0 %v1000
      %v1042 = vpop.f32.mrf.mxu0
      %v1043 = vadd.f32 0.0, %v1042
      %v1044 = vpop.f32.mrf.mxu0
      %v1045 = vadd.f32 0.0, %v1044
      %1046 = vmatmul.bf16.gmra.mxu0 %v1003
      %v1047 = vpop.f32.mrf.mxu0
      %v1048 = vadd.f32 0.0, %v1047
      %v1049 = vpop.f32.mrf.mxu0
      %v1050 = vadd.f32 0.0, %v1049
      %1051 = vdwg.mxu0
      %1052 = vmatpush.bf16.msra.mxu0 0
      %1053 = vmatpush.bf16.msra.mxu0 0
      %1054 = vmatpush.bf16.msra.mxu0 0
      %1055 = vmatpush.bf16.msra.mxu0 0
      %1056 = vmatpush.bf16.msra.mxu0 0
      %1057 = vmatpush.bf16.msra.mxu0 0
      %1058 = vmatpush.bf16.msra.mxu0 0
      %1059 = vmatpush.bf16.msra.mxu0 %v1012
      %1060 = vmatmul.bf16.gmra.mxu0 %v1000
      %v1061 = vpop.f32.mrf.mxu0
      %v1062 = vadd.f32 0.0, %v1061
      %v1063 = vpop.f32.mrf.mxu0
      %v1064 = vadd.f32 0.0, %v1063
      %1065 = vmatmul.bf16.gmra.mxu0 %v1003
      %v1066 = vpop.f32.mrf.mxu0
      %v1067 = vadd.f32 0.0, %v1066
      %v1068 = vpop.f32.mrf.mxu0
      %v1069 = vadd.f32 0.0, %v1068
      %1070 = vdwg.mxu0
      %v1071 = vadd.f32 %v954, %v1024
      %v1072 = vadd.f32 %v955, %v1043
      %v1073 = vadd.f32 %v956, %v1062
      %v1074 = vadd.f32 %v957, %v1026
      %v1075 = vadd.f32 %v958, %v1045
      %v1076 = vadd.f32 %v959, %v1064
      %v1077 = vadd.f32 %v960, %v1029
      %v1078 = vadd.f32 %v961, %v1048
      %v1079 = vadd.f32 %v962, %v1067
      %v1080 = vadd.f32 %v963, %v1031
      %v1081 = vadd.f32 %v964, %v1050
      %v1082 = vadd.f32 %v965, %v1069
      %s1083 = scalar_lea.vmem %s0, 128
      %v1084 = vld [vmem:[%s1083] sm:$0xf]
      %v1085 = vld [vmem:[%s1083 + $0x4] sm:$0xf]
      %v1086 = vld [vmem:[%s1083 + $0x8] sm:$0xf]
      %v1087 = vld [vmem:[%s1083 + $0xc] sm:$0x3]
      %v1088 = vld [vmem:[%s165] sm:$0x3f]
      %v1093 = vunpack.c.l.b16 %v1084
      %v1094 = vunpack.c.l.b16 %v1085
      %v1095 = vunpack.c.l.b16 %v1086
      %v1096 = vunpack.c.l.b16 %v1087
      %v1097 = vpack.c.b16 %v1094, %v1093
      %v1098 = vpack.c.b16 %v1096, %v1095
      %1100 = vst [vmem:[#allocation1] ss:$4 sm:$0xff] %v1088
      %v1101 = vld.sshfl [vmem:[#allocation1] sm:$0xff pattern:$0x73625140]
      %v1103 = vld.sshfl [vmem:[#allocation1 + $0x8] sm:$0xff pattern:$0x73625140]
      %v1105 = vld.sshfl [vmem:[#allocation1 + $0x10] sm:$0xff pattern:$0x73625140]
      %1107 = vrot.lane.b32.xlu0 %v1101, 73
      %v1108 = vpop.permute.xlu0 %1107
      %1109 = vrot.lane.b32.xlu0 %v1103, 73
      %v1110 = vpop.permute.xlu0 %1109
      %1111 = vrot.lane.b32.xlu0 %v1105, 73
      %v1112 = vpop.permute.xlu0 %1111
      %vm1113 = vcmask 596992
      %v1114 = vsel %vm1113, %v1108, %v1110
      %v1115 = vsel %vm1113, %v1110, %v1112
      %v1117 = vsel %vm209, %v1097, 0
      %v1120 = vsel %vm209, %v1098, 0
      %v1123 = vsel %vm216, %v1114, 0
      %v1126 = vsel %vm216, %v1115, 0
      %v1129 = vsel %vm216, %v1112, 0
      %1131 = vmatpush.bf16.msra.mxu0 0
      %1132 = vmatpush.bf16.msra.mxu0 0
      %1133 = vmatpush.bf16.msra.mxu0 0
      %1134 = vmatpush.bf16.msra.mxu0 0
      %1135 = vmatpush.bf16.msra.mxu0 0
      %1136 = vmatpush.bf16.msra.mxu0 0
      %1137 = vmatpush.bf16.msra.mxu0 0
      %1138 = vmatpush.bf16.msra.mxu0 %v1123
      %1139 = vmatmul.bf16.gmra.mxu0 %v1117
      %v1140 = vpop.f32.mrf.mxu0
      %v1141 = vadd.f32 0.0, %v1140
      %v1142 = vpop.f32.mrf.mxu0
      %v1143 = vadd.f32 0.0, %v1142
      %1144 = vmatmul.bf16.gmra.mxu0 %v1120
      %v1145 = vpop.f32.mrf.mxu0
      %v1146 = vadd.f32 0.0, %v1145
      %v1147 = vpop.f32.mrf.mxu0
      %v1148 = vadd.f32 0.0, %v1147
      %1149 = vdwg.mxu0
      %1150 = vmatpush.bf16.msra.mxu0 0
      %1151 = vmatpush.bf16.msra.mxu0 0
      %1152 = vmatpush.bf16.msra.mxu0 0
      %1153 = vmatpush.bf16.msra.mxu0 0
      %1154 = vmatpush.bf16.msra.mxu0 0
      %1155 = vmatpush.bf16.msra.mxu0 0
      %1156 = vmatpush.bf16.msra.mxu0 0
      %1157 = vmatpush.bf16.msra.mxu0 %v1126
      %1158 = vmatmul.bf16.gmra.mxu0 %v1117
      %v1159 = vpop.f32.mrf.mxu0
      %v1160 = vadd.f32 0.0, %v1159
      %v1161 = vpop.f32.mrf.mxu0
      %v1162 = vadd.f32 0.0, %v1161
      %1163 = vmatmul.bf16.gmra.mxu0 %v1120
      %v1164 = vpop.f32.mrf.mxu0
      %v1165 = vadd.f32 0.0, %v1164
      %v1166 = vpop.f32.mrf.mxu0
      %v1167 = vadd.f32 0.0, %v1166
      %1168 = vdwg.mxu0
      %1169 = vmatpush.bf16.msra.mxu0 0
      %1170 = vmatpush.bf16.msra.mxu0 0
      %1171 = vmatpush.bf16.msra.mxu0 0
      %1172 = vmatpush.bf16.msra.mxu0 0
      %1173 = vmatpush.bf16.msra.mxu0 0
      %1174 = vmatpush.bf16.msra.mxu0 0
      %1175 = vmatpush.bf16.msra.mxu0 0
      %1176 = vmatpush.bf16.msra.mxu0 %v1129
      %1177 = vmatmul.bf16.gmra.mxu0 %v1117
      %v1178 = vpop.f32.mrf.mxu0
      %v1179 = vadd.f32 0.0, %v1178
      %v1180 = vpop.f32.mrf.mxu0
      %v1181 = vadd.f32 0.0, %v1180
      %1182 = vmatmul.bf16.gmra.mxu0 %v1120
      %v1183 = vpop.f32.mrf.mxu0
      %v1184 = vadd.f32 0.0, %v1183
      %v1185 = vpop.f32.mrf.mxu0
      %v1186 = vadd.f32 0.0, %v1185
      %1187 = vdwg.mxu0
      %v1188 = vadd.f32 %v1071, %v1141
      %v1189 = vadd.f32 %v1072, %v1160
      %v1190 = vadd.f32 %v1073, %v1179
      %v1191 = vadd.f32 %v1074, %v1143
      %v1192 = vadd.f32 %v1075, %v1162
      %v1193 = vadd.f32 %v1076, %v1181
      %v1194 = vadd.f32 %v1077, %v1146
      %v1195 = vadd.f32 %v1078, %v1165
      %v1196 = vadd.f32 %v1079, %v1184
      %v1197 = vadd.f32 %v1080, %v1148
      %v1198 = vadd.f32 %v1081, %v1167
      %v1199 = vadd.f32 %v1082, %v1186
      %v1200 = vld [vmem:[%s1] sm:$0xff]
      %v1201 = vld [vmem:[%s1 + $0x8] sm:$0xff]
      %v1202 = vld [vmem:[%s1 + $0x10] sm:$0xff]
      %v1203 = vld [vmem:[%s1 + $0x18] sm:$0x7]
      %1205 = vset.pattern.permute.xlu0 0
      %1206 = vperm.xlu0 %1205, %v1200
      %v1207 = vpop.permute.xlu0 %1206
      %1210 = vset.pattern.permute.xlu0 0
      %1211 = vperm.xlu0 %1210, %v1201
      %v1212 = vpop.permute.xlu0 %1211
      %1215 = vset.pattern.permute.xlu0 0
      %1216 = vperm.xlu0 %1215, %v1202
      %v1217 = vpop.permute.xlu0 %1216
      %1220 = vset.pattern.permute.xlu0 0
      %1221 = vperm.xlu0 %1220, %v1203
      %v1222 = vpop.permute.xlu0 %1221
      %v1224 = vadd.f32 %v1188, %v1207
      %v1225 = vadd.f32 %v1189, %v1207
      %v1226 = vadd.f32 %v1190, %v1207
      %v1227 = vadd.f32 %v1191, %v1212
      %v1228 = vadd.f32 %v1192, %v1212
      %v1229 = vadd.f32 %v1193, %v1212
      %v1230 = vadd.f32 %v1194, %v1217
      %v1231 = vadd.f32 %v1195, %v1217
      %v1232 = vadd.f32 %v1196, %v1217
      %v1233 = vadd.f32 %v1197, %v1222
      %v1234 = vadd.f32 %v1198, %v1222
      %v1235 = vadd.f32 %v1199, %v1222
      %v1236 = vlaneseq
      %v1237 = vshrl.u32 %v1236, 7
      %v1238 = vadd.s32 %v1237, 8
      %v1239 = vadd.s32 %v1237, 16
      %v1240 = vadd.s32 %v1237, 24
      %vm1241 = vcmp.ge.s32.totalorder %v1237, 18
      %vm1242 = vcmp.ge.s32.totalorder %v1238, 18
      %vm1243 = vcmp.ge.s32.totalorder %v1239, 18
      %vm1244 = vcmp.ge.s32.totalorder %v1240, 18
      %v1245 = vxor.u32 %v1224, 2147483648
      %v1246 = vxor.u32 %v1225, 2147483648
      %v1247 = vxor.u32 %v1226, 2147483648
      %v1248 = vxor.u32 %v1227, 2147483648
      %v1249 = vxor.u32 %v1228, 2147483648
      %v1250 = vxor.u32 %v1229, 2147483648
      %v1251 = vxor.u32 %v1230, 2147483648
      %v1252 = vxor.u32 %v1231, 2147483648
      %v1253 = vxor.u32 %v1232, 2147483648
      %v1254 = vxor.u32 %v1233, 2147483648
      %v1255 = vxor.u32 %v1234, 2147483648
      %v1256 = vxor.u32 %v1235, 2147483648
      %v1257 = vmul.f32 %v1245, 1.442695
      %v1258 = vpow.pop %v1257
      %v1259 = vmul.f32 %v1246, 1.442695
      %v1260 = vpow.pop %v1259
      %v1261 = vmul.f32 %v1247, 1.442695
      %v1262 = vpow.pop %v1261
      %v1263 = vmul.f32 %v1248, 1.442695
      %v1264 = vpow.pop %v1263
      %v1265 = vmul.f32 %v1249, 1.442695
      %v1266 = vpow.pop %v1265
      %v1267 = vmul.f32 %v1250, 1.442695
      %v1268 = vpow.pop %v1267
      %v1269 = vmul.f32 %v1251, 1.442695
      %v1270 = vpow.pop %v1269
      %v1271 = vmul.f32 %v1252, 1.442695
      %v1272 = vpow.pop %v1271
      %v1273 = vmul.f32 %v1253, 1.442695
      %v1274 = vpow.pop %v1273
      %v1275 = vmul.f32 %v1254, 1.442695
      %v1276 = vpow.pop %v1275
      %v1277 = vmul.f32 %v1255, 1.442695
      %v1278 = vpow.pop %v1277
      %v1279 = vmul.f32 %v1256, 1.442695
      %v1280 = vpow.pop %v1279
      %v1281 = vadd.f32 %v1258, 1.0
      %v1282 = vadd.f32 %v1260, 1.0
      %v1283 = vadd.f32 %v1262, 1.0
      %v1284 = vadd.f32 %v1264, 1.0
      %v1285 = vadd.f32 %v1266, 1.0
      %v1286 = vadd.f32 %v1268, 1.0
      %v1287 = vadd.f32 %v1270, 1.0
      %v1288 = vadd.f32 %v1272, 1.0
      %v1289 = vadd.f32 %v1274, 1.0
      %v1290 = vadd.f32 %v1276, 1.0
      %v1291 = vadd.f32 %v1278, 1.0
      %v1292 = vadd.f32 %v1280, 1.0
      %v1293 = vrcp.pop %v1281
      %v1294 = vmul.f32 %v1281, %v1293
      %v1295 = vsub.f32 1.0, %v1294
      %v1296 = vmul.f32 %v1293, %v1295
      %v1297 = vadd.f32 %v1293, %v1296
      %vm1298 = vweird.f32 %v1281
      %vm1299 = vweird.f32 %v1293
      %vm1300 = vmor %vm1298, %vm1299
      %v1301 = vsel %vm1300, %v1293, %v1297
      %v1302 = vand.u32 2147483647, %v1281
      %vm1303 = vcmp.eq.f32.partialorder %v1302, 8.507059e+37
      %v1304 = vand.u32 %v1281, 2147483648
      %v1305 = vor.u32 1.1754944e-38, %v1304
      %v1306 = vsel %vm1303, %v1305, %v1301
      %v1307 = vmul.f32 1.0, %v1306
      %v1308 = vrcp.pop %v1282
      %v1309 = vmul.f32 %v1282, %v1308
      %v1310 = vsub.f32 1.0, %v1309
      %v1311 = vmul.f32 %v1308, %v1310
      %v1312 = vadd.f32 %v1308, %v1311
      %vm1313 = vweird.f32 %v1282
      %vm1314 = vweird.f32 %v1308
      %vm1315 = vmor %vm1313, %vm1314
      %v1316 = vsel %vm1315, %v1308, %v1312
      %v1317 = vand.u32 2147483647, %v1282
      %vm1318 = vcmp.eq.f32.partialorder %v1317, 8.507059e+37
      %v1319 = vand.u32 %v1282, 2147483648
      %v1320 = vor.u32 1.1754944e-38, %v1319
      %v1321 = vsel %vm1318, %v1320, %v1316
      %v1322 = vmul.f32 1.0, %v1321
      %v1323 = vrcp.pop %v1283
      %v1324 = vmul.f32 %v1283, %v1323
      %v1325 = vsub.f32 1.0, %v1324
      %v1326 = vmul.f32 %v1323, %v1325
      %v1327 = vadd.f32 %v1323, %v1326
      %vm1328 = vweird.f32 %v1283
      %vm1329 = vweird.f32 %v1323
      %vm1330 = vmor %vm1328, %vm1329
      %v1331 = vsel %vm1330, %v1323, %v1327
      %v1332 = vand.u32 2147483647, %v1283
      %vm1333 = vcmp.eq.f32.partialorder %v1332, 8.507059e+37
      %v1334 = vand.u32 %v1283, 2147483648
      %v1335 = vor.u32 1.1754944e-38, %v1334
      %v1336 = vsel %vm1333, %v1335, %v1331
      %v1337 = vmul.f32 1.0, %v1336
      %v1338 = vrcp.pop %v1284
      %v1339 = vmul.f32 %v1284, %v1338
      %v1340 = vsub.f32 1.0, %v1339
      %v1341 = vmul.f32 %v1338, %v1340
      %v1342 = vadd.f32 %v1338, %v1341
      %vm1343 = vweird.f32 %v1284
      %vm1344 = vweird.f32 %v1338
      %vm1345 = vmor %vm1343, %vm1344
      %v1346 = vsel %vm1345, %v1338, %v1342
      %v1347 = vand.u32 2147483647, %v1284
      %vm1348 = vcmp.eq.f32.partialorder %v1347, 8.507059e+37
      %v1349 = vand.u32 %v1284, 2147483648
      %v1350 = vor.u32 1.1754944e-38, %v1349
      %v1351 = vsel %vm1348, %v1350, %v1346
      %v1352 = vmul.f32 1.0, %v1351
      %v1353 = vrcp.pop %v1285
      %v1354 = vmul.f32 %v1285, %v1353
      %v1355 = vsub.f32 1.0, %v1354
      %v1356 = vmul.f32 %v1353, %v1355
      %v1357 = vadd.f32 %v1353, %v1356
      %vm1358 = vweird.f32 %v1285
      %vm1359 = vweird.f32 %v1353
      %vm1360 = vmor %vm1358, %vm1359
      %v1361 = vsel %vm1360, %v1353, %v1357
      %v1362 = vand.u32 2147483647, %v1285
      %vm1363 = vcmp.eq.f32.partialorder %v1362, 8.507059e+37
      %v1364 = vand.u32 %v1285, 2147483648
      %v1365 = vor.u32 1.1754944e-38, %v1364
      %v1366 = vsel %vm1363, %v1365, %v1361
      %v1367 = vmul.f32 1.0, %v1366
      %v1368 = vrcp.pop %v1286
      %v1369 = vmul.f32 %v1286, %v1368
      %v1370 = vsub.f32 1.0, %v1369
      %v1371 = vmul.f32 %v1368, %v1370
      %v1372 = vadd.f32 %v1368, %v1371
      %vm1373 = vweird.f32 %v1286
      %vm1374 = vweird.f32 %v1368
      %vm1375 = vmor %vm1373, %vm1374
      %v1376 = vsel %vm1375, %v1368, %v1372
      %v1377 = vand.u32 2147483647, %v1286
      %vm1378 = vcmp.eq.f32.partialorder %v1377, 8.507059e+37
      %v1379 = vand.u32 %v1286, 2147483648
      %v1380 = vor.u32 1.1754944e-38, %v1379
      %v1381 = vsel %vm1378, %v1380, %v1376
      %v1382 = vmul.f32 1.0, %v1381
      %v1383 = vrcp.pop %v1287
      %v1384 = vmul.f32 %v1287, %v1383
      %v1385 = vsub.f32 1.0, %v1384
      %v1386 = vmul.f32 %v1383, %v1385
      %v1387 = vadd.f32 %v1383, %v1386
      %vm1388 = vweird.f32 %v1287
      %vm1389 = vweird.f32 %v1383
      %vm1390 = vmor %vm1388, %vm1389
      %v1391 = vsel %vm1390, %v1383, %v1387
      %v1392 = vand.u32 2147483647, %v1287
      %vm1393 = vcmp.eq.f32.partialorder %v1392, 8.507059e+37
      %v1394 = vand.u32 %v1287, 2147483648
      %v1395 = vor.u32 1.1754944e-38, %v1394
      %v1396 = vsel %vm1393, %v1395, %v1391
      %v1397 = vmul.f32 1.0, %v1396
      %v1398 = vrcp.pop %v1288
      %v1399 = vmul.f32 %v1288, %v1398
      %v1400 = vsub.f32 1.0, %v1399
      %v1401 = vmul.f32 %v1398, %v1400
      %v1402 = vadd.f32 %v1398, %v1401
      %vm1403 = vweird.f32 %v1288
      %vm1404 = vweird.f32 %v1398
      %vm1405 = vmor %vm1403, %vm1404
      %v1406 = vsel %vm1405, %v1398, %v1402
      %v1407 = vand.u32 2147483647, %v1288
      %vm1408 = vcmp.eq.f32.partialorder %v1407, 8.507059e+37
      %v1409 = vand.u32 %v1288, 2147483648
      %v1410 = vor.u32 1.1754944e-38, %v1409
      %v1411 = vsel %vm1408, %v1410, %v1406
      %v1412 = vmul.f32 1.0, %v1411
      %v1413 = vrcp.pop %v1289
      %v1414 = vmul.f32 %v1289, %v1413
      %v1415 = vsub.f32 1.0, %v1414
      %v1416 = vmul.f32 %v1413, %v1415
      %v1417 = vadd.f32 %v1413, %v1416
      %vm1418 = vweird.f32 %v1289
      %vm1419 = vweird.f32 %v1413
      %vm1420 = vmor %vm1418, %vm1419
      %v1421 = vsel %vm1420, %v1413, %v1417
      %v1422 = vand.u32 2147483647, %v1289
      %vm1423 = vcmp.eq.f32.partialorder %v1422, 8.507059e+37
      %v1424 = vand.u32 %v1289, 2147483648
      %v1425 = vor.u32 1.1754944e-38, %v1424
      %v1426 = vsel %vm1423, %v1425, %v1421
      %v1427 = vmul.f32 1.0, %v1426
      %v1428 = vrcp.pop %v1290
      %v1429 = vmul.f32 %v1290, %v1428
      %v1430 = vsub.f32 1.0, %v1429
      %v1431 = vmul.f32 %v1428, %v1430
      %v1432 = vadd.f32 %v1428, %v1431
      %vm1433 = vweird.f32 %v1290
      %vm1434 = vweird.f32 %v1428
      %vm1435 = vmor %vm1433, %vm1434
      %v1436 = vsel %vm1435, %v1428, %v1432
      %v1437 = vand.u32 2147483647, %v1290
      %vm1438 = vcmp.eq.f32.partialorder %v1437, 8.507059e+37
      %v1439 = vand.u32 %v1290, 2147483648
      %v1440 = vor.u32 1.1754944e-38, %v1439
      %v1441 = vsel %vm1438, %v1440, %v1436
      %v1442 = vmul.f32 1.0, %v1441
      %v1443 = vrcp.pop %v1291
      %v1444 = vmul.f32 %v1291, %v1443
      %v1445 = vsub.f32 1.0, %v1444
      %v1446 = vmul.f32 %v1443, %v1445
      %v1447 = vadd.f32 %v1443, %v1446
      %vm1448 = vweird.f32 %v1291
      %vm1449 = vweird.f32 %v1443
      %vm1450 = vmor %vm1448, %vm1449
      %v1451 = vsel %vm1450, %v1443, %v1447
      %v1452 = vand.u32 2147483647, %v1291
      %vm1453 = vcmp.eq.f32.partialorder %v1452, 8.507059e+37
      %v1454 = vand.u32 %v1291, 2147483648
      %v1455 = vor.u32 1.1754944e-38, %v1454
      %v1456 = vsel %vm1453, %v1455, %v1451
      %v1457 = vmul.f32 1.0, %v1456
      %v1458 = vrcp.pop %v1292
      %v1459 = vmul.f32 %v1292, %v1458
      %v1460 = vsub.f32 1.0, %v1459
      %v1461 = vmul.f32 %v1458, %v1460
      %v1462 = vadd.f32 %v1458, %v1461
      %vm1463 = vweird.f32 %v1292
      %vm1464 = vweird.f32 %v1458
      %vm1465 = vmor %vm1463, %vm1464
      %v1466 = vsel %vm1465, %v1458, %v1462
      %v1467 = vand.u32 2147483647, %v1292
      %vm1468 = vcmp.eq.f32.partialorder %v1467, 8.507059e+37
      %v1469 = vand.u32 %v1292, 2147483648
      %v1470 = vor.u32 1.1754944e-38, %v1469
      %v1471 = vsel %vm1468, %v1470, %v1466
      %v1472 = vmul.f32 1.0, %v1471
      %v1473 = vsel %vm1241, %v1307, %v1224
      %v1474 = vsel %vm1241, %v1322, %v1225
      %v1475 = vsel %vm1241, %v1337, %v1226
      %v1476 = vsel %vm1242, %v1352, %v1227
      %v1477 = vsel %vm1242, %v1367, %v1228
      %v1478 = vsel %vm1242, %v1382, %v1229
      %v1479 = vsel %vm1243, %v1397, %v1230
      %v1480 = vsel %vm1243, %v1412, %v1231
      %v1481 = vsel %vm1243, %v1427, %v1232
      %v1482 = vsel %vm1244, %v1442, %v1233
      %v1483 = vsel %vm1244, %v1457, %v1234
      %v1484 = vsel %vm1244, %v1472, %v1235
      %1485 = vst [vmem:[%s170] sm:$0xff] %v1473
      %1486 = vst [vmem:[%s170 + $0x8] sm:$0xff] %v1474
      %vm1487 = vcmask 261120
      %1488 = vst.msk [vmem:[%s170 + $0x10] sm:$0xff] %vm1487, %v1475
      %1489 = vst [vmem:[%s170 + $0x18] sm:$0xff] %v1476
      %1490 = vst [vmem:[%s170 + $0x20] sm:$0xff] %v1477
      %1491 = vst.msk [vmem:[%s170 + $0x28] sm:$0xff] %vm1487, %v1478
      %1492 = vst [vmem:[%s170 + $0x30] sm:$0xff] %v1479
      %1493 = vst [vmem:[%s170 + $0x38] sm:$0xff] %v1480
      %1494 = vst.msk [vmem:[%s170 + $0x40] sm:$0xff] %vm1487, %v1481
      %1495 = vst [vmem:[%s170 + $0x48] sm:$0x7] %v1482
      %1496 = vst [vmem:[%s170 + $0x50] sm:$0x7] %v1483
      %vm1497 = vcmask 256000
      %1498 = vst.msk [vmem:[%s170 + $0x58] sm:$0x7] %vm1497, %v1484
      %p1499 = scmp.lt.s32.totalorder %s14, 1
      %s1500 = scalar_select %p1499, %s14, 1
      %s1501 = smul.addr %s1500, 12
      %s1502 = smul.addr %s1501, 8
      %s1503 = scalar_lea.vmem %s3, %s1502
      // Predicated region
      $region33: #{up_forward.11} parent=31 // pred_check
        %p1504 = pneg %p100
      $region34: #{up_forward.11} parent=31 // pred_check_branch
        %1506 = sbr.rel (%p1504) target = $region36
      $region35: #{up_forward.11} parent=31 // pred_region
        _
      $region36: #{up_forward.11} parent=31 // pred_fallthru
        _
    $region32: #{up_forward.11} parent=5 // pred_fallthru
      _
    %p1507 = scmp.le.s32.totalorder 2, %s9
    // Predicated region
    $region37: #{up_forward.11} parent=5 // pred_check
      %p1508 = pneg %p1507
    $region38: #{up_forward.11} parent=5 // pred_check_branch
      %1510 = sbr.rel (%p1508) target = $region40
    $region39: #{up_forward.11} parent=5 // pred_region
      %s1511 = ssub.s32 %s9, 2
      // Predicated region
      $region41: #{up_forward.11} parent=39 // pred_check
        %p1512 = pneg %p106
      $region42: #{up_forward.11} parent=39 // pred_check_branch
        %1514 = sbr.rel (%p1512) target = $region44
      $region43: #{up_forward.11} parent=39 // pred_region
        %p1515 = scmp.lt.s32.totalorder %s15, 1
        %s1516 = scalar_select %p1515, %s15, 1
        %s1517 = smul.addr %s1516, 12
        %s1518 = smul.addr %s1517, 8
        %s1519 = scalar_lea.vmem %s3, %s1518
      $region44: #{up_forward.11} parent=39 // pred_fallthru
        _
    $region40: #{up_forward.11} parent=5 // pred_fallthru
      _
  $region6: #{up_forward.11} parent=0 // loop_footer
    %s13 = sadd.s32 1, %s9
  $region7: #{up_forward.11} parent=0 // loop_footer_branch
    %8 = sbr.rel target = $region3
  $region8: #{up_forward.11} parent=0 // loop_exit
    _

// kernel: up_forward.12
$region0: #{up_forward.12}
  #allocation0 [shape = 'u32[]', space=smem, size = 0x4, offset = 0x4, fixed_abs, tag = 'smem constant byte address 0x4 - core index']
  #allocation1 [shape = 'u32[72,128]{1,0:T(1,128)}', space=vmem, size = 0x9000, scoped, tag = 'internal scratch']
  %s0 = inlined_call_operand.vmem [shape: bf16[8,36], index: 0, kind: input, shape index: {}]
  %s1 = inlined_call_operand.vmem [shape: bf16[36,512], index: 1, kind: input, shape index: {}]
  %s2 = inlined_call_operand.vmem [shape: bf16[8,512], index: 2, kind: output, shape index: {0}]
  %s3 = inlined_call_operand.vmem [shape: f32[1,8,1], index: 3, kind: output, shape index: {1}]
  %s4 = inlined_call_operand.vmem [shape: f32[1,8,1], index: 4, kind: output, shape index: {2}]
  %5 = xla_tuple %s2, %s3, %s4
  %s6 = sld [smem:[#allocation0]]
  $region34: #{up_forward.12} parent=0
    _
  %s8 = ssub.s32 1, %s6
  %s9 = scalar_select 0, %s8, %s6
  // Predicated region
  $region2: #{up_forward.12} parent=0 // pred_check
    _
  $region3: #{up_forward.12} parent=0 // pred_check_branch
    %11 = sbr.rel (0) target = $region5
  $region4: #{up_forward.12} parent=0 // pred_region
    _
  $region5: #{up_forward.12} parent=0 // pred_fallthru
    _
  // Predicated region
  $region6: #{up_forward.12} parent=0 // pred_check
    _
  $region7: #{up_forward.12} parent=0 // pred_check_branch
    %13 = sbr.rel (0) target = $region9
  $region8: #{up_forward.12} parent=0 // pred_region
    _
  $region9: #{up_forward.12} parent=0 // pred_fallthru
    _
  %v15 = vld [vmem:[%s0] sm:$0xf]
  %v16 = vld [vmem:[%s1] sm:$0xff]
  %v17 = vld [vmem:[%s1 + $0x8] sm:$0xff]
  %v18 = vld [vmem:[%s1 + $0x10] sm:$0xff]
  %v19 = vld [vmem:[%s1 + $0x18] sm:$0xff]
  %v20 = vld [vmem:[%s1 + $0x20] sm:$0xff]
  %v21 = vld [vmem:[%s1 + $0x28] sm:$0xff]
  %v22 = vld [vmem:[%s1 + $0x30] sm:$0xff]
  %v23 = vld [vmem:[%s1 + $0x38] sm:$0xff]
  %v24 = vld [vmem:[%s1 + $0x40] sm:$0x33]
  %v25 = vld [vmem:[%s1 + $0x48] sm:$0x33]
  %v36 = vunpack.c.l.b16 %v16
  %v37 = vunpack.c.h.b16 %v16
  %v38 = vunpack.c.l.b16 %v17
  %v39 = vunpack.c.h.b16 %v17
  %v40 = vunpack.c.l.b16 %v18
  %v41 = vunpack.c.h.b16 %v18
  %v42 = vunpack.c.l.b16 %v19
  %v43 = vunpack.c.h.b16 %v19
  %v44 = vunpack.c.l.b16 %v20
  %v45 = vunpack.c.h.b16 %v20
  %v46 = vunpack.c.l.b16 %v21
  %v47 = vunpack.c.h.b16 %v21
  %v48 = vunpack.c.l.b16 %v22
  %v49 = vunpack.c.h.b16 %v22
  %v50 = vunpack.c.l.b16 %v23
  %v51 = vunpack.c.h.b16 %v23
  %v52 = vunpack.c.l.b16 %v24
  %v53 = vunpack.c.h.b16 %v24
  %v54 = vunpack.c.l.b16 %v25
  %v55 = vunpack.c.h.b16 %v25
  %v56 = vpack.c.b16 %v40, %v36
  %v57 = vpack.c.b16 %v41, %v37
  %v58 = vpack.c.b16 %v42, %v38
  %v59 = vpack.c.b16 %v43, %v39
  %v60 = vpack.c.b16 %v48, %v44
  %v61 = vpack.c.b16 %v49, %v45
  %v62 = vpack.c.b16 %v50, %v46
  %v63 = vpack.c.b16 %v51, %v47
  %v64 = vpack.c.b16 %v52, %v52
  %v65 = vpack.c.b16 %v53, %v53
  %v66 = vpack.c.b16 %v54, %v54
  %v67 = vpack.c.b16 %v55, %v55
  %vm76 = vcmask 293888
  %v78 = vsel %vm76, %v15, 0
  %vm80 = vcmask 1041408
  %v82 = vsel %vm80, %v64, 0
  %v85 = vsel %vm80, %v65, 0
  %v88 = vsel %vm80, %v66, 0
  %v91 = vsel %vm80, %v67, 0
  %93 = vmatpush.bf16.msra.mxu0 0
  %94 = vmatpush.bf16.msra.mxu0 0
  %95 = vmatpush.bf16.msra.mxu0 0
  %96 = vmatpush.bf16.msra.mxu0 0
  %97 = vmatpush.bf16.msra.mxu0 0
  %98 = vmatpush.bf16.msra.mxu0 %v82
  %99 = vmatpush.bf16.msra.mxu0 %v60
  %100 = vmatpush.bf16.msra.mxu0 %v56
  %101 = vmatmul.bf16.gmra.mxu0 %v78
  %v102 = vpop.f32.mrf.mxu0
  %v103 = vadd.f32 0.0, %v102
  %v104 = vpop.f32.mrf.mxu0
  %105 = vdwg.mxu0
  %106 = vmatpush.bf16.msra.mxu0 0
  %107 = vmatpush.bf16.msra.mxu0 0
  %108 = vmatpush.bf16.msra.mxu0 0
  %109 = vmatpush.bf16.msra.mxu0 0
  %110 = vmatpush.bf16.msra.mxu0 0
  %111 = vmatpush.bf16.msra.mxu0 %v85
  %112 = vmatpush.bf16.msra.mxu0 %v61
  %113 = vmatpush.bf16.msra.mxu0 %v57
  %114 = vmatmul.bf16.gmra.mxu0 %v78
  %v115 = vpop.f32.mrf.mxu0
  %v116 = vadd.f32 0.0, %v115
  %v117 = vpop.f32.mrf.mxu0
  %118 = vdwg.mxu0
  %119 = vmatpush.bf16.msra.mxu0 0
  %120 = vmatpush.bf16.msra.mxu0 0
  %121 = vmatpush.bf16.msra.mxu0 0
  %122 = vmatpush.bf16.msra.mxu0 0
  %123 = vmatpush.bf16.msra.mxu0 0
  %124 = vmatpush.bf16.msra.mxu0 %v88
  %125 = vmatpush.bf16.msra.mxu0 %v62
  %126 = vmatpush.bf16.msra.mxu0 %v58
  %127 = vmatmul.bf16.gmra.mxu0 %v78
  %v128 = vpop.f32.mrf.mxu0
  %v129 = vadd.f32 0.0, %v128
  %v130 = vpop.f32.mrf.mxu0
  %131 = vdwg.mxu0
  %132 = vmatpush.bf16.msra.mxu0 0
  %133 = vmatpush.bf16.msra.mxu0 0
  %134 = vmatpush.bf16.msra.mxu0 0
  %135 = vmatpush.bf16.msra.mxu0 0
  %136 = vmatpush.bf16.msra.mxu0 0
  %137 = vmatpush.bf16.msra.mxu0 %v91
  %138 = vmatpush.bf16.msra.mxu0 %v63
  %139 = vmatpush.bf16.msra.mxu0 %v59
  %140 = vmatmul.bf16.gmra.mxu0 %v78
  %v141 = vpop.f32.mrf.mxu0
  %v142 = vadd.f32 0.0, %v141
  %v143 = vpop.f32.mrf.mxu0
  %144 = vdwg.mxu0
  %v145 = vpack.c.bf16 %v116, %v103
  %v146 = vpack.c.bf16 %v142, %v129
  %147 = vst [vmem:[%s2] sm:$0xff] %v145
  %148 = vst [vmem:[%s2 + $0x8] sm:$0xff] %v146
  %v149 = vadd.f32 %v103, %v116
  %v150 = vadd.f32 %v149, %v129
  %v151 = vadd.f32 %v150, %v142
  %152 = vadd.xlane.f32.xlu0 %v151
  %v153 = vpop.xlane.xlu0 %152
  %vm154 = vcmask 7168
  %155 = vst.msk [vmem:[%s3] sm:$0xff] %vm154, %v153
  %v156 = vmul.f32 %v103, %v103
  %v157 = vmul.f32 %v116, %v116
  %v158 = vmul.f32 %v129, %v129
  %v159 = vmul.f32 %v142, %v142
  %v160 = vadd.f32 %v156, %v157
  %v161 = vadd.f32 %v160, %v158
  %v162 = vadd.f32 %v161, %v159
  %163 = vadd.xlane.f32.xlu0 %v162
  %v164 = vpop.xlane.xlu0 %163
  %165 = vst.msk [vmem:[%s4] sm:$0xff] %vm154, %v164
  // Predicated region
  $region10: #{up_forward.12} parent=0 // pred_check
    _
  $region11: #{up_forward.12} parent=0 // pred_check_branch
    %167 = sbr.rel (0) target = $region13
  $region12: #{up_forward.12} parent=0 // pred_region
    _
  $region13: #{up_forward.12} parent=0 // pred_fallthru
    _
  // Predicated region
  $region14: #{up_forward.12} parent=0 // pred_check
    _
  $region15: #{up_forward.12} parent=0 // pred_check_branch
    %169 = sbr.rel (0) target = $region17
  $region16: #{up_forward.12} parent=0 // pred_region
    _
  $region17: #{up_forward.12} parent=0 // pred_fallthru
    _
  // Predicated region
  $region18: #{up_forward.12} parent=0 // pred_check
    _
  $region19: #{up_forward.12} parent=0 // pred_check_branch
    %171 = sbr.rel (0) target = $region21
  $region20: #{up_forward.12} parent=0 // pred_region
    _
  $region21: #{up_forward.12} parent=0 // pred_fallthru
    _
  // Predicated region
  $region22: #{up_forward.12} parent=0 // pred_check
    _
  $region23: #{up_forward.12} parent=0 // pred_check_branch
    %173 = sbr.rel (0) target = $region25
  $region24: #{up_forward.12} parent=0 // pred_region
    _
  $region25: #{up_forward.12} parent=0 // pred_fallthru
    _
  // Predicated region
  $region26: #{up_forward.12} parent=0 // pred_check
    _
  $region27: #{up_forward.12} parent=0 // pred_check_branch
    %175 = sbr.rel (0) target = $region29
  $region28: #{up_forward.12} parent=0 // pred_region
    _
  $region29: #{up_forward.12} parent=0 // pred_fallthru
    _
  // Predicated region
  $region30: #{up_forward.12} parent=0 // pred_check
    _
  $region31: #{up_forward.12} parent=0 // pred_check_branch
    %177 = sbr.rel (0) target = $region33
  $region32: #{up_forward.12} parent=0 // pred_region
    _
  $region33: #{up_forward.12} parent=0 // pred_fallthru
    _

// kernel: up_forward.13
$region0: #{up_forward.13}
  #allocation0 [shape = 'u32[]', space=smem, size = 0x4, offset = 0x4, fixed_abs, tag = 'smem constant byte address 0x4 - core index']
  #allocation1 [shape = 'u32[72,128]{1,0:T(1,128)}', space=vmem, size = 0x9000, scoped, tag = 'internal scratch']
  %s0 = inlined_call_operand.vmem [shape: bf16[8,512], index: 0, kind: input, shape index: {}]
  %s1 = inlined_call_operand.vmem [shape: f32[8,1], index: 1, kind: input, shape index: {}]
  %s2 = inlined_call_operand.vmem [shape: f32[8,1], index: 2, kind: input, shape index: {}]
  %s3 = inlined_call_operand.vmem [shape: f32[8,512], index: 3, kind: output, shape index: {}]
  %s4 = sld [smem:[#allocation0]]
  $region22: #{up_forward.13} parent=0
    _
  %s6 = ssub.s32 1, %s4
  %s7 = scalar_select 0, %s6, %s4
  // Predicated region
  $region2: #{up_forward.13} parent=0 // pred_check
    _
  $region3: #{up_forward.13} parent=0 // pred_check_branch
    %9 = sbr.rel (0) target = $region5
  $region4: #{up_forward.13} parent=0 // pred_region
    _
  $region5: #{up_forward.13} parent=0 // pred_fallthru
    _
  // Predicated region
  $region6: #{up_forward.13} parent=0 // pred_check
    _
  $region7: #{up_forward.13} parent=0 // pred_check_branch
    %11 = sbr.rel (0) target = $region9
  $region8: #{up_forward.13} parent=0 // pred_region
    _
  $region9: #{up_forward.13} parent=0 // pred_fallthru
    _
  // Predicated region
  $region10: #{up_forward.13} parent=0 // pred_check
    _
  $region11: #{up_forward.13} parent=0 // pred_check_branch
    %13 = sbr.rel (0) target = $region13
  $region12: #{up_forward.13} parent=0 // pred_region
    _
  $region13: #{up_forward.13} parent=0 // pred_fallthru
    _
  %v14 = vld [vmem:[%s0] sm:$0xff]
  %v15 = vld [vmem:[%s0 + $0x8] sm:$0xff]
  %v16 = vunpack.c.l.bf16 %v14
  %v17 = vunpack.c.h.bf16 %v14
  %v18 = vunpack.c.l.bf16 %v15
  %v19 = vunpack.c.h.bf16 %v15
  %v20 = vld [vmem:[%s1] sm:$0xff]
  %22 = vset.pattern.permute.xlu0 0
  %23 = vperm.xlu0 %22, %v20
  %v24 = vpop.permute.xlu0 %23
  %v26 = vmul.f32 %v16, %v24
  %v27 = vmul.f32 %v17, %v24
  %v28 = vmul.f32 %v18, %v24
  %v29 = vmul.f32 %v19, %v24
  %v30 = vld [vmem:[%s2] sm:$0xff]
  %32 = vset.pattern.permute.xlu0 0
  %33 = vperm.xlu0 %32, %v30
  %v34 = vpop.permute.xlu0 %33
  %v36 = vadd.f32 %v26, %v34
  %v37 = vadd.f32 %v27, %v34
  %v38 = vadd.f32 %v28, %v34
  %v39 = vadd.f32 %v29, %v34
  %v40 = vmax.f32 %v36, 0.0
  %v41 = vmax.f32 %v37, 0.0
  %v42 = vmax.f32 %v38, 0.0
  %v43 = vmax.f32 %v39, 0.0
  %44 = vst [vmem:[%s3] sm:$0xff] %v40
  %45 = vst [vmem:[%s3 + $0x8] sm:$0xff] %v41
  %46 = vst [vmem:[%s3 + $0x10] sm:$0xff] %v42
  %47 = vst [vmem:[%s3 + $0x18] sm:$0xff] %v43
  // Predicated region
  $region14: #{up_forward.13} parent=0 // pred_check
    _
  $region15: #{up_forward.13} parent=0 // pred_check_branch
    %49 = sbr.rel (0) target = $region17
  $region16: #{up_forward.13} parent=0 // pred_region
    _
  $region17: #{up_forward.13} parent=0 // pred_fallthru
    _
  // Predicated region
  $region18: #{up_forward.13} parent=0 // pred_check
    _
  $region19: #{up_forward.13} parent=0 // pred_check_branch
    %51 = sbr.rel (0) target = $region21
  $region20: #{up_forward.13} parent=0 // pred_region
    _
  $region21: #{up_forward.13} parent=0 // pred_fallthru
    _

</llo_original>
